<compile_context>
chip_gen: v7x
topology: tpu7x:2x2x1
jax: 0.10.0
libtpu: 0.0.40
codegen_flags: <defaults>
</compile_context>

<pallas_src>
import math
import numpy as np
import jax
import jax.numpy as jnp
from jax.experimental import pallas as pl
from jax.experimental.pallas import tpu as pltpu


# ----------------------------------------------------------------------------
# Interpolation weight matrices (PyTorch semantics), built in numpy / float64.
# ----------------------------------------------------------------------------
def _axis_scale(in_size, out_size, scale_factor):
    # PyTorch compute_scales_value: 1/scale if scale_factor given else in/out.
    if scale_factor is not None and scale_factor > 0:
        return 1.0 / float(scale_factor)
    return float(in_size) / float(out_size)


def _source_index(out_idx, in_size, out_size, scale_factor, align_corners,
                  cubic):
    if align_corners:
        if out_size > 1:
            return out_idx * (in_size - 1) / (out_size - 1)
        return 0.0
    scale = _axis_scale(in_size, out_size, scale_factor)
    src = scale * (out_idx + 0.5) - 0.5
    if not cubic:
        src = max(src, 0.0)
    return src


def _nearest_w(in_size, out_size, scale_factor):
    scale = _axis_scale(in_size, out_size, scale_factor)
    W = np.zeros((in_size, out_size), dtype=np.float64)
    for j in range(out_size):
        i = min(int(math.floor(j * scale)), in_size - 1)
        W[i, j] = 1.0
    return W


def _linear_w(in_size, out_size, scale_factor, align_corners):
    W = np.zeros((in_size, out_size), dtype=np.float64)
    for j in range(out_size):
        src = _source_index(j, in_size, out_size, scale_factor,
                            align_corners, cubic=False)
        i0 = min(int(src), in_size - 1)      # src >= 0, truncation == floor
        i1 = i0 + (1 if i0 < in_size - 1 else 0)
        lam = src - i0
        W[i0, j] += 1.0 - lam
        W[i1, j] += lam
    return W


def _cubic_w(in_size, out_size, scale_factor, align_corners):
    A = -0.75

    def cc1(t):  # |t| <= 1
        return ((A + 2.0) * t - (A + 3.0)) * t * t + 1.0

    def cc2(t):  # 1 < |t| < 2
        return ((A * t - 5.0 * A) * t + 8.0 * A) * t - 4.0 * A

    W = np.zeros((in_size, out_size), dtype=np.float64)
    for j in range(out_size):
        src = _source_index(j, in_size, out_size, scale_factor,
                            align_corners, cubic=True)
        i = int(math.floor(src))
        t = src - i
        coeffs = (cc2(t + 1.0), cc1(t), cc1(1.0 - t), cc2(2.0 - t))
        for k, c in enumerate(coeffs):
            idx = min(max(i - 1 + k, 0), in_size - 1)  # clamped boundary
            W[idx, j] += c
    return W


def _weight_matrix(mode, in_size, out_size, scale_factor, align_corners):
    if mode == "nearest":
        return _nearest_w(in_size, out_size, scale_factor)
    if mode in ("linear", "bilinear", "trilinear"):
        return _linear_w(in_size, out_size, scale_factor, align_corners)
    if mode == "bicubic":
        return _cubic_w(in_size, out_size, scale_factor, align_corners)
    raise ValueError(f"unsupported mode {mode}")


# ----------------------------------------------------------------------------
# Chain composition: collapse a list of F.upsample calls into one composed
# (in_size, out_size) matrix per spatial axis.
# ----------------------------------------------------------------------------
def _normalize_call(call, cur_sizes):
    ndim = len(cur_sizes)
    mode = call.get("mode", "nearest")
    ac = call.get("align_corners", None)
    ac = bool(ac) if ac is not None else False
    size = call.get("size", None)
    scale_factor = call.get("scale_factor", None)
    if size is not None:
        outs = (size,) * ndim if isinstance(size, int) else tuple(size)
        scales = (None,) * ndim
    else:
        sf = scale_factor
        if isinstance(sf, (int, float)):
            sf = (sf,) * ndim
        scales = tuple(float(s) for s in sf)
        outs = tuple(int(math.floor(cur_sizes[i] * scales[i]))
                     for i in range(ndim))
    return mode, ac, outs, scales


def _compose_chain(spatial, calls):
    """W_total(axis) = W1 @ W2 @ ... @ Wn (float64), cast to float32 at the end."""
    sizes = list(spatial)
    mats = [np.eye(s, dtype=np.float64) for s in spatial]
    for call in calls:
        mode, ac, outs, scales = _normalize_call(call, sizes)
        for ax in range(len(sizes)):
            step = _weight_matrix(mode, sizes[ax], outs[ax], scales[ax], ac)
            mats[ax] = mats[ax] @ step
            sizes[ax] = outs[ax]
    return [m.astype(np.float32) for m in mats]


# ----------------------------------------------------------------------------
# Pallas kernel: out = Wt @ X  (lane-dense resampling matmul)
#   Wt : (N_out, K_in)   composed interpolation matrix, transposed offline
#   X  : (K_in, R)       axis-to-resize first, everything else flattened on lanes
# ----------------------------------------------------------------------------
def _resize_kernel(wt_ref, x_ref, o_ref):
    o_ref[...] = jnp.dot(wt_ref[...], x_ref[...],
                         preferred_element_type=jnp.float32)


def _lane_block(R, cap=4096):
    """Largest lane tile (multiple of 128) dividing R, capped, with >=2 grid
    steps whenever R allows (keeps both TCs busy on v7x)."""
    if R % 128 != 0 or R <= 128:
        return R            # tiny / ragged case: single full-array block
    best = 128
    t = 256
    limit = min(R // 2, cap)
    while t <= limit:
        if R % t == 0:
            best = t
        t += 128
    return best


def _resize_axis(x, axis, W_np):
    """Resample one axis of x with composed matrix W_np (K_in, N_out)."""
    K, Nout = W_np.shape
    wt = jnp.asarray(W_np.T, dtype=jnp.float32)          # (Nout, K)
    xa = jnp.moveaxis(x, axis, 0)                        # (K, ...)
    rest = xa.shape[1:]
    R = int(np.prod(rest))
    x2 = xa.reshape(K, R).astype(jnp.float32)
    TR = _lane_block(R)
    out2 = pl.pallas_call(
        _resize_kernel,
        out_shape=jax.ShapeDtypeStruct((Nout, R), jnp.float32),
        grid=(R // TR,),
        in_specs=[
            pl.BlockSpec((Nout, K), lambda i: (0, 0)),   # full composed weight
            pl.BlockSpec((K, TR), lambda i: (0, i)),     # lane tile of the data
        ],
        out_specs=pl.BlockSpec((Nout, TR), lambda i: (0, i)),
        compiler_params=pltpu.CompilerParams(
            dimension_semantics=("parallel",)),
    )(wt, x2)
    out = out2.reshape((Nout,) + rest)
    return jnp.moveaxis(out, 0, axis)


def _chained_upsample(x, calls):
    spatial = x.shape[2:]
    mats = _compose_chain(spatial, calls)       # trace-time numpy, deterministic
    for ax, W in enumerate(mats):
        x = _resize_axis(x, 2 + ax, W)
    return x


# ----------------------------------------------------------------------------
# Model.forward (torch >= 1.12 branch) — the full upsample chains of the spec.
# ----------------------------------------------------------------------------
X_CALLS = [
    dict(size=16),
    dict(scale_factor=2, mode="nearest"),
    dict(size=20, mode="nearest"),
    dict(scale_factor=4, mode="nearest"),
    dict(size=16, mode="linear"),
    dict(scale_factor=2, mode="linear"),
    dict(size=24, mode="linear", align_corners=True),
    dict(scale_factor=3, mode="linear", align_corners=True),
]

Y_CALLS = [
    dict(size=16),
    dict(scale_factor=2, mode="nearest"),
    dict(size=(20, 20), mode="nearest"),
    dict(scale_factor=(4, 4), mode="nearest"),
    dict(size=(16, 24), mode="nearest"),
    dict(scale_factor=(2, 3), mode="nearest"),
    dict(size=16, mode="bilinear"),
    dict(scale_factor=2, mode="bilinear"),
    dict(size=(20, 20), mode="bilinear", align_corners=False),
    dict(scale_factor=(4, 4), mode="bilinear", align_corners=False),
    dict(size=(16, 24), mode="bilinear", align_corners=True),
    dict(scale_factor=(2, 3), mode="bilinear", align_corners=True),
    dict(size=16, mode="bicubic"),
    dict(scale_factor=2, mode="bicubic"),
    dict(size=(20, 20), mode="bicubic", align_corners=False),
    dict(scale_factor=(4, 4), mode="bicubic", align_corners=False),
    dict(size=(16, 24), mode="bicubic", align_corners=True),
    dict(scale_factor=(2, 3), mode="bicubic", align_corners=True),
]

Z_CALLS = [
    dict(size=16),
    dict(scale_factor=2, mode="nearest"),
    dict(size=(20, 20, 20), mode="nearest"),
    dict(scale_factor=(4, 4, 4), mode="nearest"),
    dict(size=(16, 24, 20), mode="nearest"),
    dict(scale_factor=(2, 3, 4), mode="nearest"),
    dict(size=16, mode="trilinear"),
    dict(scale_factor=2, mode="trilinear"),
    dict(size=(20, 20, 20), mode="trilinear", align_corners=False),
    dict(scale_factor=(4, 4, 4), mode="trilinear", align_corners=False),
    dict(size=(16, 24, 20), mode="trilinear", align_corners=True),
    dict(scale_factor=(2, 3, 4), mode="trilinear", align_corners=True),
]

W_CALLS = [dict(scale_factor=(1.499, 1.499), mode="nearest")]


def forward(x, y, z, w):
    x = _chained_upsample(x, X_CALLS)
    y = _chained_upsample(y, Y_CALLS)
    z = _chained_upsample(z, Z_CALLS)
    w = _chained_upsample(w, W_CALLS)
    return (x, y, z, w)


# ----------------------------------------------------------------------------
# Pure-JAX step-by-step reference (non-composed, non-Pallas) for sanity check.
# ----------------------------------------------------------------------------
def _ref_chained_upsample(x, calls):
    sizes = list(x.shape[2:])
    ndim = len(sizes)
    for call in calls:
        mode, ac, outs, scales = _normalize_call(call, sizes)
        for ax in range(ndim):
            W = _weight_matrix(mode, sizes[ax], outs[ax],
                               scales[ax], ac).astype(np.float32)
            x = jnp.tensordot(x, jnp.asarray(W), axes=([2 + ax], [0]))
            x = jnp.moveaxis(x, -1, 2 + ax)
            sizes[ax] = outs[ax]
    return x


if __name__ == "__main__":
    key = jax.random.PRNGKey(0)
    kx, ky, kz, kw = jax.random.split(key, 4)
    x = jax.random.normal(kx, (2, 4, 16), dtype=jnp.float32)        # (N,C,W)
    y = jax.random.normal(ky, (2, 4, 16, 16), dtype=jnp.float32)    # (N,C,H,W)
    z = jax.random.normal(kz, (2, 4, 8, 8, 8), dtype=jnp.float32)   # (N,C,D,H,W)
    w = jax.random.normal(kw, (2, 4, 12, 12), dtype=jnp.float32)    # (N,C,H,W)

    fwd = jax.jit(forward)
    outs = fwd(x, y, z, w)
    for o in outs:
        jax.block_until_ready(o)

    # expected final shapes from the chained upsamples
    assert outs[0].shape == (2, 4, 72)
    assert outs[1].shape == (2, 4, 32, 72)
    assert outs[2].shape == (2, 4, 32, 72, 80)
    assert outs[3].shape == (2, 4, 17, 17)

    # numerical sanity: composed-matrix Pallas path vs. step-by-step reference
    refs = (_ref_chained_upsample(x, X_CALLS),
            _ref_chained_upsample(y, Y_CALLS),
            _ref_chained_upsample(z, Z_CALLS),
            _ref_chained_upsample(w, W_CALLS))
    for o, r in zip(outs, refs):
        np.testing.assert_allclose(np.asarray(o), np.asarray(r),
                                   rtol=2e-3, atol=2e-3)

    print("KERNEL_OK")
</pallas_src>

<mosaic_0001>
module attributes {stable_mosaic.version = 11 : i64} {
  func.func @_resize_kernel(%arg0: i32, %arg1: memref<32x8xf32, #tpu.memory_space<vmem>>, %arg2: memref<8x256xf32, #tpu.memory_space<vmem>>, %arg3: memref<32x256xf32, #tpu.memory_space<vmem>>) attributes {dimension_semantics = [#tpu.dimension_semantics<parallel>], iteration_bounds = array<i64: 2>, scalar_prefetch = 0 : i64, scratch_operands = 0 : i64, tpu.core_type = #tpu.core_type<tc>, window_params = [{pipeline_mode = #tpu.pipeline_mode<synchronous>, transform_indices = @transform_0, window_bounds = array<i64: 32, 8>}, {transform_indices = @transform_1, window_bounds = array<i64: 8, 256>}, {transform_indices = @transform_2, window_bounds = array<i64: 32, 256>}]} {
    %c0 = arith.constant 0 : index
    %c0_0 = arith.constant 0 : index
    %0 = vector.load %arg1[%c0, %c0_0] : memref<32x8xf32, #tpu.memory_space<vmem>>, vector<32x8xf32>
    %c0_1 = arith.constant 0 : index
    %c0_2 = arith.constant 0 : index
    %1 = vector.load %arg2[%c0_1, %c0_2] : memref<8x256xf32, #tpu.memory_space<vmem>>, vector<8x256xf32>
    %cst = arith.constant dense<0.000000e+00> : vector<32x256xf32>
    %2 = tpu.matmul %0, %1, %cst {dimension_numbers = #tpu.dot_dimension_numbers<[1], [0], [0], [1], [0, 0, 1, 1], [], []>} : vector<32x8xf32>, vector<8x256xf32>, vector<32x256xf32> -> vector<32x256xf32>
    %c0_3 = arith.constant 0 : index
    %c0_4 = arith.constant 0 : index
    %3 = vector.load %arg3[%c0_3, %c0_4] : memref<32x256xf32, #tpu.memory_space<vmem>>, vector<32x256xf32>
    tpu.vector_store %arg3[%c0_3, %c0_4], %2 {strides = array<i32>} : memref<32x256xf32, #tpu.memory_space<vmem>>, vector<32x256xf32>,
    return
  }
  func.func @transform_0(%arg0: i32) -> (i32, i32) {
    %c0_i32 = arith.constant 0 : i32
    %c0_i32_0 = arith.constant 0 : i32
    %c0_i32_1 = arith.constant 0 : i32
    return %c0_i32, %c0_i32_0 : i32, i32
  }
  func.func @transform_1(%arg0: i32) -> (i32, i32) {
    %c0_i32 = arith.constant 0 : i32
    %c0_i32_0 = arith.constant 0 : i32
    return %c0_i32, %arg0 : i32, i32
  }
  func.func @transform_2(%arg0: i32) -> (i32, i32) {
    %c0_i32 = arith.constant 0 : i32
    %c0_i32_0 = arith.constant 0 : i32
    return %c0_i32, %arg0 : i32, i32
  }
}

module attributes {stable_mosaic.version = 11 : i64} {
  func.func @_resize_kernel(%arg0: i32, %arg1: memref<72x8xf32, #tpu.memory_space<vmem>>, %arg2: memref<8x1024xf32, #tpu.memory_space<vmem>>, %arg3: memref<72x1024xf32, #tpu.memory_space<vmem>>) attributes {dimension_semantics = [#tpu.dimension_semantics<parallel>], iteration_bounds = array<i64: 2>, scalar_prefetch = 0 : i64, scratch_operands = 0 : i64, tpu.core_type = #tpu.core_type<tc>, window_params = [{pipeline_mode = #tpu.pipeline_mode<synchronous>, transform_indices = @transform_0, window_bounds = array<i64: 72, 8>}, {transform_indices = @transform_1, window_bounds = array<i64: 8, 1024>}, {transform_indices = @transform_2, window_bounds = array<i64: 72, 1024>}]} {
    %c0 = arith.constant 0 : index
    %c0_0 = arith.constant 0 : index
    %0 = vector.load %arg1[%c0, %c0_0] : memref<72x8xf32, #tpu.memory_space<vmem>>, vector<72x8xf32>
    %c0_1 = arith.constant 0 : index
    %c0_2 = arith.constant 0 : index
    %1 = vector.load %arg2[%c0_1, %c0_2] : memref<8x1024xf32, #tpu.memory_space<vmem>>, vector<8x1024xf32>
    %cst = arith.constant dense<0.000000e+00> : vector<72x1024xf32>
    %2 = tpu.matmul %0, %1, %cst {dimension_numbers = #tpu.dot_dimension_numbers<[1], [0], [0], [1], [0, 0, 1, 1], [], []>} : vector<72x8xf32>, vector<8x1024xf32>, vector<72x1024xf32> -> vector<72x1024xf32>
    %c0_3 = arith.constant 0 : index
    %c0_4 = arith.constant 0 : index
    %3 = vector.load %arg3[%c0_3, %c0_4] : memref<72x1024xf32, #tpu.memory_space<vmem>>, vector<72x1024xf32>
    tpu.vector_store %arg3[%c0_3, %c0_4], %2 {strides = array<i32>} : memref<72x1024xf32, #tpu.memory_space<vmem>>, vector<72x1024xf32>,
    return
  }
  func.func @transform_0(%arg0: i32) -> (i32, i32) {
    %c0_i32 = arith.constant 0 : i32
    %c0_i32_0 = arith.constant 0 : i32
    %c0_i32_1 = arith.constant 0 : i32
    return %c0_i32, %c0_i32_0 : i32, i32
  }
  func.func @transform_1(%arg0: i32) -> (i32, i32) {
    %c0_i32 = arith.constant 0 : i32
    %c0_i32_0 = arith.constant 0 : i32
    return %c0_i32, %arg0 : i32, i32
  }
  func.func @transform_2(%arg0: i32) -> (i32, i32) {
    %c0_i32 = arith.constant 0 : i32
    %c0_i32_0 = arith.constant 0 : i32
    return %c0_i32, %arg0 : i32, i32
  }
}

module attributes {stable_mosaic.version = 11 : i64} {
  func.func @_resize_kernel(%arg0: i32, %arg1: memref<80x8xf32, #tpu.memory_space<vmem>>, %arg2: memref<8x3072xf32, #tpu.memory_space<vmem>>, %arg3: memref<80x3072xf32, #tpu.memory_space<vmem>>) attributes {dimension_semantics = [#tpu.dimension_semantics<parallel>], iteration_bounds = array<i64: 6>, scalar_prefetch = 0 : i64, scratch_operands = 0 : i64, tpu.core_type = #tpu.core_type<tc>, window_params = [{pipeline_mode = #tpu.pipeline_mode<synchronous>, transform_indices = @transform_0, window_bounds = array<i64: 80, 8>}, {transform_indices = @transform_1, window_bounds = array<i64: 8, 3072>}, {transform_indices = @transform_2, window_bounds = array<i64: 80, 3072>}]} {
    %c0 = arith.constant 0 : index
    %c0_0 = arith.constant 0 : index
    %0 = vector.load %arg1[%c0, %c0_0] : memref<80x8xf32, #tpu.memory_space<vmem>>, vector<80x8xf32>
    %c0_1 = arith.constant 0 : index
    %c0_2 = arith.constant 0 : index
    %1 = vector.load %arg2[%c0_1, %c0_2] : memref<8x3072xf32, #tpu.memory_space<vmem>>, vector<8x3072xf32>
    %cst = arith.constant dense<0.000000e+00> : vector<80x3072xf32>
    %2 = tpu.matmul %0, %1, %cst {dimension_numbers = #tpu.dot_dimension_numbers<[1], [0], [0], [1], [0, 0, 1, 1], [], []>} : vector<80x8xf32>, vector<8x3072xf32>, vector<80x3072xf32> -> vector<80x3072xf32>
    %c0_3 = arith.constant 0 : index
    %c0_4 = arith.constant 0 : index
    %3 = vector.load %arg3[%c0_3, %c0_4] : memref<80x3072xf32, #tpu.memory_space<vmem>>, vector<80x3072xf32>
    tpu.vector_store %arg3[%c0_3, %c0_4], %2 {strides = array<i32>} : memref<80x3072xf32, #tpu.memory_space<vmem>>, vector<80x3072xf32>,
    return
  }
  func.func @transform_0(%arg0: i32) -> (i32, i32) {
    %c0_i32 = arith.constant 0 : i32
    %c0_i32_0 = arith.constant 0 : i32
    %c0_i32_1 = arith.constant 0 : i32
    return %c0_i32, %c0_i32_0 : i32, i32
  }
  func.func @transform_1(%arg0: i32) -> (i32, i32) {
    %c0_i32 = arith.constant 0 : i32
    %c0_i32_0 = arith.constant 0 : i32
    return %c0_i32, %arg0 : i32, i32
  }
  func.func @transform_2(%arg0: i32) -> (i32, i32) {
    %c0_i32 = arith.constant 0 : i32
    %c0_i32_0 = arith.constant 0 : i32
    return %c0_i32, %arg0 : i32, i32
  }
}

module attributes {stable_mosaic.version = 11 : i64} {
  func.func @_resize_kernel(%arg0: i32, %arg1: memref<32x16xf32, #tpu.memory_space<vmem>>, %arg2: memref<16x128xf32, #tpu.memory_space<vmem>>, %arg3: memref<32x128xf32, #tpu.memory_space<vmem>>) attributes {dimension_semantics = [#tpu.dimension_semantics<parallel>], iteration_bounds = array<i64: 1>, scalar_prefetch = 0 : i64, scratch_operands = 0 : i64, tpu.core_type = #tpu.core_type<tc>, window_params = [{pipeline_mode = #tpu.pipeline_mode<synchronous>, transform_indices = @transform_0, window_bounds = array<i64: 32, 16>}, {transform_indices = @transform_1, window_bounds = array<i64: 16, 128>}, {transform_indices = @transform_2, window_bounds = array<i64: 32, 128>}]} {
    %c0 = arith.constant 0 : index
    %c0_0 = arith.constant 0 : index
    %0 = vector.load %arg1[%c0, %c0_0] : memref<32x16xf32, #tpu.memory_space<vmem>>, vector<32x16xf32>
    %c0_1 = arith.constant 0 : index
    %c0_2 = arith.constant 0 : index
    %1 = vector.load %arg2[%c0_1, %c0_2] : memref<16x128xf32, #tpu.memory_space<vmem>>, vector<16x128xf32>
    %cst = arith.constant dense<0.000000e+00> : vector<32x128xf32>
    %2 = tpu.matmul %0, %1, %cst {dimension_numbers = #tpu.dot_dimension_numbers<[1], [0], [0], [1], [0, 0, 1, 1], [], []>} : vector<32x16xf32>, vector<16x128xf32>, vector<32x128xf32> -> vector<32x128xf32>
    %c0_3 = arith.constant 0 : index
    %c0_4 = arith.constant 0 : index
    %3 = vector.load %arg3[%c0_3, %c0_4] : memref<32x128xf32, #tpu.memory_space<vmem>>, vector<32x128xf32>
    tpu.vector_store %arg3[%c0_3, %c0_4], %2 {strides = array<i32>} : memref<32x128xf32, #tpu.memory_space<vmem>>, vector<32x128xf32>,
    return
  }
  func.func @transform_0(%arg0: i32) -> (i32, i32) {
    %c0_i32 = arith.constant 0 : i32
    %c0_i32_0 = arith.constant 0 : i32
    %c0_i32_1 = arith.constant 0 : i32
    return %c0_i32, %c0_i32_0 : i32, i32
  }
  func.func @transform_1(%arg0: i32) -> (i32, i32) {
    %c0_i32 = arith.constant 0 : i32
    %c0_i32_0 = arith.constant 0 : i32
    return %c0_i32, %arg0 : i32, i32
  }
  func.func @transform_2(%arg0: i32) -> (i32, i32) {
    %c0_i32 = arith.constant 0 : i32
    %c0_i32_0 = arith.constant 0 : i32
    return %c0_i32, %arg0 : i32, i32
  }
}

module attributes {stable_mosaic.version = 11 : i64} {
  func.func @_resize_kernel(%arg0: i32, %arg1: memref<72x16xf32, #tpu.memory_space<vmem>>, %arg2: memref<16x128xf32, #tpu.memory_space<vmem>>, %arg3: memref<72x128xf32, #tpu.memory_space<vmem>>) attributes {dimension_semantics = [#tpu.dimension_semantics<parallel>], iteration_bounds = array<i64: 2>, scalar_prefetch = 0 : i64, scratch_operands = 0 : i64, tpu.core_type = #tpu.core_type<tc>, window_params = [{pipeline_mode = #tpu.pipeline_mode<synchronous>, transform_indices = @transform_0, window_bounds = array<i64: 72, 16>}, {transform_indices = @transform_1, window_bounds = array<i64: 16, 128>}, {transform_indices = @transform_2, window_bounds = array<i64: 72, 128>}]} {
    %c0 = arith.constant 0 : index
    %c0_0 = arith.constant 0 : index
    %0 = vector.load %arg1[%c0, %c0_0] : memref<72x16xf32, #tpu.memory_space<vmem>>, vector<72x16xf32>
    %c0_1 = arith.constant 0 : index
    %c0_2 = arith.constant 0 : index
    %1 = vector.load %arg2[%c0_1, %c0_2] : memref<16x128xf32, #tpu.memory_space<vmem>>, vector<16x128xf32>
    %cst = arith.constant dense<0.000000e+00> : vector<72x128xf32>
    %2 = tpu.matmul %0, %1, %cst {dimension_numbers = #tpu.dot_dimension_numbers<[1], [0], [0], [1], [0, 0, 1, 1], [], []>} : vector<72x16xf32>, vector<16x128xf32>, vector<72x128xf32> -> vector<72x128xf32>
    %c0_3 = arith.constant 0 : index
    %c0_4 = arith.constant 0 : index
    %3 = vector.load %arg3[%c0_3, %c0_4] : memref<72x128xf32, #tpu.memory_space<vmem>>, vector<72x128xf32>
    tpu.vector_store %arg3[%c0_3, %c0_4], %2 {strides = array<i32>} : memref<72x128xf32, #tpu.memory_space<vmem>>, vector<72x128xf32>,
    return
  }
  func.func @transform_0(%arg0: i32) -> (i32, i32) {
    %c0_i32 = arith.constant 0 : i32
    %c0_i32_0 = arith.constant 0 : i32
    %c0_i32_1 = arith.constant 0 : i32
    return %c0_i32, %c0_i32_0 : i32, i32
  }
  func.func @transform_1(%arg0: i32) -> (i32, i32) {
    %c0_i32 = arith.constant 0 : i32
    %c0_i32_0 = arith.constant 0 : i32
    return %c0_i32, %arg0 : i32, i32
  }
  func.func @transform_2(%arg0: i32) -> (i32, i32) {
    %c0_i32 = arith.constant 0 : i32
    %c0_i32_0 = arith.constant 0 : i32
    return %c0_i32, %arg0 : i32, i32
  }
}

module attributes {stable_mosaic.version = 11 : i64} {
  func.func @_resize_kernel(%arg0: i32, %arg1: memref<17x12xf32, #tpu.memory_space<vmem>>, %arg2: memref<12x96xf32, #tpu.memory_space<vmem>>, %arg3: memref<17x96xf32, #tpu.memory_space<vmem>>) attributes {dimension_semantics = [#tpu.dimension_semantics<parallel>], iteration_bounds = array<i64: 1>, scalar_prefetch = 0 : i64, scratch_operands = 0 : i64, tpu.core_type = #tpu.core_type<tc>, window_params = [{pipeline_mode = #tpu.pipeline_mode<synchronous>, transform_indices = @transform_0, window_bounds = array<i64: 17, 12>}, {transform_indices = @transform_1, window_bounds = array<i64: 12, 96>}, {transform_indices = @transform_2, window_bounds = array<i64: 17, 96>}]} {
    %c0 = arith.constant 0 : index
    %c0_0 = arith.constant 0 : index
    %0 = vector.load %arg1[%c0, %c0_0] : memref<17x12xf32, #tpu.memory_space<vmem>>, vector<17x12xf32>
    %c0_1 = arith.constant 0 : index
    %c0_2 = arith.constant 0 : index
    %1 = vector.load %arg2[%c0_1, %c0_2] : memref<12x96xf32, #tpu.memory_space<vmem>>, vector<12x96xf32>
    %cst = arith.constant dense<0.000000e+00> : vector<17x96xf32>
    %2 = tpu.matmul %0, %1, %cst {dimension_numbers = #tpu.dot_dimension_numbers<[1], [0], [0], [1], [0, 0, 1, 1], [], []>} : vector<17x12xf32>, vector<12x96xf32>, vector<17x96xf32> -> vector<17x96xf32>
    %c0_3 = arith.constant 0 : index
    %c0_4 = arith.constant 0 : index
    %3 = vector.load %arg3[%c0_3, %c0_4] : memref<17x96xf32, #tpu.memory_space<vmem>>, vector<17x96xf32>
    tpu.vector_store %arg3[%c0_3, %c0_4], %2 {strides = array<i32>} : memref<17x96xf32, #tpu.memory_space<vmem>>, vector<17x96xf32>,
    return
  }
  func.func @transform_0(%arg0: i32) -> (i32, i32) {
    %c0_i32 = arith.constant 0 : i32
    %c0_i32_0 = arith.constant 0 : i32
    %c0_i32_1 = arith.constant 0 : i32
    return %c0_i32, %c0_i32_0 : i32, i32
  }
  func.func @transform_1(%arg0: i32) -> (i32, i32) {
    %c0_i32 = arith.constant 0 : i32
    %c0_i32_0 = arith.constant 0 : i32
    return %c0_i32, %arg0 : i32, i32
  }
  func.func @transform_2(%arg0: i32) -> (i32, i32) {
    %c0_i32 = arith.constant 0 : i32
    %c0_i32_0 = arith.constant 0 : i32
    return %c0_i32, %arg0 : i32, i32
  }
}

module attributes {stable_mosaic.version = 11 : i64} {
  func.func @_resize_kernel(%arg0: i32, %arg1: memref<17x12xf32, #tpu.memory_space<vmem>>, %arg2: memref<12x136xf32, #tpu.memory_space<vmem>>, %arg3: memref<17x136xf32, #tpu.memory_space<vmem>>) attributes {dimension_semantics = [#tpu.dimension_semantics<parallel>], iteration_bounds = array<i64: 1>, scalar_prefetch = 0 : i64, scratch_operands = 0 : i64, tpu.core_type = #tpu.core_type<tc>, window_params = [{pipeline_mode = #tpu.pipeline_mode<synchronous>, transform_indices = @transform_0, window_bounds = array<i64: 17, 12>}, {transform_indices = @transform_1, window_bounds = array<i64: 12, 136>}, {transform_indices = @transform_2, window_bounds = array<i64: 17, 136>}]} {
    %c0 = arith.constant 0 : index
    %c0_0 = arith.constant 0 : index
    %0 = vector.load %arg1[%c0, %c0_0] : memref<17x12xf32, #tpu.memory_space<vmem>>, vector<17x12xf32>
    %c0_1 = arith.constant 0 : index
    %c0_2 = arith.constant 0 : index
    %1 = vector.load %arg2[%c0_1, %c0_2] : memref<12x136xf32, #tpu.memory_space<vmem>>, vector<12x136xf32>
    %cst = arith.constant dense<0.000000e+00> : vector<17x136xf32>
    %2 = tpu.matmul %0, %1, %cst {dimension_numbers = #tpu.dot_dimension_numbers<[1], [0], [0], [1], [0, 0, 1, 1], [], []>} : vector<17x12xf32>, vector<12x136xf32>, vector<17x136xf32> -> vector<17x136xf32>
    %c0_3 = arith.constant 0 : index
    %c0_4 = arith.constant 0 : index
    %3 = vector.load %arg3[%c0_3, %c0_4] : memref<17x136xf32, #tpu.memory_space<vmem>>, vector<17x136xf32>
    tpu.vector_store %arg3[%c0_3, %c0_4], %2 {strides = array<i32>} : memref<17x136xf32, #tpu.memory_space<vmem>>, vector<17x136xf32>,
    return
  }
  func.func @transform_0(%arg0: i32) -> (i32, i32) {
    %c0_i32 = arith.constant 0 : i32
    %c0_i32_0 = arith.constant 0 : i32
    %c0_i32_1 = arith.constant 0 : i32
    return %c0_i32, %c0_i32_0 : i32, i32
  }
  func.func @transform_1(%arg0: i32) -> (i32, i32) {
    %c0_i32 = arith.constant 0 : i32
    %c0_i32_0 = arith.constant 0 : i32
    return %c0_i32, %arg0 : i32, i32
  }
  func.func @transform_2(%arg0: i32) -> (i32, i32) {
    %c0_i32 = arith.constant 0 : i32
    %c0_i32_0 = arith.constant 0 : i32
    return %c0_i32, %arg0 : i32, i32
  }
}

module attributes {stable_mosaic.version = 11 : i64} {
  func.func @_resize_kernel(%arg0: i32, %arg1: memref<72x16xf32, #tpu.memory_space<vmem>>, %arg2: memref<16x8xf32, #tpu.memory_space<vmem>>, %arg3: memref<72x8xf32, #tpu.memory_space<vmem>>) attributes {dimension_semantics = [#tpu.dimension_semantics<parallel>], iteration_bounds = array<i64: 1>, scalar_prefetch = 0 : i64, scratch_operands = 0 : i64, tpu.core_type = #tpu.core_type<tc>, window_params = [{pipeline_mode = #tpu.pipeline_mode<synchronous>, transform_indices = @transform_0, window_bounds = array<i64: 72, 16>}, {transform_indices = @transform_1, window_bounds = array<i64: 16, 8>}, {transform_indices = @transform_2, window_bounds = array<i64: 72, 8>}]} {
    %c0 = arith.constant 0 : index
    %c0_0 = arith.constant 0 : index
    %0 = vector.load %arg1[%c0, %c0_0] : memref<72x16xf32, #tpu.memory_space<vmem>>, vector<72x16xf32>
    %c0_1 = arith.constant 0 : index
    %c0_2 = arith.constant 0 : index
    %1 = vector.load %arg2[%c0_1, %c0_2] : memref<16x8xf32, #tpu.memory_space<vmem>>, vector<16x8xf32>
    %cst = arith.constant dense<0.000000e+00> : vector<72x8xf32>
    %2 = tpu.matmul %0, %1, %cst {dimension_numbers = #tpu.dot_dimension_numbers<[1], [0], [0], [1], [0, 0, 1, 1], [], []>} : vector<72x16xf32>, vector<16x8xf32>, vector<72x8xf32> -> vector<72x8xf32>
    %c0_3 = arith.constant 0 : index
    %c0_4 = arith.constant 0 : index
    %3 = vector.load %arg3[%c0_3, %c0_4] : memref<72x8xf32, #tpu.memory_space<vmem>>, vector<72x8xf32>
    tpu.vector_store %arg3[%c0_3, %c0_4], %2 {strides = array<i32>} : memref<72x8xf32, #tpu.memory_space<vmem>>, vector<72x8xf32>,
    return
  }
  func.func @transform_0(%arg0: i32) -> (i32, i32) {
    %c0_i32 = arith.constant 0 : i32
    %c0_i32_0 = arith.constant 0 : i32
    %c0_i32_1 = arith.constant 0 : i32
    return %c0_i32, %c0_i32_0 : i32, i32
  }
  func.func @transform_1(%arg0: i32) -> (i32, i32) {
    %c0_i32 = arith.constant 0 : i32
    %c0_i32_0 = arith.constant 0 : i32
    return %c0_i32, %arg0 : i32, i32
  }
  func.func @transform_2(%arg0: i32) -> (i32, i32) {
    %c0_i32 = arith.constant 0 : i32
    %c0_i32_0 = arith.constant 0 : i32
    return %c0_i32, %arg0 : i32, i32
  }
}

</mosaic_0001>

<llo_original>
// kernel: forward.11
$region0: #{forward.11}
  #allocation0 [shape = 'u32[]', space=smem, size = 0x4, offset = 0x4, fixed_abs, tag = 'smem constant byte address 0x4 - core index']
  #allocation1 [shape = 'u32[144,128]{1,0:T(1,128)}', space=vmem, size = 0x12000, scoped, tag = 'internal scratch']
  %s0 = inlined_call_operand.hbm [shape: f32[32,8], index: 0, kind: input, shape index: {}]
  %s1 = inlined_call_operand.vmem [shape: f32[8,512], index: 1, kind: input, shape index: {}]
  %s2 = inlined_call_operand.vmem [shape: f32[32,512], index: 2, kind: output, shape index: {}]
  %s3 = sld [smem:[#allocation0]]
  $region64: #{forward.11} parent=0
    _
  %s5 = ssub.s32 1, %s3
  %s6 = scalar_select 0, %s5, %s3
  $region1: #{forward.11} parent=0
    #allocation2 [shape = 'u8[16384]{0}', space=vmem, size = 0x4000, scoped, tag = 'input window, operand 0, single buffered']
    #allocation3 [shape = 's32[2]{0}', space=sflag, size = 0x8, scoped, tag = 'scoped memory for forward.11']
    #allocation4 [shape = 'u8[65536]{0}', space=vmem, size = 0x10000, scoped, tag = 'output window, operand 0']
    %7 = vsyncpa [#allocation3], 0
    loop: start=0, step=1, limit=4
    $region2: #{forward.11} parent=1 // loop_pre_header
      _
    $region3: #{forward.11} parent=1 // loop_header
      %s9 = sphi 0, %s13
      %p10 = scmp.ge.s32.totalorder %s9, 4
      %s17 = sphi 0, %s17
      %s19 = sphi 0, %s17
      %s20 = sphi 0, %s19
      %s34 = sphi 0, %s20
      %s40 = sphi 0, %s42
      %s43 = sphi 0, %s40
      %s44 = sphi 0, %s43
      %s60 = sphi 0, %s44
      %s66 = sphi 0, %s68
      %s69 = sphi 0, %s66
      %s70 = sphi 0, %s69
      %s86 = sphi 0, %s70
    $region4: #{forward.11} parent=1 // loop_header_branch
      %12 = sbr.rel (%p10) target = $region8
    $region5: #{forward.11} parent=1 // loop_body
      %s14 = ssub.s32 %s9, 1
      %s15 = ssub.s32 %s9, 2
      %s16 = sadd.s32 %s9, 1
      %s18 = sadd.s32 %s17, 1
      %p21 = scmp.eq.s32.totalorder %s9, 1
      %p22 = scmp.ne.s32.totalorder %s17, %s19
      %p23 = scmp.eq.s32.totalorder %s9, 0
      %p24 = por %p22, %p23
      %p25 = scmp.ne.s32.totalorder %s17, %s19
      %p26 = scmp.eq.s32.totalorder %s14, 1
      %p27 = por %p25, %p26
      %p28 = scmp.ne.s32.totalorder %s19, %s20
      %p29 = scmp.eq.s32.totalorder %s14, 0
      %p30 = por %p28, %p29
      %p31 = scmp.ne.s32.totalorder %s19, %s20
      %p32 = scmp.eq.s32.totalorder %s15, 1
      %p33 = por %p31, %p32
      %p35 = scmp.ne.s32.totalorder %s20, %s34
      %p36 = scmp.eq.s32.totalorder %s15, 0
      %p37 = por %p35, %p36
      %s38 = ssub.s32 %s9, %s16
      %p39 = scmp.eq.s32.totalorder %s38, 0
      %s41 = sadd.s32 %s40, 1
      %s42 = scalar_select %p39, %s40, %s41
      %p45 = pneg %p39
      %p46 = scmp.eq.s32.totalorder %s9, 1
      %p47 = por %p45, %p46
      %p48 = scmp.ne.s32.totalorder %s40, %s43
      %p49 = scmp.eq.s32.totalorder %s9, 0
      %p50 = por %p48, %p49
      %p51 = scmp.ne.s32.totalorder %s40, %s43
      %p52 = scmp.eq.s32.totalorder %s14, 1
      %p53 = por %p51, %p52
      %p54 = scmp.ne.s32.totalorder %s43, %s44
      %p55 = scmp.eq.s32.totalorder %s14, 0
      %p56 = por %p54, %p55
      %p57 = scmp.ne.s32.totalorder %s43, %s44
      %p58 = scmp.eq.s32.totalorder %s15, 1
      %p59 = por %p57, %p58
      %p61 = scmp.ne.s32.totalorder %s44, %s60
      %p62 = scmp.eq.s32.totalorder %s15, 0
      %p63 = por %p61, %p62
      %s64 = ssub.s32 %s9, %s16
      %p65 = scmp.eq.s32.totalorder %s64, 0
      %s67 = sadd.s32 %s66, 1
      %s68 = scalar_select %p65, %s66, %s67
      %p71 = pneg %p65
      %p72 = scmp.eq.s32.totalorder %s9, 1
      %p73 = por %p71, %p72
      %p74 = scmp.ne.s32.totalorder %s66, %s69
      %p75 = scmp.eq.s32.totalorder %s9, 0
      %p76 = por %p74, %p75
      %p77 = scmp.ne.s32.totalorder %s66, %s69
      %p78 = scmp.eq.s32.totalorder %s14, 1
      %p79 = por %p77, %p78
      %p80 = scmp.ne.s32.totalorder %s69, %s70
      %p81 = scmp.eq.s32.totalorder %s14, 0
      %p82 = por %p80, %p81
      %p83 = scmp.ne.s32.totalorder %s69, %s70
      %p84 = scmp.eq.s32.totalorder %s15, 1
      %p85 = por %p83, %p84
      %p87 = scmp.ne.s32.totalorder %s70, %s86
      %p88 = scmp.eq.s32.totalorder %s15, 0
      %p89 = por %p87, %p88
      %p90 = scmp.le.s32.totalorder 1, %s9
      %p91 = scmp.lt.s32.totalorder %s9, 3
      %p92 = pnand %p90, %p91
      %p93 = pneg %p92
      // Predicated region
      $region9: #{forward.11} parent=5 // pred_check
        _
      $region10: #{forward.11} parent=5 // pred_check_branch
        %95 = sbr.rel (%p92) target = $region12
      $region11: #{forward.11} parent=5 // pred_region
        %s96 = ssub.s32 %s9, 1
        // Predicated region
        $region13: #{forward.11} parent=11 // pred_check
          %p97 = pneg %p30
        $region14: #{forward.11} parent=11 // pred_check_branch
          %99 = sbr.rel (%p97) target = $region16
        $region15: #{forward.11} parent=11 // pred_region
          %s101 = ssub.s32 512, 512
          %102 = vsyncadd [#allocation3], %s101
          %s103 = sshll.u32 [#allocation2], 4
          %s104 = int_to_ptr.vmem [resolvable:$true] %s103
          %109 = dma.hbm_to_vmem [thread:$0]  %s0, 512, %s104, [#allocation3], 128, 128, 8
        $region16: #{forward.11} parent=11 // pred_fallthru
          _
      $region12: #{forward.11} parent=5 // pred_fallthru
        _
      %p110 = scmp.lt.s32.totalorder %s9, 2
      // Predicated region
      $region17: #{forward.11} parent=5 // pred_check
        %p111 = pneg %p110
      $region18: #{forward.11} parent=5 // pred_check_branch
        %113 = sbr.rel (%p111) target = $region20
      $region19: #{forward.11} parent=5 // pred_region
        // Predicated region
        $region21: #{forward.11} parent=19 // pred_check
          %p114 = pneg %p50
        $region22: #{forward.11} parent=19 // pred_check_branch
          %116 = sbr.rel (%p114) target = $region24
        $region23: #{forward.11} parent=19 // pred_region
          %s117 = smul.u32 2, %s9
          %p118 = scmp.lt.s32.totalorder %s117, 3
          %s119 = scalar_select %p118, %s117, 3
          %s120 = smul.addr %s119, 8
          %s121 = scalar_lea.vmem %s1, %s120
          %s122 = smul.u32 2, %s9
        $region24: #{forward.11} parent=19 // pred_fallthru
          _
      $region20: #{forward.11} parent=5 // pred_fallthru
        _
      %p123 = scmp.le.s32.totalorder 1, %s9
      %p124 = scmp.lt.s32.totalorder %s9, 3
      %p125 = pnand %p123, %p124
      %p126 = pneg %p125
      // Predicated region
      $region25: #{forward.11} parent=5 // pred_check
        _
      $region26: #{forward.11} parent=5 // pred_check_branch
        %128 = sbr.rel (%p125) target = $region28
      $region27: #{forward.11} parent=5 // pred_region
        %s129 = ssub.s32 %s9, 1
        // Predicated region
        $region29: #{forward.11} parent=27 // pred_check
          %p130 = pneg %p30
        $region30: #{forward.11} parent=27 // pred_check_branch
          %132 = sbr.rel (%p130) target = $region32
        $region31: #{forward.11} parent=27 // pred_region
          %133 = dma.done [#allocation3], 512
        $region32: #{forward.11} parent=27 // pred_fallthru
          _
        %p134 = pneg %p30
        %p135 = pneg %p27
        %s136 = smul.u32 2, %s14
        %p137 = scmp.lt.s32.totalorder %s136, 3
        %s138 = scalar_select %p137, %s136, 3
        %s139 = smul.addr %s138, 8
        %s140 = scalar_lea.vmem %s1, %s139
        %p141 = pneg %p56
        %p142 = pneg %p53
        %p143 = pneg %p82
        %p144 = pneg %p79
        %s145 = sand.u32 %s69, 1
        %s146 = sand.u32 %s69, 1
        %s147 = smul.addr %s146, 64
        %s148 = scalar_lea.vmem [#allocation4], %s147
        %s149 = smul.u32 2, %s14
        %p150 = scmp.lt.s32.totalorder %s149, 3
        %s151 = scalar_select %p150, %s149, 3
        %s152 = smul.addr %s151, 8
        %s153 = scalar_lea.vmem %s1, %s152
        %s154 = smul.u32 2, %s14
        %s155 = smul.u32 2, %s14
        %v156 = vld [vmem:[#allocation2] sm:$0xff]
        %v157 = vld [vmem:[#allocation2 + $0x8] sm:$0xff]
        %v158 = vld [vmem:[#allocation2 + $0x10] sm:$0xff]
        %v159 = vld [vmem:[#allocation2 + $0x18] sm:$0xff]
        %v160 = vld [vmem:[%s153] sm:$0xff]
        %v161 = vld [vmem:[%s153 + $0x8] sm:$0xff]
        %vm162 = vcmask 64512
        %v164 = vsel %vm162, %v156, 0
        %v167 = vsel %vm162, %v157, 0
        %v170 = vsel %vm162, %v158, 0
        %v173 = vsel %vm162, %v159, 0
        %175 = vmatprep.subr.mxu0 %v161
        %176 = vmatpush1.msra.mxu0 %v160
        %177 = vmatprep.subr.mxu0 0.0
        %178 = vmatpush1.msra.mxu0 0.0
        %179 = vmatprep.subr.mxu0 0.0
        %180 = vmatpush1.msra.mxu0 0.0
        %181 = vmatprep.subr.mxu0 0.0
        %182 = vmatpush1.msra.mxu0 0.0
        %183 = vmatprep.subr.mxu0 0.0
        %184 = vmatpush1.msra.mxu0 0.0
        %185 = vmatprep.subr.mxu0 0.0
        %186 = vmatpush1.msra.mxu0 0.0
        %187 = vmatprep.subr.mxu0 0.0
        %188 = vmatpush1.msra.mxu0 0.0
        %189 = vmatprep.subr.mxu0 0.0
        %190 = vmatpush1.msra.mxu0 0.0
        %191 = vmatprep.subr.mxu0 0.0
        %192 = vmatpush1.msra.mxu0 0.0
        %193 = vmatprep.subr.mxu0 0.0
        %194 = vmatpush1.msra.mxu0 0.0
        %195 = vmatprep.subr.mxu0 0.0
        %196 = vmatpush1.msra.mxu0 0.0
        %197 = vmatprep.subr.mxu0 0.0
        %198 = vmatpush1.msra.mxu0 0.0
        %199 = vmatprep.subr.mxu0 0.0
        %200 = vmatpush1.msra.mxu0 0.0
        %201 = vmatprep.subr.mxu0 0.0
        %202 = vmatpush1.msra.mxu0 0.0
        %203 = vmatprep.subr.mxu0 0.0
        %204 = vmatpush1.msra.mxu0 0.0
        %205 = vmatprep.subr.mxu0 0.0
        %206 = vmatpush1.msra.mxu0 0.0
        %207 = vmatprep.subr.mxu0 0.0
        %208 = vmatpush1.msra.mxu0 0.0
        %209 = vmatprep.subr.mxu0 0.0
        %210 = vmatpush1.msra.mxu0 0.0
        %211 = vmatprep.subr.mxu0 0.0
        %212 = vmatpush1.msra.mxu0 0.0
        %213 = vmatprep.subr.mxu0 0.0
        %214 = vmatpush1.msra.mxu0 0.0
        %215 = vmatprep.subr.mxu0 0.0
        %216 = vmatpush1.msra.mxu0 0.0
        %217 = vmatprep.subr.mxu0 0.0
        %218 = vmatpush1.msra.mxu0 0.0
        %219 = vmatprep.subr.mxu0 0.0
        %220 = vmatpush1.msra.mxu0 0.0
        %221 = vmatprep.subr.mxu0 0.0
        %222 = vmatpush1.msra.mxu0 0.0
        %223 = vmatprep.subr.mxu0 0.0
        %224 = vmatpush1.msra.mxu0 0.0
        %225 = vmatprep.subr.mxu0 0.0
        %226 = vmatpush1.msra.mxu0 0.0
        %227 = vmatprep.subr.mxu0 0.0
        %228 = vmatpush1.msra.mxu0 0.0
        %229 = vmatprep.subr.mxu0 0.0
        %230 = vmatpush1.msra.mxu0 0.0
        %231 = vmatprep.subr.mxu0 0.0
        %232 = vmatpush1.msra.mxu0 0.0
        %233 = vmatprep.subr.mxu0 0.0
        %234 = vmatpush1.msra.mxu0 0.0
        %235 = vmatprep.subr.mxu0 0.0
        %236 = vmatpush1.msra.mxu0 0.0
        %237 = vmatprep.subr.mxu0 0.0
        %238 = vmatpush1.msra.mxu0 0.0
        %239 = vmatprep.mubr.f32.mxu0 0.0
        %240 = vmatmul.mubr.f32.gmra.mrb[0].mxu0 %v164
        %v241 = vpop.f32.mrb[0].mxu0
        %v242 = vadd.f32 0.0, %v241
        %v243 = vpop.f32.mrb[0].mxu0
        %v244 = vadd.f32 0.0, %v243
        %245 = vmatprep.mubr.f32.mxu0 0.0
        %246 = vmatmul.mubr.f32.gmra.mrb[0].mxu0 %v167
        %v247 = vpop.f32.mrb[0].mxu0
        %v248 = vadd.f32 0.0, %v247
        %v249 = vpop.f32.mrb[0].mxu0
        %v250 = vadd.f32 0.0, %v249
        %251 = vmatprep.mubr.f32.mxu0 0.0
        %252 = vmatmul.mubr.f32.gmra.mrb[0].mxu0 %v170
        %v253 = vpop.f32.mrb[0].mxu0
        %v254 = vadd.f32 0.0, %v253
        %v255 = vpop.f32.mrb[0].mxu0
        %v256 = vadd.f32 0.0, %v255
        %257 = vmatprep.mubr.f32.mxu0 0.0
        %258 = vmatmul.mubr.f32.gmra.mrb[0].mxu0 %v173
        %v259 = vpop.f32.mrb[0].mxu0
        %v260 = vadd.f32 0.0, %v259
        %v261 = vpop.f32.mrb[0].mxu0
        %v262 = vadd.f32 0.0, %v261
        %263 = vdwg.mxu0
        %264 = vst [vmem:[%s148] sm:$0xff] %v242
        %265 = vst [vmem:[%s148 + $0x8] sm:$0xff] %v244
        %266 = vst [vmem:[%s148 + $0x10] sm:$0xff] %v248
        %267 = vst [vmem:[%s148 + $0x18] sm:$0xff] %v250
        %268 = vst [vmem:[%s148 + $0x20] sm:$0xff] %v254
        %269 = vst [vmem:[%s148 + $0x28] sm:$0xff] %v256
        %270 = vst [vmem:[%s148 + $0x30] sm:$0xff] %v260
        %271 = vst [vmem:[%s148 + $0x38] sm:$0xff] %v262
        %s272 = sand.u32 %s69, 1
        %s273 = sand.u32 %s69, 1
        %s274 = smul.addr %s273, 64
        %s275 = scalar_lea.vmem [#allocation4], %s274
        // Predicated region
        $region33: #{forward.11} parent=27 // pred_check
          %p276 = pneg %p79
        $region34: #{forward.11} parent=27 // pred_check_branch
          %278 = sbr.rel (%p276) target = $region36
        $region35: #{forward.11} parent=27 // pred_region
          %s279 = smul.u32 2, %s14
          %s280 = smul.addr %s279, 8
          %s281 = scalar_lea.vmem %s2, %s280
          // Predicated region
          $region37: #{forward.11} parent=35 // pred_check
            _
          $region38: #{forward.11} parent=35 // pred_check_branch
            %283 = sbr.rel (0) target = $region40
          $region39: #{forward.11} parent=35 // pred_region
            // Predicated region
            $region41: #{forward.11} parent=39 // pred_check
              _
            $region42: #{forward.11} parent=39 // pred_check_branch
              %285 = sbr.rel (0) target = $region44
            $region43: #{forward.11} parent=39 // pred_region
              loop: start=0, step=1, limit=1
              $region45: #{forward.11} parent=43 // loop_pre_header
                _
              $region46: #{forward.11} parent=43 // loop_header
                %s287 = sphi 0, %s291
                %p288 = scmp.ge.s32.totalorder %s287, 1
                %s292 = sphi %s275, %s275
                %s293 = sphi %s281, %s281
              $region47: #{forward.11} parent=43 // loop_header_branch
                %290 = sbr.rel (%p288) target = $region51
              $region48: #{forward.11} parent=43 // loop_body
                %v294 = vld [vmem:[%s292] sm:$0xff]
                %295 = vst [vmem:[%s293] sm:$0xff] %v294
                %v296 = vld [vmem:[%s292 + $0x8] sm:$0xff]
                %297 = vst [vmem:[%s293 + $0x8] sm:$0xff] %v296
                %v298 = vld [vmem:[%s292 + $0x10] sm:$0xff]
                %299 = vst [vmem:[%s293 + $0x20] sm:$0xff] %v298
                %v300 = vld [vmem:[%s292 + $0x18] sm:$0xff]
                %301 = vst [vmem:[%s293 + $0x28] sm:$0xff] %v300
                %v302 = vld [vmem:[%s292 + $0x20] sm:$0xff]
                %303 = vst [vmem:[%s293 + $0x40] sm:$0xff] %v302
                %v304 = vld [vmem:[%s292 + $0x28] sm:$0xff]
                %305 = vst [vmem:[%s293 + $0x48] sm:$0xff] %v304
                %v306 = vld [vmem:[%s292 + $0x30] sm:$0xff]
                %307 = vst [vmem:[%s293 + $0x60] sm:$0xff] %v306
                %v308 = vld [vmem:[%s292 + $0x38] sm:$0xff]
                %309 = vst [vmem:[%s293 + $0x68] sm:$0xff] %v308
              $region49: #{forward.11} parent=43 // loop_footer
                %s291 = sadd.s32 1, %s287
              $region50: #{forward.11} parent=43 // loop_footer_branch
                %286 = sbr.rel target = $region46
              $region51: #{forward.11} parent=43 // loop_exit
                _
            $region44: #{forward.11} parent=39 // pred_fallthru
              _
            // Predicated region
            $region52: #{forward.11} parent=39 // pred_check
              _
            $region53: #{forward.11} parent=39 // pred_check_branch
              %311 = sbr.rel target = $region55
            $region54: #{forward.11} parent=39 // pred_region
              _
            $region55: #{forward.11} parent=39 // pred_fallthru
              _
          $region40: #{forward.11} parent=35 // pred_fallthru
            _
          %312 = vnop
        $region36: #{forward.11} parent=27 // pred_fallthru
          _
      $region28: #{forward.11} parent=5 // pred_fallthru
        _
      %p313 = scmp.le.s32.totalorder 2, %s9
      // Predicated region
      $region56: #{forward.11} parent=5 // pred_check
        %p314 = pneg %p313
      $region57: #{forward.11} parent=5 // pred_check_branch
        %316 = sbr.rel (%p314) target = $region59
      $region58: #{forward.11} parent=5 // pred_region
        %s317 = ssub.s32 %s9, 2
        // Predicated region
        $region60: #{forward.11} parent=58 // pred_check
          %p318 = pneg %p85
        $region61: #{forward.11} parent=58 // pred_check_branch
          %320 = sbr.rel (%p318) target = $region63
        $region62: #{forward.11} parent=58 // pred_region
          %s321 = sand.u32 %s70, 1
          %s322 = sand.u32 %s70, 1
          %s323 = smul.addr %s322, 64
          %s324 = scalar_lea.vmem [#allocation4], %s323
        $region63: #{forward.11} parent=58 // pred_fallthru
          _
      $region59: #{forward.11} parent=5 // pred_fallthru
        _
    $region6: #{forward.11} parent=1 // loop_footer
      %s13 = sadd.s32 1, %s9
    $region7: #{forward.11} parent=1 // loop_footer_branch
      %8 = sbr.rel target = $region3
    $region8: #{forward.11} parent=1 // loop_exit
      _
    %325 = vsyncpa [#allocation3], 1
    %s326 = scalar_lea.sflag [#allocation3], 1
    %327 = vsyncpa %s326, 1

// kernel: forward.12
$region0: #{forward.12}
  #allocation0 [shape = 'u32[]', space=smem, size = 0x4, offset = 0x4, fixed_abs, tag = 'smem constant byte address 0x4 - core index']
  #allocation1 [shape = 'u32[144,128]{1,0:T(1,128)}', space=vmem, size = 0x12000, scoped, tag = 'internal scratch']
  %s0 = inlined_call_operand.hbm [shape: f32[72,8], index: 0, kind: input, shape index: {}]
  %s1 = inlined_call_operand.vmem [shape: f32[8,2048], index: 1, kind: input, shape index: {}]
  %s2 = inlined_call_operand.vmem [shape: f32[72,2048], index: 2, kind: output, shape index: {}]
  %s3 = sld [smem:[#allocation0]]
  $region64: #{forward.12} parent=0
    _
  %s5 = ssub.s32 1, %s3
  %s6 = scalar_select 0, %s5, %s3
  $region1: #{forward.12} parent=0
    #allocation2 [shape = 'u8[36864]{0}', space=vmem, size = 0x9000, scoped, tag = 'input window, operand 0, single buffered']
    #allocation3 [shape = 's32[2]{0}', space=sflag, size = 0x8, scoped, tag = 'scoped memory for forward.12']
    #allocation4 [shape = 'u8[589824]{0}', space=vmem, size = 0x90000, scoped, tag = 'output window, operand 0']
    %7 = vsyncpa [#allocation3], 0
    loop: start=0, step=1, limit=4
    $region2: #{forward.12} parent=1 // loop_pre_header
      _
    $region3: #{forward.12} parent=1 // loop_header
      %s9 = sphi 0, %s13
      %p10 = scmp.ge.s32.totalorder %s9, 4
      %s17 = sphi 0, %s17
      %s19 = sphi 0, %s17
      %s20 = sphi 0, %s19
      %s34 = sphi 0, %s20
      %s40 = sphi 0, %s42
      %s43 = sphi 0, %s40
      %s44 = sphi 0, %s43
      %s60 = sphi 0, %s44
      %s66 = sphi 0, %s68
      %s69 = sphi 0, %s66
      %s70 = sphi 0, %s69
      %s86 = sphi 0, %s70
    $region4: #{forward.12} parent=1 // loop_header_branch
      %12 = sbr.rel (%p10) target = $region8
    $region5: #{forward.12} parent=1 // loop_body
      %s14 = ssub.s32 %s9, 1
      %s15 = ssub.s32 %s9, 2
      %s16 = sadd.s32 %s9, 1
      %s18 = sadd.s32 %s17, 1
      %p21 = scmp.eq.s32.totalorder %s9, 1
      %p22 = scmp.ne.s32.totalorder %s17, %s19
      %p23 = scmp.eq.s32.totalorder %s9, 0
      %p24 = por %p22, %p23
      %p25 = scmp.ne.s32.totalorder %s17, %s19
      %p26 = scmp.eq.s32.totalorder %s14, 1
      %p27 = por %p25, %p26
      %p28 = scmp.ne.s32.totalorder %s19, %s20
      %p29 = scmp.eq.s32.totalorder %s14, 0
      %p30 = por %p28, %p29
      %p31 = scmp.ne.s32.totalorder %s19, %s20
      %p32 = scmp.eq.s32.totalorder %s15, 1
      %p33 = por %p31, %p32
      %p35 = scmp.ne.s32.totalorder %s20, %s34
      %p36 = scmp.eq.s32.totalorder %s15, 0
      %p37 = por %p35, %p36
      %s38 = ssub.s32 %s9, %s16
      %p39 = scmp.eq.s32.totalorder %s38, 0
      %s41 = sadd.s32 %s40, 1
      %s42 = scalar_select %p39, %s40, %s41
      %p45 = pneg %p39
      %p46 = scmp.eq.s32.totalorder %s9, 1
      %p47 = por %p45, %p46
      %p48 = scmp.ne.s32.totalorder %s40, %s43
      %p49 = scmp.eq.s32.totalorder %s9, 0
      %p50 = por %p48, %p49
      %p51 = scmp.ne.s32.totalorder %s40, %s43
      %p52 = scmp.eq.s32.totalorder %s14, 1
      %p53 = por %p51, %p52
      %p54 = scmp.ne.s32.totalorder %s43, %s44
      %p55 = scmp.eq.s32.totalorder %s14, 0
      %p56 = por %p54, %p55
      %p57 = scmp.ne.s32.totalorder %s43, %s44
      %p58 = scmp.eq.s32.totalorder %s15, 1
      %p59 = por %p57, %p58
      %p61 = scmp.ne.s32.totalorder %s44, %s60
      %p62 = scmp.eq.s32.totalorder %s15, 0
      %p63 = por %p61, %p62
      %s64 = ssub.s32 %s9, %s16
      %p65 = scmp.eq.s32.totalorder %s64, 0
      %s67 = sadd.s32 %s66, 1
      %s68 = scalar_select %p65, %s66, %s67
      %p71 = pneg %p65
      %p72 = scmp.eq.s32.totalorder %s9, 1
      %p73 = por %p71, %p72
      %p74 = scmp.ne.s32.totalorder %s66, %s69
      %p75 = scmp.eq.s32.totalorder %s9, 0
      %p76 = por %p74, %p75
      %p77 = scmp.ne.s32.totalorder %s66, %s69
      %p78 = scmp.eq.s32.totalorder %s14, 1
      %p79 = por %p77, %p78
      %p80 = scmp.ne.s32.totalorder %s69, %s70
      %p81 = scmp.eq.s32.totalorder %s14, 0
      %p82 = por %p80, %p81
      %p83 = scmp.ne.s32.totalorder %s69, %s70
      %p84 = scmp.eq.s32.totalorder %s15, 1
      %p85 = por %p83, %p84
      %p87 = scmp.ne.s32.totalorder %s70, %s86
      %p88 = scmp.eq.s32.totalorder %s15, 0
      %p89 = por %p87, %p88
      %p90 = scmp.le.s32.totalorder 1, %s9
      %p91 = scmp.lt.s32.totalorder %s9, 3
      %p92 = pnand %p90, %p91
      %p93 = pneg %p92
      // Predicated region
      $region9: #{forward.12} parent=5 // pred_check
        _
      $region10: #{forward.12} parent=5 // pred_check_branch
        %95 = sbr.rel (%p92) target = $region12
      $region11: #{forward.12} parent=5 // pred_region
        %s96 = ssub.s32 %s9, 1
        // Predicated region
        $region13: #{forward.12} parent=11 // pred_check
          %p97 = pneg %p30
        $region14: #{forward.12} parent=11 // pred_check_branch
          %99 = sbr.rel (%p97) target = $region16
        $region15: #{forward.12} parent=11 // pred_region
          %s101 = ssub.s32 1152, 1152
          %102 = vsyncadd [#allocation3], %s101
          %s103 = sshll.u32 [#allocation2], 4
          %s104 = int_to_ptr.vmem [resolvable:$true] %s103
          %109 = dma.hbm_to_vmem [thread:$0]  %s0, 1152, %s104, [#allocation3], 128, 128, 8
        $region16: #{forward.12} parent=11 // pred_fallthru
          _
      $region12: #{forward.12} parent=5 // pred_fallthru
        _
      %p110 = scmp.lt.s32.totalorder %s9, 2
      // Predicated region
      $region17: #{forward.12} parent=5 // pred_check
        %p111 = pneg %p110
      $region18: #{forward.12} parent=5 // pred_check_branch
        %113 = sbr.rel (%p111) target = $region20
      $region19: #{forward.12} parent=5 // pred_region
        // Predicated region
        $region21: #{forward.12} parent=19 // pred_check
          %p114 = pneg %p50
        $region22: #{forward.12} parent=19 // pred_check_branch
          %116 = sbr.rel (%p114) target = $region24
        $region23: #{forward.12} parent=19 // pred_region
          %s117 = smul.u32 8, %s9
          %p118 = scmp.lt.s32.totalorder %s117, 15
          %s119 = scalar_select %p118, %s117, 15
          %s120 = smul.addr %s119, 8
          %s121 = scalar_lea.vmem %s1, %s120
          %s122 = smul.u32 8, %s9
        $region24: #{forward.12} parent=19 // pred_fallthru
          _
      $region20: #{forward.12} parent=5 // pred_fallthru
        _
      %p123 = scmp.le.s32.totalorder 1, %s9
      %p124 = scmp.lt.s32.totalorder %s9, 3
      %p125 = pnand %p123, %p124
      %p126 = pneg %p125
      // Predicated region
      $region25: #{forward.12} parent=5 // pred_check
        _
      $region26: #{forward.12} parent=5 // pred_check_branch
        %128 = sbr.rel (%p125) target = $region28
      $region27: #{forward.12} parent=5 // pred_region
        %s129 = ssub.s32 %s9, 1
        // Predicated region
        $region29: #{forward.12} parent=27 // pred_check
          %p130 = pneg %p30
        $region30: #{forward.12} parent=27 // pred_check_branch
          %132 = sbr.rel (%p130) target = $region32
        $region31: #{forward.12} parent=27 // pred_region
          %133 = dma.done [#allocation3], 1152
        $region32: #{forward.12} parent=27 // pred_fallthru
          _
        %p134 = pneg %p30
        %p135 = pneg %p27
        %s136 = smul.u32 8, %s14
        %p137 = scmp.lt.s32.totalorder %s136, 15
        %s138 = scalar_select %p137, %s136, 15
        %s139 = smul.addr %s138, 8
        %s140 = scalar_lea.vmem %s1, %s139
        %p141 = pneg %p56
        %p142 = pneg %p53
        %p143 = pneg %p82
        %p144 = pneg %p79
        %s145 = sand.u32 %s69, 1
        %s146 = sand.u32 %s69, 1
        %s147 = smul.addr %s146, 576
        %s148 = scalar_lea.vmem [#allocation4], %s147
        %s149 = smul.u32 8, %s14
        %p150 = scmp.lt.s32.totalorder %s149, 15
        %s151 = scalar_select %p150, %s149, 15
        %s152 = smul.addr %s151, 8
        %s153 = scalar_lea.vmem %s1, %s152
        %s154 = smul.u32 8, %s14
        %s155 = smul.u32 8, %s14
        %v156 = vld [vmem:[#allocation2] sm:$0xff]
        %v157 = vld [vmem:[#allocation2 + $0x8] sm:$0xff]
        %v158 = vld [vmem:[#allocation2 + $0x10] sm:$0xff]
        %v159 = vld [vmem:[#allocation2 + $0x18] sm:$0xff]
        %v160 = vld [vmem:[#allocation2 + $0x20] sm:$0xff]
        %v161 = vld [vmem:[#allocation2 + $0x28] sm:$0xff]
        %v162 = vld [vmem:[#allocation2 + $0x30] sm:$0xff]
        %v163 = vld [vmem:[#allocation2 + $0x38] sm:$0xff]
        %v164 = vld [vmem:[#allocation2 + $0x40] sm:$0xff]
        %v165 = vld [vmem:[%s153] sm:$0xff]
        %v166 = vld [vmem:[%s153 + $0x8] sm:$0xff]
        %v167 = vld [vmem:[%s153 + $0x10] sm:$0xff]
        %v168 = vld [vmem:[%s153 + $0x18] sm:$0xff]
        %v169 = vld [vmem:[%s153 + $0x20] sm:$0xff]
        %v170 = vld [vmem:[%s153 + $0x28] sm:$0xff]
        %v171 = vld [vmem:[%s153 + $0x30] sm:$0xff]
        %v172 = vld [vmem:[%s153 + $0x38] sm:$0xff]
        %vm173 = vcmask 64512
        %v175 = vsel %vm173, %v156, 0
        %v178 = vsel %vm173, %v157, 0
        %v181 = vsel %vm173, %v158, 0
        %v184 = vsel %vm173, %v159, 0
        %v187 = vsel %vm173, %v160, 0
        %v190 = vsel %vm173, %v161, 0
        %v193 = vsel %vm173, %v162, 0
        %v196 = vsel %vm173, %v163, 0
        %v199 = vsel %vm173, %v164, 0
        %201 = vmatprep.subr.mxu0 %v166
        %202 = vmatpush1.msra.mxu0 %v165
        %203 = vmatprep.subr.mxu0 0.0
        %204 = vmatpush1.msra.mxu0 0.0
        %205 = vmatprep.subr.mxu0 0.0
        %206 = vmatpush1.msra.mxu0 0.0
        %207 = vmatprep.subr.mxu0 0.0
        %208 = vmatpush1.msra.mxu0 0.0
        %209 = vmatprep.subr.mxu0 0.0
        %210 = vmatpush1.msra.mxu0 0.0
        %211 = vmatprep.subr.mxu0 0.0
        %212 = vmatpush1.msra.mxu0 0.0
        %213 = vmatprep.subr.mxu0 0.0
        %214 = vmatpush1.msra.mxu0 0.0
        %215 = vmatprep.subr.mxu0 0.0
        %216 = vmatpush1.msra.mxu0 0.0
        %217 = vmatprep.subr.mxu0 0.0
        %218 = vmatpush1.msra.mxu0 0.0
        %219 = vmatprep.subr.mxu0 0.0
        %220 = vmatpush1.msra.mxu0 0.0
        %221 = vmatprep.subr.mxu0 0.0
        %222 = vmatpush1.msra.mxu0 0.0
        %223 = vmatprep.subr.mxu0 0.0
        %224 = vmatpush1.msra.mxu0 0.0
        %225 = vmatprep.subr.mxu0 0.0
        %226 = vmatpush1.msra.mxu0 0.0
        %227 = vmatprep.subr.mxu0 0.0
        %228 = vmatpush1.msra.mxu0 0.0
        %229 = vmatprep.subr.mxu0 0.0
        %230 = vmatpush1.msra.mxu0 0.0
        %231 = vmatprep.subr.mxu0 0.0
        %232 = vmatpush1.msra.mxu0 0.0
        %233 = vmatprep.subr.mxu0 0.0
        %234 = vmatpush1.msra.mxu0 0.0
        %235 = vmatprep.subr.mxu0 0.0
        %236 = vmatpush1.msra.mxu0 0.0
        %237 = vmatprep.subr.mxu0 0.0
        %238 = vmatpush1.msra.mxu0 0.0
        %239 = vmatprep.subr.mxu0 0.0
        %240 = vmatpush1.msra.mxu0 0.0
        %241 = vmatprep.subr.mxu0 0.0
        %242 = vmatpush1.msra.mxu0 0.0
        %243 = vmatprep.subr.mxu0 0.0
        %244 = vmatpush1.msra.mxu0 0.0
        %245 = vmatprep.subr.mxu0 0.0
        %246 = vmatpush1.msra.mxu0 0.0
        %247 = vmatprep.subr.mxu0 0.0
        %248 = vmatpush1.msra.mxu0 0.0
        %249 = vmatprep.subr.mxu0 0.0
        %250 = vmatpush1.msra.mxu0 0.0
        %251 = vmatprep.subr.mxu0 0.0
        %252 = vmatpush1.msra.mxu0 0.0
        %253 = vmatprep.subr.mxu0 0.0
        %254 = vmatpush1.msra.mxu0 0.0
        %255 = vmatprep.subr.mxu0 0.0
        %256 = vmatpush1.msra.mxu0 0.0
        %257 = vmatprep.subr.mxu0 0.0
        %258 = vmatpush1.msra.mxu0 0.0
        %259 = vmatprep.subr.mxu0 0.0
        %260 = vmatpush1.msra.mxu0 0.0
        %261 = vmatprep.subr.mxu0 0.0
        %262 = vmatpush1.msra.mxu0 0.0
        %263 = vmatprep.subr.mxu0 0.0
        %264 = vmatpush1.msra.mxu0 0.0
        %265 = vmatprep.mubr.f32.mxu0 0.0
        %266 = vmatmul.mubr.f32.gmra.mrb[0].mxu0 %v175
        %v267 = vpop.f32.mrb[0].mxu0
        %v268 = vadd.f32 0.0, %v267
        %v269 = vpop.f32.mrb[0].mxu0
        %v270 = vadd.f32 0.0, %v269
        %271 = vmatprep.mubr.f32.mxu0 0.0
        %272 = vmatmul.mubr.f32.gmra.mrb[0].mxu0 %v178
        %v273 = vpop.f32.mrb[0].mxu0
        %v274 = vadd.f32 0.0, %v273
        %v275 = vpop.f32.mrb[0].mxu0
        %v276 = vadd.f32 0.0, %v275
        %277 = vmatprep.mubr.f32.mxu0 0.0
        %278 = vmatmul.mubr.f32.gmra.mrb[0].mxu0 %v181
        %v279 = vpop.f32.mrb[0].mxu0
        %v280 = vadd.f32 0.0, %v279
        %v281 = vpop.f32.mrb[0].mxu0
        %v282 = vadd.f32 0.0, %v281
        %283 = vmatprep.mubr.f32.mxu0 0.0
        %284 = vmatmul.mubr.f32.gmra.mrb[0].mxu0 %v184
        %v285 = vpop.f32.mrb[0].mxu0
        %v286 = vadd.f32 0.0, %v285
        %v287 = vpop.f32.mrb[0].mxu0
        %v288 = vadd.f32 0.0, %v287
        %289 = vmatprep.mubr.f32.mxu0 0.0
        %290 = vmatmul.mubr.f32.gmra.mrb[0].mxu0 %v187
        %v291 = vpop.f32.mrb[0].mxu0
        %v292 = vadd.f32 0.0, %v291
        %v293 = vpop.f32.mrb[0].mxu0
        %v294 = vadd.f32 0.0, %v293
        %295 = vmatprep.mubr.f32.mxu0 0.0
        %296 = vmatmul.mubr.f32.gmra.mrb[0].mxu0 %v190
        %v297 = vpop.f32.mrb[0].mxu0
        %v298 = vadd.f32 0.0, %v297
        %v299 = vpop.f32.mrb[0].mxu0
        %v300 = vadd.f32 0.0, %v299
        %301 = vmatprep.mubr.f32.mxu0 0.0
        %302 = vmatmul.mubr.f32.gmra.mrb[0].mxu0 %v193
        %v303 = vpop.f32.mrb[0].mxu0
        %v304 = vadd.f32 0.0, %v303
        %v305 = vpop.f32.mrb[0].mxu0
        %v306 = vadd.f32 0.0, %v305
        %307 = vmatprep.mubr.f32.mxu0 0.0
        %308 = vmatmul.mubr.f32.gmra.mrb[0].mxu0 %v196
        %v309 = vpop.f32.mrb[0].mxu0
        %v310 = vadd.f32 0.0, %v309
        %v311 = vpop.f32.mrb[0].mxu0
        %v312 = vadd.f32 0.0, %v311
        %313 = vmatprep.mubr.f32.mxu0 0.0
        %314 = vmatmul.mubr.f32.gmra.mrb[0].mxu0 %v199
        %v315 = vpop.f32.mrb[0].mxu0
        %v316 = vadd.f32 0.0, %v315
        %v317 = vpop.f32.mrb[0].mxu0
        %v318 = vadd.f32 0.0, %v317
        %319 = vdwg.mxu0
        %320 = vmatprep.subr.mxu0 %v168
        %321 = vmatpush1.msra.mxu0 %v167
        %322 = vmatprep.subr.mxu0 0.0
        %323 = vmatpush1.msra.mxu0 0.0
        %324 = vmatprep.subr.mxu0 0.0
        %325 = vmatpush1.msra.mxu0 0.0
        %326 = vmatprep.subr.mxu0 0.0
        %327 = vmatpush1.msra.mxu0 0.0
        %328 = vmatprep.subr.mxu0 0.0
        %329 = vmatpush1.msra.mxu0 0.0
        %330 = vmatprep.subr.mxu0 0.0
        %331 = vmatpush1.msra.mxu0 0.0
        %332 = vmatprep.subr.mxu0 0.0
        %333 = vmatpush1.msra.mxu0 0.0
        %334 = vmatprep.subr.mxu0 0.0
        %335 = vmatpush1.msra.mxu0 0.0
        %336 = vmatprep.subr.mxu0 0.0
        %337 = vmatpush1.msra.mxu0 0.0
        %338 = vmatprep.subr.mxu0 0.0
        %339 = vmatpush1.msra.mxu0 0.0
        %340 = vmatprep.subr.mxu0 0.0
        %341 = vmatpush1.msra.mxu0 0.0
        %342 = vmatprep.subr.mxu0 0.0
        %343 = vmatpush1.msra.mxu0 0.0
        %344 = vmatprep.subr.mxu0 0.0
        %345 = vmatpush1.msra.mxu0 0.0
        %346 = vmatprep.subr.mxu0 0.0
        %347 = vmatpush1.msra.mxu0 0.0
        %348 = vmatprep.subr.mxu0 0.0
        %349 = vmatpush1.msra.mxu0 0.0
        %350 = vmatprep.subr.mxu0 0.0
        %351 = vmatpush1.msra.mxu0 0.0
        %352 = vmatprep.subr.mxu0 0.0
        %353 = vmatpush1.msra.mxu0 0.0
        %354 = vmatprep.subr.mxu0 0.0
        %355 = vmatpush1.msra.mxu0 0.0
        %356 = vmatprep.subr.mxu0 0.0
        %357 = vmatpush1.msra.mxu0 0.0
        %358 = vmatprep.subr.mxu0 0.0
        %359 = vmatpush1.msra.mxu0 0.0
        %360 = vmatprep.subr.mxu0 0.0
        %361 = vmatpush1.msra.mxu0 0.0
        %362 = vmatprep.subr.mxu0 0.0
        %363 = vmatpush1.msra.mxu0 0.0
        %364 = vmatprep.subr.mxu0 0.0
        %365 = vmatpush1.msra.mxu0 0.0
        %366 = vmatprep.subr.mxu0 0.0
        %367 = vmatpush1.msra.mxu0 0.0
        %368 = vmatprep.subr.mxu0 0.0
        %369 = vmatpush1.msra.mxu0 0.0
        %370 = vmatprep.subr.mxu0 0.0
        %371 = vmatpush1.msra.mxu0 0.0
        %372 = vmatprep.subr.mxu0 0.0
        %373 = vmatpush1.msra.mxu0 0.0
        %374 = vmatprep.subr.mxu0 0.0
        %375 = vmatpush1.msra.mxu0 0.0
        %376 = vmatprep.subr.mxu0 0.0
        %377 = vmatpush1.msra.mxu0 0.0
        %378 = vmatprep.subr.mxu0 0.0
        %379 = vmatpush1.msra.mxu0 0.0
        %380 = vmatprep.subr.mxu0 0.0
        %381 = vmatpush1.msra.mxu0 0.0
        %382 = vmatprep.subr.mxu0 0.0
        %383 = vmatpush1.msra.mxu0 0.0
        %384 = vmatprep.mubr.f32.mxu0 0.0
        %385 = vmatmul.mubr.f32.gmra.mrb[0].mxu0 %v175
        %v386 = vpop.f32.mrb[0].mxu0
        %v387 = vadd.f32 0.0, %v386
        %v388 = vpop.f32.mrb[0].mxu0
        %v389 = vadd.f32 0.0, %v388
        %390 = vmatprep.mubr.f32.mxu0 0.0
        %391 = vmatmul.mubr.f32.gmra.mrb[0].mxu0 %v178
        %v392 = vpop.f32.mrb[0].mxu0
        %v393 = vadd.f32 0.0, %v392
        %v394 = vpop.f32.mrb[0].mxu0
        %v395 = vadd.f32 0.0, %v394
        %396 = vmatprep.mubr.f32.mxu0 0.0
        %397 = vmatmul.mubr.f32.gmra.mrb[0].mxu0 %v181
        %v398 = vpop.f32.mrb[0].mxu0
        %v399 = vadd.f32 0.0, %v398
        %v400 = vpop.f32.mrb[0].mxu0
        %v401 = vadd.f32 0.0, %v400
        %402 = vmatprep.mubr.f32.mxu0 0.0
        %403 = vmatmul.mubr.f32.gmra.mrb[0].mxu0 %v184
        %v404 = vpop.f32.mrb[0].mxu0
        %v405 = vadd.f32 0.0, %v404
        %v406 = vpop.f32.mrb[0].mxu0
        %v407 = vadd.f32 0.0, %v406
        %408 = vmatprep.mubr.f32.mxu0 0.0
        %409 = vmatmul.mubr.f32.gmra.mrb[0].mxu0 %v187
        %v410 = vpop.f32.mrb[0].mxu0
        %v411 = vadd.f32 0.0, %v410
        %v412 = vpop.f32.mrb[0].mxu0
        %v413 = vadd.f32 0.0, %v412
        %414 = vmatprep.mubr.f32.mxu0 0.0
        %415 = vmatmul.mubr.f32.gmra.mrb[0].mxu0 %v190
        %v416 = vpop.f32.mrb[0].mxu0
        %v417 = vadd.f32 0.0, %v416
        %v418 = vpop.f32.mrb[0].mxu0
        %v419 = vadd.f32 0.0, %v418
        %420 = vmatprep.mubr.f32.mxu0 0.0
        %421 = vmatmul.mubr.f32.gmra.mrb[0].mxu0 %v193
        %v422 = vpop.f32.mrb[0].mxu0
        %v423 = vadd.f32 0.0, %v422
        %v424 = vpop.f32.mrb[0].mxu0
        %v425 = vadd.f32 0.0, %v424
        %426 = vmatprep.mubr.f32.mxu0 0.0
        %427 = vmatmul.mubr.f32.gmra.mrb[0].mxu0 %v196
        %v428 = vpop.f32.mrb[0].mxu0
        %v429 = vadd.f32 0.0, %v428
        %v430 = vpop.f32.mrb[0].mxu0
        %v431 = vadd.f32 0.0, %v430
        %432 = vmatprep.mubr.f32.mxu0 0.0
        %433 = vmatmul.mubr.f32.gmra.mrb[0].mxu0 %v199
        %v434 = vpop.f32.mrb[0].mxu0
        %v435 = vadd.f32 0.0, %v434
        %v436 = vpop.f32.mrb[0].mxu0
        %v437 = vadd.f32 0.0, %v436
        %438 = vdwg.mxu0
        %439 = vmatprep.subr.mxu0 %v170
        %440 = vmatpush1.msra.mxu0 %v169
        %441 = vmatprep.subr.mxu0 0.0
        %442 = vmatpush1.msra.mxu0 0.0
        %443 = vmatprep.subr.mxu0 0.0
        %444 = vmatpush1.msra.mxu0 0.0
        %445 = vmatprep.subr.mxu0 0.0
        %446 = vmatpush1.msra.mxu0 0.0
        %447 = vmatprep.subr.mxu0 0.0
        %448 = vmatpush1.msra.mxu0 0.0
        %449 = vmatprep.subr.mxu0 0.0
        %450 = vmatpush1.msra.mxu0 0.0
        %451 = vmatprep.subr.mxu0 0.0
        %452 = vmatpush1.msra.mxu0 0.0
        %453 = vmatprep.subr.mxu0 0.0
        %454 = vmatpush1.msra.mxu0 0.0
        %455 = vmatprep.subr.mxu0 0.0
        %456 = vmatpush1.msra.mxu0 0.0
        %457 = vmatprep.subr.mxu0 0.0
        %458 = vmatpush1.msra.mxu0 0.0
        %459 = vmatprep.subr.mxu0 0.0
        %460 = vmatpush1.msra.mxu0 0.0
        %461 = vmatprep.subr.mxu0 0.0
        %462 = vmatpush1.msra.mxu0 0.0
        %463 = vmatprep.subr.mxu0 0.0
        %464 = vmatpush1.msra.mxu0 0.0
        %465 = vmatprep.subr.mxu0 0.0
        %466 = vmatpush1.msra.mxu0 0.0
        %467 = vmatprep.subr.mxu0 0.0
        %468 = vmatpush1.msra.mxu0 0.0
        %469 = vmatprep.subr.mxu0 0.0
        %470 = vmatpush1.msra.mxu0 0.0
        %471 = vmatprep.subr.mxu0 0.0
        %472 = vmatpush1.msra.mxu0 0.0
        %473 = vmatprep.subr.mxu0 0.0
        %474 = vmatpush1.msra.mxu0 0.0
        %475 = vmatprep.subr.mxu0 0.0
        %476 = vmatpush1.msra.mxu0 0.0
        %477 = vmatprep.subr.mxu0 0.0
        %478 = vmatpush1.msra.mxu0 0.0
        %479 = vmatprep.subr.mxu0 0.0
        %480 = vmatpush1.msra.mxu0 0.0
        %481 = vmatprep.subr.mxu0 0.0
        %482 = vmatpush1.msra.mxu0 0.0
        %483 = vmatprep.subr.mxu0 0.0
        %484 = vmatpush1.msra.mxu0 0.0
        %485 = vmatprep.subr.mxu0 0.0
        %486 = vmatpush1.msra.mxu0 0.0
        %487 = vmatprep.subr.mxu0 0.0
        %488 = vmatpush1.msra.mxu0 0.0
        %489 = vmatprep.subr.mxu0 0.0
        %490 = vmatpush1.msra.mxu0 0.0
        %491 = vmatprep.subr.mxu0 0.0
        %492 = vmatpush1.msra.mxu0 0.0
        %493 = vmatprep.subr.mxu0 0.0
        %494 = vmatpush1.msra.mxu0 0.0
        %495 = vmatprep.subr.mxu0 0.0
        %496 = vmatpush1.msra.mxu0 0.0
        %497 = vmatprep.subr.mxu0 0.0
        %498 = vmatpush1.msra.mxu0 0.0
        %499 = vmatprep.subr.mxu0 0.0
        %500 = vmatpush1.msra.mxu0 0.0
        %501 = vmatprep.subr.mxu0 0.0
        %502 = vmatpush1.msra.mxu0 0.0
        %503 = vmatprep.mubr.f32.mxu0 0.0
        %504 = vmatmul.mubr.f32.gmra.mrb[0].mxu0 %v175
        %v505 = vpop.f32.mrb[0].mxu0
        %v506 = vadd.f32 0.0, %v505
        %v507 = vpop.f32.mrb[0].mxu0
        %v508 = vadd.f32 0.0, %v507
        %509 = vmatprep.mubr.f32.mxu0 0.0
        %510 = vmatmul.mubr.f32.gmra.mrb[0].mxu0 %v178
        %v511 = vpop.f32.mrb[0].mxu0
        %v512 = vadd.f32 0.0, %v511
        %v513 = vpop.f32.mrb[0].mxu0
        %v514 = vadd.f32 0.0, %v513
        %515 = vmatprep.mubr.f32.mxu0 0.0
        %516 = vmatmul.mubr.f32.gmra.mrb[0].mxu0 %v181
        %v517 = vpop.f32.mrb[0].mxu0
        %v518 = vadd.f32 0.0, %v517
        %v519 = vpop.f32.mrb[0].mxu0
        %v520 = vadd.f32 0.0, %v519
        %521 = vmatprep.mubr.f32.mxu0 0.0
        %522 = vmatmul.mubr.f32.gmra.mrb[0].mxu0 %v184
        %v523 = vpop.f32.mrb[0].mxu0
        %v524 = vadd.f32 0.0, %v523
        %v525 = vpop.f32.mrb[0].mxu0
        %v526 = vadd.f32 0.0, %v525
        %527 = vmatprep.mubr.f32.mxu0 0.0
        %528 = vmatmul.mubr.f32.gmra.mrb[0].mxu0 %v187
        %v529 = vpop.f32.mrb[0].mxu0
        %v530 = vadd.f32 0.0, %v529
        %v531 = vpop.f32.mrb[0].mxu0
        %v532 = vadd.f32 0.0, %v531
        %533 = vmatprep.mubr.f32.mxu0 0.0
        %534 = vmatmul.mubr.f32.gmra.mrb[0].mxu0 %v190
        %v535 = vpop.f32.mrb[0].mxu0
        %v536 = vadd.f32 0.0, %v535
        %v537 = vpop.f32.mrb[0].mxu0
        %v538 = vadd.f32 0.0, %v537
        %539 = vmatprep.mubr.f32.mxu0 0.0
        %540 = vmatmul.mubr.f32.gmra.mrb[0].mxu0 %v193
        %v541 = vpop.f32.mrb[0].mxu0
        %v542 = vadd.f32 0.0, %v541
        %v543 = vpop.f32.mrb[0].mxu0
        %v544 = vadd.f32 0.0, %v543
        %545 = vmatprep.mubr.f32.mxu0 0.0
        %546 = vmatmul.mubr.f32.gmra.mrb[0].mxu0 %v196
        %v547 = vpop.f32.mrb[0].mxu0
        %v548 = vadd.f32 0.0, %v547
        %v549 = vpop.f32.mrb[0].mxu0
        %v550 = vadd.f32 0.0, %v549
        %551 = vmatprep.mubr.f32.mxu0 0.0
        %552 = vmatmul.mubr.f32.gmra.mrb[0].mxu0 %v199
        %v553 = vpop.f32.mrb[0].mxu0
        %v554 = vadd.f32 0.0, %v553
        %v555 = vpop.f32.mrb[0].mxu0
        %v556 = vadd.f32 0.0, %v555
        %557 = vdwg.mxu0
        %558 = vmatprep.subr.mxu0 %v172
        %559 = vmatpush1.msra.mxu0 %v171
        %560 = vmatprep.subr.mxu0 0.0
        %561 = vmatpush1.msra.mxu0 0.0
        %562 = vmatprep.subr.mxu0 0.0
        %563 = vmatpush1.msra.mxu0 0.0
        %564 = vmatprep.subr.mxu0 0.0
        %565 = vmatpush1.msra.mxu0 0.0
        %566 = vmatprep.subr.mxu0 0.0
        %567 = vmatpush1.msra.mxu0 0.0
        %568 = vmatprep.subr.mxu0 0.0
        %569 = vmatpush1.msra.mxu0 0.0
        %570 = vmatprep.subr.mxu0 0.0
        %571 = vmatpush1.msra.mxu0 0.0
        %572 = vmatprep.subr.mxu0 0.0
        %573 = vmatpush1.msra.mxu0 0.0
        %574 = vmatprep.subr.mxu0 0.0
        %575 = vmatpush1.msra.mxu0 0.0
        %576 = vmatprep.subr.mxu0 0.0
        %577 = vmatpush1.msra.mxu0 0.0
        %578 = vmatprep.subr.mxu0 0.0
        %579 = vmatpush1.msra.mxu0 0.0
        %580 = vmatprep.subr.mxu0 0.0
        %581 = vmatpush1.msra.mxu0 0.0
        %582 = vmatprep.subr.mxu0 0.0
        %583 = vmatpush1.msra.mxu0 0.0
        %584 = vmatprep.subr.mxu0 0.0
        %585 = vmatpush1.msra.mxu0 0.0
        %586 = vmatprep.subr.mxu0 0.0
        %587 = vmatpush1.msra.mxu0 0.0
        %588 = vmatprep.subr.mxu0 0.0
        %589 = vmatpush1.msra.mxu0 0.0
        %590 = vmatprep.subr.mxu0 0.0
        %591 = vmatpush1.msra.mxu0 0.0
        %592 = vmatprep.subr.mxu0 0.0
        %593 = vmatpush1.msra.mxu0 0.0
        %594 = vmatprep.subr.mxu0 0.0
        %595 = vmatpush1.msra.mxu0 0.0
        %596 = vmatprep.subr.mxu0 0.0
        %597 = vmatpush1.msra.mxu0 0.0
        %598 = vmatprep.subr.mxu0 0.0
        %599 = vmatpush1.msra.mxu0 0.0
        %600 = vmatprep.subr.mxu0 0.0
        %601 = vmatpush1.msra.mxu0 0.0
        %602 = vmatprep.subr.mxu0 0.0
        %603 = vmatpush1.msra.mxu0 0.0
        %604 = vmatprep.subr.mxu0 0.0
        %605 = vmatpush1.msra.mxu0 0.0
        %606 = vmatprep.subr.mxu0 0.0
        %607 = vmatpush1.msra.mxu0 0.0
        %608 = vmatprep.subr.mxu0 0.0
        %609 = vmatpush1.msra.mxu0 0.0
        %610 = vmatprep.subr.mxu0 0.0
        %611 = vmatpush1.msra.mxu0 0.0
        %612 = vmatprep.subr.mxu0 0.0
        %613 = vmatpush1.msra.mxu0 0.0
        %614 = vmatprep.subr.mxu0 0.0
        %615 = vmatpush1.msra.mxu0 0.0
        %616 = vmatprep.subr.mxu0 0.0
        %617 = vmatpush1.msra.mxu0 0.0
        %618 = vmatprep.subr.mxu0 0.0
        %619 = vmatpush1.msra.mxu0 0.0
        %620 = vmatprep.subr.mxu0 0.0
        %621 = vmatpush1.msra.mxu0 0.0
        %622 = vmatprep.mubr.f32.mxu0 0.0
        %623 = vmatmul.mubr.f32.gmra.mrb[0].mxu0 %v175
        %v624 = vpop.f32.mrb[0].mxu0
        %v625 = vadd.f32 0.0, %v624
        %v626 = vpop.f32.mrb[0].mxu0
        %v627 = vadd.f32 0.0, %v626
        %628 = vmatprep.mubr.f32.mxu0 0.0
        %629 = vmatmul.mubr.f32.gmra.mrb[0].mxu0 %v178
        %v630 = vpop.f32.mrb[0].mxu0
        %v631 = vadd.f32 0.0, %v630
        %v632 = vpop.f32.mrb[0].mxu0
        %v633 = vadd.f32 0.0, %v632
        %634 = vmatprep.mubr.f32.mxu0 0.0
        %635 = vmatmul.mubr.f32.gmra.mrb[0].mxu0 %v181
        %v636 = vpop.f32.mrb[0].mxu0
        %v637 = vadd.f32 0.0, %v636
        %v638 = vpop.f32.mrb[0].mxu0
        %v639 = vadd.f32 0.0, %v638
        %640 = vmatprep.mubr.f32.mxu0 0.0
        %641 = vmatmul.mubr.f32.gmra.mrb[0].mxu0 %v184
        %v642 = vpop.f32.mrb[0].mxu0
        %v643 = vadd.f32 0.0, %v642
        %v644 = vpop.f32.mrb[0].mxu0
        %v645 = vadd.f32 0.0, %v644
        %646 = vmatprep.mubr.f32.mxu0 0.0
        %647 = vmatmul.mubr.f32.gmra.mrb[0].mxu0 %v187
        %v648 = vpop.f32.mrb[0].mxu0
        %v649 = vadd.f32 0.0, %v648
        %v650 = vpop.f32.mrb[0].mxu0
        %v651 = vadd.f32 0.0, %v650
        %652 = vmatprep.mubr.f32.mxu0 0.0
        %653 = vmatmul.mubr.f32.gmra.mrb[0].mxu0 %v190
        %v654 = vpop.f32.mrb[0].mxu0
        %v655 = vadd.f32 0.0, %v654
        %v656 = vpop.f32.mrb[0].mxu0
        %v657 = vadd.f32 0.0, %v656
        %658 = vmatprep.mubr.f32.mxu0 0.0
        %659 = vmatmul.mubr.f32.gmra.mrb[0].mxu0 %v193
        %v660 = vpop.f32.mrb[0].mxu0
        %v661 = vadd.f32 0.0, %v660
        %v662 = vpop.f32.mrb[0].mxu0
        %v663 = vadd.f32 0.0, %v662
        %664 = vmatprep.mubr.f32.mxu0 0.0
        %665 = vmatmul.mubr.f32.gmra.mrb[0].mxu0 %v196
        %v666 = vpop.f32.mrb[0].mxu0
        %v667 = vadd.f32 0.0, %v666
        %v668 = vpop.f32.mrb[0].mxu0
        %v669 = vadd.f32 0.0, %v668
        %670 = vmatprep.mubr.f32.mxu0 0.0
        %671 = vmatmul.mubr.f32.gmra.mrb[0].mxu0 %v199
        %v672 = vpop.f32.mrb[0].mxu0
        %v673 = vadd.f32 0.0, %v672
        %v674 = vpop.f32.mrb[0].mxu0
        %v675 = vadd.f32 0.0, %v674
        %676 = vdwg.mxu0
        %677 = vst [vmem:[%s148] sm:$0xff] %v268
        %678 = vst [vmem:[%s148 + $0x8] sm:$0xff] %v270
        %679 = vst [vmem:[%s148 + $0x10] sm:$0xff] %v387
        %680 = vst [vmem:[%s148 + $0x18] sm:$0xff] %v389
        %681 = vst [vmem:[%s148 + $0x20] sm:$0xff] %v506
        %682 = vst [vmem:[%s148 + $0x28] sm:$0xff] %v508
        %683 = vst [vmem:[%s148 + $0x30] sm:$0xff] %v625
        %684 = vst [vmem:[%s148 + $0x38] sm:$0xff] %v627
        %685 = vst [vmem:[%s148 + $0x40] sm:$0xff] %v274
        %686 = vst [vmem:[%s148 + $0x48] sm:$0xff] %v276
        %687 = vst [vmem:[%s148 + $0x50] sm:$0xff] %v393
        %688 = vst [vmem:[%s148 + $0x58] sm:$0xff] %v395
        %689 = vst [vmem:[%s148 + $0x60] sm:$0xff] %v512
        %690 = vst [vmem:[%s148 + $0x68] sm:$0xff] %v514
        %691 = vst [vmem:[%s148 + $0x70] sm:$0xff] %v631
        %692 = vst [vmem:[%s148 + $0x78] sm:$0xff] %v633
        %693 = vst [vmem:[%s148 + $0x80] sm:$0xff] %v280
        %694 = vst [vmem:[%s148 + $0x88] sm:$0xff] %v282
        %695 = vst [vmem:[%s148 + $0x90] sm:$0xff] %v399
        %696 = vst [vmem:[%s148 + $0x98] sm:$0xff] %v401
        %697 = vst [vmem:[%s148 + $0xa0] sm:$0xff] %v518
        %698 = vst [vmem:[%s148 + $0xa8] sm:$0xff] %v520
        %699 = vst [vmem:[%s148 + $0xb0] sm:$0xff] %v637
        %700 = vst [vmem:[%s148 + $0xb8] sm:$0xff] %v639
        %701 = vst [vmem:[%s148 + $0xc0] sm:$0xff] %v286
        %702 = vst [vmem:[%s148 + $0xc8] sm:$0xff] %v288
        %703 = vst [vmem:[%s148 + $0xd0] sm:$0xff] %v405
        %704 = vst [vmem:[%s148 + $0xd8] sm:$0xff] %v407
        %705 = vst [vmem:[%s148 + $0xe0] sm:$0xff] %v524
        %706 = vst [vmem:[%s148 + $0xe8] sm:$0xff] %v526
        %707 = vst [vmem:[%s148 + $0xf0] sm:$0xff] %v643
        %708 = vst [vmem:[%s148 + $0xf8] sm:$0xff] %v645
        %709 = vst [vmem:[%s148 + $0x100] sm:$0xff] %v292
        %710 = vst [vmem:[%s148 + $0x108] sm:$0xff] %v294
        %711 = vst [vmem:[%s148 + $0x110] sm:$0xff] %v411
        %712 = vst [vmem:[%s148 + $0x118] sm:$0xff] %v413
        %713 = vst [vmem:[%s148 + $0x120] sm:$0xff] %v530
        %714 = vst [vmem:[%s148 + $0x128] sm:$0xff] %v532
        %715 = vst [vmem:[%s148 + $0x130] sm:$0xff] %v649
        %716 = vst [vmem:[%s148 + $0x138] sm:$0xff] %v651
        %717 = vst [vmem:[%s148 + $0x140] sm:$0xff] %v298
        %718 = vst [vmem:[%s148 + $0x148] sm:$0xff] %v300
        %719 = vst [vmem:[%s148 + $0x150] sm:$0xff] %v417
        %720 = vst [vmem:[%s148 + $0x158] sm:$0xff] %v419
        %721 = vst [vmem:[%s148 + $0x160] sm:$0xff] %v536
        %722 = vst [vmem:[%s148 + $0x168] sm:$0xff] %v538
        %723 = vst [vmem:[%s148 + $0x170] sm:$0xff] %v655
        %724 = vst [vmem:[%s148 + $0x178] sm:$0xff] %v657
        %725 = vst [vmem:[%s148 + $0x180] sm:$0xff] %v304
        %726 = vst [vmem:[%s148 + $0x188] sm:$0xff] %v306
        %727 = vst [vmem:[%s148 + $0x190] sm:$0xff] %v423
        %728 = vst [vmem:[%s148 + $0x198] sm:$0xff] %v425
        %729 = vst [vmem:[%s148 + $0x1a0] sm:$0xff] %v542
        %730 = vst [vmem:[%s148 + $0x1a8] sm:$0xff] %v544
        %731 = vst [vmem:[%s148 + $0x1b0] sm:$0xff] %v661
        %732 = vst [vmem:[%s148 + $0x1b8] sm:$0xff] %v663
        %733 = vst [vmem:[%s148 + $0x1c0] sm:$0xff] %v310
        %734 = vst [vmem:[%s148 + $0x1c8] sm:$0xff] %v312
        %735 = vst [vmem:[%s148 + $0x1d0] sm:$0xff] %v429
        %736 = vst [vmem:[%s148 + $0x1d8] sm:$0xff] %v431
        %737 = vst [vmem:[%s148 + $0x1e0] sm:$0xff] %v548
        %738 = vst [vmem:[%s148 + $0x1e8] sm:$0xff] %v550
        %739 = vst [vmem:[%s148 + $0x1f0] sm:$0xff] %v667
        %740 = vst [vmem:[%s148 + $0x1f8] sm:$0xff] %v669
        %741 = vst [vmem:[%s148 + $0x200] sm:$0xff] %v316
        %742 = vst [vmem:[%s148 + $0x208] sm:$0xff] %v318
        %743 = vst [vmem:[%s148 + $0x210] sm:$0xff] %v435
        %744 = vst [vmem:[%s148 + $0x218] sm:$0xff] %v437
        %745 = vst [vmem:[%s148 + $0x220] sm:$0xff] %v554
        %746 = vst [vmem:[%s148 + $0x228] sm:$0xff] %v556
        %747 = vst [vmem:[%s148 + $0x230] sm:$0xff] %v673
        %748 = vst [vmem:[%s148 + $0x238] sm:$0xff] %v675
        %s749 = sand.u32 %s69, 1
        %s750 = sand.u32 %s69, 1
        %s751 = smul.addr %s750, 576
        %s752 = scalar_lea.vmem [#allocation4], %s751
        // Predicated region
        $region33: #{forward.12} parent=27 // pred_check
          %p753 = pneg %p79
        $region34: #{forward.12} parent=27 // pred_check_branch
          %755 = sbr.rel (%p753) target = $region36
        $region35: #{forward.12} parent=27 // pred_region
          %s756 = smul.u32 8, %s14
          %s757 = smul.addr %s756, 8
          %s758 = scalar_lea.vmem %s2, %s757
          // Predicated region
          $region37: #{forward.12} parent=35 // pred_check
            _
          $region38: #{forward.12} parent=35 // pred_check_branch
            %760 = sbr.rel (0) target = $region40
          $region39: #{forward.12} parent=35 // pred_region
            // Predicated region
            $region41: #{forward.12} parent=39 // pred_check
              _
            $region42: #{forward.12} parent=39 // pred_check_branch
              %762 = sbr.rel (0) target = $region44
            $region43: #{forward.12} parent=39 // pred_region
              loop: start=0, step=1, limit=1
              $region45: #{forward.12} parent=43 // loop_pre_header
                _
              $region46: #{forward.12} parent=43 // loop_header
                %s764 = sphi 0, %s768
                %p765 = scmp.ge.s32.totalorder %s764, 1
                %s769 = sphi %s752, %s752
                %s770 = sphi %s758, %s758
              $region47: #{forward.12} parent=43 // loop_header_branch
                %767 = sbr.rel (%p765) target = $region51
              $region48: #{forward.12} parent=43 // loop_body
                %v771 = vld [vmem:[%s769] sm:$0xff]
                %772 = vst [vmem:[%s770] sm:$0xff] %v771
                %v773 = vld [vmem:[%s769 + $0x8] sm:$0xff]
                %774 = vst [vmem:[%s770 + $0x8] sm:$0xff] %v773
                %v775 = vld [vmem:[%s769 + $0x10] sm:$0xff]
                %776 = vst [vmem:[%s770 + $0x10] sm:$0xff] %v775
                %v777 = vld [vmem:[%s769 + $0x18] sm:$0xff]
                %778 = vst [vmem:[%s770 + $0x18] sm:$0xff] %v777
                %v779 = vld [vmem:[%s769 + $0x20] sm:$0xff]
                %780 = vst [vmem:[%s770 + $0x20] sm:$0xff] %v779
                %v781 = vld [vmem:[%s769 + $0x28] sm:$0xff]
                %782 = vst [vmem:[%s770 + $0x28] sm:$0xff] %v781
                %v783 = vld [vmem:[%s769 + $0x30] sm:$0xff]
                %784 = vst [vmem:[%s770 + $0x30] sm:$0xff] %v783
                %v785 = vld [vmem:[%s769 + $0x38] sm:$0xff]
                %786 = vst [vmem:[%s770 + $0x38] sm:$0xff] %v785
                %v787 = vld [vmem:[%s769 + $0x40] sm:$0xff]
                %788 = vst [vmem:[%s770 + $0x80] sm:$0xff] %v787
                %v789 = vld [vmem:[%s769 + $0x48] sm:$0xff]
                %790 = vst [vmem:[%s770 + $0x88] sm:$0xff] %v789
                %v791 = vld [vmem:[%s769 + $0x50] sm:$0xff]
                %792 = vst [vmem:[%s770 + $0x90] sm:$0xff] %v791
                %v793 = vld [vmem:[%s769 + $0x58] sm:$0xff]
                %794 = vst [vmem:[%s770 + $0x98] sm:$0xff] %v793
                %v795 = vld [vmem:[%s769 + $0x60] sm:$0xff]
                %796 = vst [vmem:[%s770 + $0xa0] sm:$0xff] %v795
                %v797 = vld [vmem:[%s769 + $0x68] sm:$0xff]
                %798 = vst [vmem:[%s770 + $0xa8] sm:$0xff] %v797
                %v799 = vld [vmem:[%s769 + $0x70] sm:$0xff]
                %800 = vst [vmem:[%s770 + $0xb0] sm:$0xff] %v799
                %v801 = vld [vmem:[%s769 + $0x78] sm:$0xff]
                %802 = vst [vmem:[%s770 + $0xb8] sm:$0xff] %v801
                %v803 = vld [vmem:[%s769 + $0x80] sm:$0xff]
                %804 = vst [vmem:[%s770 + $0x100] sm:$0xff] %v803
                %v805 = vld [vmem:[%s769 + $0x88] sm:$0xff]
                %806 = vst [vmem:[%s770 + $0x108] sm:$0xff] %v805
                %v807 = vld [vmem:[%s769 + $0x90] sm:$0xff]
                %808 = vst [vmem:[%s770 + $0x110] sm:$0xff] %v807
                %v809 = vld [vmem:[%s769 + $0x98] sm:$0xff]
                %810 = vst [vmem:[%s770 + $0x118] sm:$0xff] %v809
                %v811 = vld [vmem:[%s769 + $0xa0] sm:$0xff]
                %812 = vst [vmem:[%s770 + $0x120] sm:$0xff] %v811
                %v813 = vld [vmem:[%s769 + $0xa8] sm:$0xff]
                %814 = vst [vmem:[%s770 + $0x128] sm:$0xff] %v813
                %v815 = vld [vmem:[%s769 + $0xb0] sm:$0xff]
                %816 = vst [vmem:[%s770 + $0x130] sm:$0xff] %v815
                %v817 = vld [vmem:[%s769 + $0xb8] sm:$0xff]
                %818 = vst [vmem:[%s770 + $0x138] sm:$0xff] %v817
                %v819 = vld [vmem:[%s769 + $0xc0] sm:$0xff]
                %820 = vst [vmem:[%s770 + $0x180] sm:$0xff] %v819
                %v821 = vld [vmem:[%s769 + $0xc8] sm:$0xff]
                %822 = vst [vmem:[%s770 + $0x188] sm:$0xff] %v821
                %v823 = vld [vmem:[%s769 + $0xd0] sm:$0xff]
                %824 = vst [vmem:[%s770 + $0x190] sm:$0xff] %v823
                %v825 = vld [vmem:[%s769 + $0xd8] sm:$0xff]
                %826 = vst [vmem:[%s770 + $0x198] sm:$0xff] %v825
                %v827 = vld [vmem:[%s769 + $0xe0] sm:$0xff]
                %828 = vst [vmem:[%s770 + $0x1a0] sm:$0xff] %v827
                %v829 = vld [vmem:[%s769 + $0xe8] sm:$0xff]
                %830 = vst [vmem:[%s770 + $0x1a8] sm:$0xff] %v829
                %v831 = vld [vmem:[%s769 + $0xf0] sm:$0xff]
                %832 = vst [vmem:[%s770 + $0x1b0] sm:$0xff] %v831
                %v833 = vld [vmem:[%s769 + $0xf8] sm:$0xff]
                %834 = vst [vmem:[%s770 + $0x1b8] sm:$0xff] %v833
                %v835 = vld [vmem:[%s769 + $0x100] sm:$0xff]
                %836 = vst [vmem:[%s770 + $0x200] sm:$0xff] %v835
                %v837 = vld [vmem:[%s769 + $0x108] sm:$0xff]
                %838 = vst [vmem:[%s770 + $0x208] sm:$0xff] %v837
                %v839 = vld [vmem:[%s769 + $0x110] sm:$0xff]
                %840 = vst [vmem:[%s770 + $0x210] sm:$0xff] %v839
                %v841 = vld [vmem:[%s769 + $0x118] sm:$0xff]
                %842 = vst [vmem:[%s770 + $0x218] sm:$0xff] %v841
                %v843 = vld [vmem:[%s769 + $0x120] sm:$0xff]
                %844 = vst [vmem:[%s770 + $0x220] sm:$0xff] %v843
                %v845 = vld [vmem:[%s769 + $0x128] sm:$0xff]
                %846 = vst [vmem:[%s770 + $0x228] sm:$0xff] %v845
                %v847 = vld [vmem:[%s769 + $0x130] sm:$0xff]
                %848 = vst [vmem:[%s770 + $0x230] sm:$0xff] %v847
                %v849 = vld [vmem:[%s769 + $0x138] sm:$0xff]
                %850 = vst [vmem:[%s770 + $0x238] sm:$0xff] %v849
                %v851 = vld [vmem:[%s769 + $0x140] sm:$0xff]
                %852 = vst [vmem:[%s770 + $0x280] sm:$0xff] %v851
                %v853 = vld [vmem:[%s769 + $0x148] sm:$0xff]
                %854 = vst [vmem:[%s770 + $0x288] sm:$0xff] %v853
                %v855 = vld [vmem:[%s769 + $0x150] sm:$0xff]
                %856 = vst [vmem:[%s770 + $0x290] sm:$0xff] %v855
                %v857 = vld [vmem:[%s769 + $0x158] sm:$0xff]
                %858 = vst [vmem:[%s770 + $0x298] sm:$0xff] %v857
                %v859 = vld [vmem:[%s769 + $0x160] sm:$0xff]
                %860 = vst [vmem:[%s770 + $0x2a0] sm:$0xff] %v859
                %v861 = vld [vmem:[%s769 + $0x168] sm:$0xff]
                %862 = vst [vmem:[%s770 + $0x2a8] sm:$0xff] %v861
                %v863 = vld [vmem:[%s769 + $0x170] sm:$0xff]
                %864 = vst [vmem:[%s770 + $0x2b0] sm:$0xff] %v863
                %v865 = vld [vmem:[%s769 + $0x178] sm:$0xff]
                %866 = vst [vmem:[%s770 + $0x2b8] sm:$0xff] %v865
                %v867 = vld [vmem:[%s769 + $0x180] sm:$0xff]
                %868 = vst [vmem:[%s770 + $0x300] sm:$0xff] %v867
                %v869 = vld [vmem:[%s769 + $0x188] sm:$0xff]
                %870 = vst [vmem:[%s770 + $0x308] sm:$0xff] %v869
                %v871 = vld [vmem:[%s769 + $0x190] sm:$0xff]
                %872 = vst [vmem:[%s770 + $0x310] sm:$0xff] %v871
                %v873 = vld [vmem:[%s769 + $0x198] sm:$0xff]
                %874 = vst [vmem:[%s770 + $0x318] sm:$0xff] %v873
                %v875 = vld [vmem:[%s769 + $0x1a0] sm:$0xff]
                %876 = vst [vmem:[%s770 + $0x320] sm:$0xff] %v875
                %v877 = vld [vmem:[%s769 + $0x1a8] sm:$0xff]
                %878 = vst [vmem:[%s770 + $0x328] sm:$0xff] %v877
                %v879 = vld [vmem:[%s769 + $0x1b0] sm:$0xff]
                %880 = vst [vmem:[%s770 + $0x330] sm:$0xff] %v879
                %v881 = vld [vmem:[%s769 + $0x1b8] sm:$0xff]
                %882 = vst [vmem:[%s770 + $0x338] sm:$0xff] %v881
                %v883 = vld [vmem:[%s769 + $0x1c0] sm:$0xff]
                %884 = vst [vmem:[%s770 + $0x380] sm:$0xff] %v883
                %v885 = vld [vmem:[%s769 + $0x1c8] sm:$0xff]
                %886 = vst [vmem:[%s770 + $0x388] sm:$0xff] %v885
                %v887 = vld [vmem:[%s769 + $0x1d0] sm:$0xff]
                %888 = vst [vmem:[%s770 + $0x390] sm:$0xff] %v887
                %v889 = vld [vmem:[%s769 + $0x1d8] sm:$0xff]
                %890 = vst [vmem:[%s770 + $0x398] sm:$0xff] %v889
                %v891 = vld [vmem:[%s769 + $0x1e0] sm:$0xff]
                %892 = vst [vmem:[%s770 + $0x3a0] sm:$0xff] %v891
                %v893 = vld [vmem:[%s769 + $0x1e8] sm:$0xff]
                %894 = vst [vmem:[%s770 + $0x3a8] sm:$0xff] %v893
                %v895 = vld [vmem:[%s769 + $0x1f0] sm:$0xff]
                %896 = vst [vmem:[%s770 + $0x3b0] sm:$0xff] %v895
                %v897 = vld [vmem:[%s769 + $0x1f8] sm:$0xff]
                %898 = vst [vmem:[%s770 + $0x3b8] sm:$0xff] %v897
                %v899 = vld [vmem:[%s769 + $0x200] sm:$0xff]
                %900 = vst [vmem:[%s770 + $0x400] sm:$0xff] %v899
                %v901 = vld [vmem:[%s769 + $0x208] sm:$0xff]
                %902 = vst [vmem:[%s770 + $0x408] sm:$0xff] %v901
                %v903 = vld [vmem:[%s769 + $0x210] sm:$0xff]
                %904 = vst [vmem:[%s770 + $0x410] sm:$0xff] %v903
                %v905 = vld [vmem:[%s769 + $0x218] sm:$0xff]
                %906 = vst [vmem:[%s770 + $0x418] sm:$0xff] %v905
                %v907 = vld [vmem:[%s769 + $0x220] sm:$0xff]
                %908 = vst [vmem:[%s770 + $0x420] sm:$0xff] %v907
                %v909 = vld [vmem:[%s769 + $0x228] sm:$0xff]
                %910 = vst [vmem:[%s770 + $0x428] sm:$0xff] %v909
                %v911 = vld [vmem:[%s769 + $0x230] sm:$0xff]
                %912 = vst [vmem:[%s770 + $0x430] sm:$0xff] %v911
                %v913 = vld [vmem:[%s769 + $0x238] sm:$0xff]
                %914 = vst [vmem:[%s770 + $0x438] sm:$0xff] %v913
              $region49: #{forward.12} parent=43 // loop_footer
                %s768 = sadd.s32 1, %s764
              $region50: #{forward.12} parent=43 // loop_footer_branch
                %763 = sbr.rel target = $region46
              $region51: #{forward.12} parent=43 // loop_exit
                _
            $region44: #{forward.12} parent=39 // pred_fallthru
              _
            // Predicated region
            $region52: #{forward.12} parent=39 // pred_check
              _
            $region53: #{forward.12} parent=39 // pred_check_branch
              %916 = sbr.rel target = $region55
            $region54: #{forward.12} parent=39 // pred_region
              _
            $region55: #{forward.12} parent=39 // pred_fallthru
              _
          $region40: #{forward.12} parent=35 // pred_fallthru
            _
          %917 = vnop
        $region36: #{forward.12} parent=27 // pred_fallthru
          _
      $region28: #{forward.12} parent=5 // pred_fallthru
        _
      %p918 = scmp.le.s32.totalorder 2, %s9
      // Predicated region
      $region56: #{forward.12} parent=5 // pred_check
        %p919 = pneg %p918
      $region57: #{forward.12} parent=5 // pred_check_branch
        %921 = sbr.rel (%p919) target = $region59
      $region58: #{forward.12} parent=5 // pred_region
        %s922 = ssub.s32 %s9, 2
        // Predicated region
        $region60: #{forward.12} parent=58 // pred_check
          %p923 = pneg %p85
        $region61: #{forward.12} parent=58 // pred_check_branch
          %925 = sbr.rel (%p923) target = $region63
        $region62: #{forward.12} parent=58 // pred_region
          %s926 = sand.u32 %s70, 1
          %s927 = sand.u32 %s70, 1
          %s928 = smul.addr %s927, 576
          %s929 = scalar_lea.vmem [#allocation4], %s928
        $region63: #{forward.12} parent=58 // pred_fallthru
          _
      $region59: #{forward.12} parent=5 // pred_fallthru
        _
    $region6: #{forward.12} parent=1 // loop_footer
      %s13 = sadd.s32 1, %s9
    $region7: #{forward.12} parent=1 // loop_footer_branch
      %8 = sbr.rel target = $region3
    $region8: #{forward.12} parent=1 // loop_exit
      _
    %930 = vsyncpa [#allocation3], 1
    %s931 = scalar_lea.sflag [#allocation3], 1
    %932 = vsyncpa %s931, 1

// kernel: forward.13
$region0: #{forward.13}
  #allocation0 [shape = 'u32[]', space=smem, size = 0x4, offset = 0x4, fixed_abs, tag = 'smem constant byte address 0x4 - core index']
  #allocation1 [shape = 'u32[144,128]{1,0:T(1,128)}', space=vmem, size = 0x12000, scoped, tag = 'internal scratch']
  %s0 = inlined_call_operand.vmem [shape: f32[80,8], index: 0, kind: input, shape index: {}]
  %s1 = inlined_call_operand.vmem [shape: f32[8,18432], index: 1, kind: input, shape index: {}]
  %s2 = inlined_call_operand.vmem [shape: f32[80,18432], index: 2, kind: output, shape index: {}]
  %s3 = sld [smem:[#allocation0]]
  $region60: #{forward.13} parent=0
    _
  %s5 = ssub.s32 1, %s3
  %s6 = scalar_select 0, %s5, %s3
  $region1: #{forward.13} parent=0
    #allocation2 [shape = 'u8[1966080]{0}', space=vmem, size = 0x1e0000, scoped, tag = 'output window, operand 0']
    loop: start=0, step=1, limit=8
    $region2: #{forward.13} parent=1 // loop_pre_header
      _
    $region3: #{forward.13} parent=1 // loop_header
      %s8 = sphi 0, %s12
      %p9 = scmp.ge.s32.totalorder %s8, 8
      %s16 = sphi 0, %s16
      %s18 = sphi 0, %s16
      %s19 = sphi 0, %s18
      %s33 = sphi 0, %s19
      %s39 = sphi 0, %s41
      %s42 = sphi 0, %s39
      %s43 = sphi 0, %s42
      %s59 = sphi 0, %s43
      %s65 = sphi 0, %s67
      %s68 = sphi 0, %s65
      %s69 = sphi 0, %s68
      %s85 = sphi 0, %s69
    $region4: #{forward.13} parent=1 // loop_header_branch
      %11 = sbr.rel (%p9) target = $region8
    $region5: #{forward.13} parent=1 // loop_body
      %s13 = ssub.s32 %s8, 1
      %s14 = ssub.s32 %s8, 2
      %s15 = sadd.s32 %s8, 1
      %s17 = sadd.s32 %s16, 1
      %p20 = scmp.eq.s32.totalorder %s8, 5
      %p21 = scmp.ne.s32.totalorder %s16, %s18
      %p22 = scmp.eq.s32.totalorder %s8, 0
      %p23 = por %p21, %p22
      %p24 = scmp.ne.s32.totalorder %s16, %s18
      %p25 = scmp.eq.s32.totalorder %s13, 5
      %p26 = por %p24, %p25
      %p27 = scmp.ne.s32.totalorder %s18, %s19
      %p28 = scmp.eq.s32.totalorder %s13, 0
      %p29 = por %p27, %p28
      %p30 = scmp.ne.s32.totalorder %s18, %s19
      %p31 = scmp.eq.s32.totalorder %s14, 5
      %p32 = por %p30, %p31
      %p34 = scmp.ne.s32.totalorder %s19, %s33
      %p35 = scmp.eq.s32.totalorder %s14, 0
      %p36 = por %p34, %p35
      %s37 = ssub.s32 %s8, %s15
      %p38 = scmp.eq.s32.totalorder %s37, 0
      %s40 = sadd.s32 %s39, 1
      %s41 = scalar_select %p38, %s39, %s40
      %p44 = pneg %p38
      %p45 = scmp.eq.s32.totalorder %s8, 5
      %p46 = por %p44, %p45
      %p47 = scmp.ne.s32.totalorder %s39, %s42
      %p48 = scmp.eq.s32.totalorder %s8, 0
      %p49 = por %p47, %p48
      %p50 = scmp.ne.s32.totalorder %s39, %s42
      %p51 = scmp.eq.s32.totalorder %s13, 5
      %p52 = por %p50, %p51
      %p53 = scmp.ne.s32.totalorder %s42, %s43
      %p54 = scmp.eq.s32.totalorder %s13, 0
      %p55 = por %p53, %p54
      %p56 = scmp.ne.s32.totalorder %s42, %s43
      %p57 = scmp.eq.s32.totalorder %s14, 5
      %p58 = por %p56, %p57
      %p60 = scmp.ne.s32.totalorder %s43, %s59
      %p61 = scmp.eq.s32.totalorder %s14, 0
      %p62 = por %p60, %p61
      %s63 = ssub.s32 %s8, %s15
      %p64 = scmp.eq.s32.totalorder %s63, 0
      %s66 = sadd.s32 %s65, 1
      %s67 = scalar_select %p64, %s65, %s66
      %p70 = pneg %p64
      %p71 = scmp.eq.s32.totalorder %s8, 5
      %p72 = por %p70, %p71
      %p73 = scmp.ne.s32.totalorder %s65, %s68
      %p74 = scmp.eq.s32.totalorder %s8, 0
      %p75 = por %p73, %p74
      %p76 = scmp.ne.s32.totalorder %s65, %s68
      %p77 = scmp.eq.s32.totalorder %s13, 5
      %p78 = por %p76, %p77
      %p79 = scmp.ne.s32.totalorder %s68, %s69
      %p80 = scmp.eq.s32.totalorder %s13, 0
      %p81 = por %p79, %p80
      %p82 = scmp.ne.s32.totalorder %s68, %s69
      %p83 = scmp.eq.s32.totalorder %s14, 5
      %p84 = por %p82, %p83
      %p86 = scmp.ne.s32.totalorder %s69, %s85
      %p87 = scmp.eq.s32.totalorder %s14, 0
      %p88 = por %p86, %p87
      %p89 = scmp.le.s32.totalorder 1, %s8
      %p90 = scmp.lt.s32.totalorder %s8, 7
      %p91 = pnand %p89, %p90
      %p92 = pneg %p91
      // Predicated region
      $region9: #{forward.13} parent=5 // pred_check
        _
      $region10: #{forward.13} parent=5 // pred_check_branch
        %94 = sbr.rel (%p91) target = $region12
      $region11: #{forward.13} parent=5 // pred_region
        %s95 = ssub.s32 %s8, 1
        // Predicated region
        $region13: #{forward.13} parent=11 // pred_check
          %p96 = pneg %p29
        $region14: #{forward.13} parent=11 // pred_check_branch
          %98 = sbr.rel (%p96) target = $region16
        $region15: #{forward.13} parent=11 // pred_region
          _
        $region16: #{forward.13} parent=11 // pred_fallthru
          _
      $region12: #{forward.13} parent=5 // pred_fallthru
        _
      %p99 = scmp.lt.s32.totalorder %s8, 6
      // Predicated region
      $region17: #{forward.13} parent=5 // pred_check
        %p100 = pneg %p99
      $region18: #{forward.13} parent=5 // pred_check_branch
        %102 = sbr.rel (%p100) target = $region20
      $region19: #{forward.13} parent=5 // pred_region
        // Predicated region
        $region21: #{forward.13} parent=19 // pred_check
          %p103 = pneg %p49
        $region22: #{forward.13} parent=19 // pred_check_branch
          %105 = sbr.rel (%p103) target = $region24
        $region23: #{forward.13} parent=19 // pred_region
          %s106 = smul.u32 24, %s8
          %p107 = scmp.lt.s32.totalorder %s106, 143
          %s108 = scalar_select %p107, %s106, 143
          %s109 = smul.addr %s108, 8
          %s110 = scalar_lea.vmem %s1, %s109
          %s111 = smul.u32 24, %s8
        $region24: #{forward.13} parent=19 // pred_fallthru
          _
      $region20: #{forward.13} parent=5 // pred_fallthru
        _
      %p112 = scmp.le.s32.totalorder 1, %s8
      %p113 = scmp.lt.s32.totalorder %s8, 7
      %p114 = pnand %p112, %p113
      %p115 = pneg %p114
      // Predicated region
      $region25: #{forward.13} parent=5 // pred_check
        _
      $region26: #{forward.13} parent=5 // pred_check_branch
        %117 = sbr.rel (%p114) target = $region28
      $region27: #{forward.13} parent=5 // pred_region
        %s118 = ssub.s32 %s8, 1
        %p119 = pneg %p29
        %p120 = pneg %p26
        %s121 = smul.u32 24, %s13
        %p122 = scmp.lt.s32.totalorder %s121, 143
        %s123 = scalar_select %p122, %s121, 143
        %s124 = smul.addr %s123, 8
        %s125 = scalar_lea.vmem %s1, %s124
        %p126 = pneg %p55
        %p127 = pneg %p52
        %p128 = pneg %p81
        %p129 = pneg %p78
        %s130 = sand.u32 %s68, 1
        %s131 = sand.u32 %s68, 1
        %s132 = smul.addr %s131, 1920
        %s133 = scalar_lea.vmem [#allocation2], %s132
        %s134 = smul.u32 24, %s13
        %p135 = scmp.lt.s32.totalorder %s134, 143
        %s136 = scalar_select %p135, %s134, 143
        %s137 = smul.addr %s136, 8
        %s138 = scalar_lea.vmem %s1, %s137
        %s139 = smul.u32 24, %s13
        %s140 = smul.u32 24, %s13
        %v141 = vld [vmem:[%s0] sm:$0xff]
        %v142 = vld [vmem:[%s0 + $0x8] sm:$0xff]
        %v143 = vld [vmem:[%s0 + $0x10] sm:$0xff]
        %v144 = vld [vmem:[%s0 + $0x18] sm:$0xff]
        %v145 = vld [vmem:[%s0 + $0x20] sm:$0xff]
        %v146 = vld [vmem:[%s0 + $0x28] sm:$0xff]
        %v147 = vld [vmem:[%s0 + $0x30] sm:$0xff]
        %v148 = vld [vmem:[%s0 + $0x38] sm:$0xff]
        %v149 = vld [vmem:[%s0 + $0x40] sm:$0xff]
        %v150 = vld [vmem:[%s0 + $0x48] sm:$0xff]
        %v151 = vld [vmem:[%s138] sm:$0xff]
        %v152 = vld [vmem:[%s138 + $0x8] sm:$0xff]
        %v153 = vld [vmem:[%s138 + $0x10] sm:$0xff]
        %v154 = vld [vmem:[%s138 + $0x18] sm:$0xff]
        %v155 = vld [vmem:[%s138 + $0x20] sm:$0xff]
        %v156 = vld [vmem:[%s138 + $0x28] sm:$0xff]
        %v157 = vld [vmem:[%s138 + $0x30] sm:$0xff]
        %v158 = vld [vmem:[%s138 + $0x38] sm:$0xff]
        %v159 = vld [vmem:[%s138 + $0x40] sm:$0xff]
        %v160 = vld [vmem:[%s138 + $0x48] sm:$0xff]
        %v161 = vld [vmem:[%s138 + $0x50] sm:$0xff]
        %v162 = vld [vmem:[%s138 + $0x58] sm:$0xff]
        %v163 = vld [vmem:[%s138 + $0x60] sm:$0xff]
        %v164 = vld [vmem:[%s138 + $0x68] sm:$0xff]
        %v165 = vld [vmem:[%s138 + $0x70] sm:$0xff]
        %v166 = vld [vmem:[%s138 + $0x78] sm:$0xff]
        %v167 = vld [vmem:[%s138 + $0x80] sm:$0xff]
        %v168 = vld [vmem:[%s138 + $0x88] sm:$0xff]
        %v169 = vld [vmem:[%s138 + $0x90] sm:$0xff]
        %v170 = vld [vmem:[%s138 + $0x98] sm:$0xff]
        %v171 = vld [vmem:[%s138 + $0xa0] sm:$0xff]
        %v172 = vld [vmem:[%s138 + $0xa8] sm:$0xff]
        %v173 = vld [vmem:[%s138 + $0xb0] sm:$0xff]
        %v174 = vld [vmem:[%s138 + $0xb8] sm:$0xff]
        %vm175 = vcmask 64512
        %v177 = vsel %vm175, %v141, 0
        %v180 = vsel %vm175, %v142, 0
        %v183 = vsel %vm175, %v143, 0
        %v186 = vsel %vm175, %v144, 0
        %v189 = vsel %vm175, %v145, 0
        %v192 = vsel %vm175, %v146, 0
        %v195 = vsel %vm175, %v147, 0
        %v198 = vsel %vm175, %v148, 0
        %v201 = vsel %vm175, %v149, 0
        %v204 = vsel %vm175, %v150, 0
        %206 = vmatprep.subr.mxu0 %v152
        %207 = vmatpush1.msra.mxu0 %v151
        %208 = vmatprep.subr.mxu0 0.0
        %209 = vmatpush1.msra.mxu0 0.0
        %210 = vmatprep.subr.mxu0 0.0
        %211 = vmatpush1.msra.mxu0 0.0
        %212 = vmatprep.subr.mxu0 0.0
        %213 = vmatpush1.msra.mxu0 0.0
        %214 = vmatprep.subr.mxu0 0.0
        %215 = vmatpush1.msra.mxu0 0.0
        %216 = vmatprep.subr.mxu0 0.0
        %217 = vmatpush1.msra.mxu0 0.0
        %218 = vmatprep.subr.mxu0 0.0
        %219 = vmatpush1.msra.mxu0 0.0
        %220 = vmatprep.subr.mxu0 0.0
        %221 = vmatpush1.msra.mxu0 0.0
        %222 = vmatprep.subr.mxu0 0.0
        %223 = vmatpush1.msra.mxu0 0.0
        %224 = vmatprep.subr.mxu0 0.0
        %225 = vmatpush1.msra.mxu0 0.0
        %226 = vmatprep.subr.mxu0 0.0
        %227 = vmatpush1.msra.mxu0 0.0
        %228 = vmatprep.subr.mxu0 0.0
        %229 = vmatpush1.msra.mxu0 0.0
        %230 = vmatprep.subr.mxu0 0.0
        %231 = vmatpush1.msra.mxu0 0.0
        %232 = vmatprep.subr.mxu0 0.0
        %233 = vmatpush1.msra.mxu0 0.0
        %234 = vmatprep.subr.mxu0 0.0
        %235 = vmatpush1.msra.mxu0 0.0
        %236 = vmatprep.subr.mxu0 0.0
        %237 = vmatpush1.msra.mxu0 0.0
        %238 = vmatprep.subr.mxu0 0.0
        %239 = vmatpush1.msra.mxu0 0.0
        %240 = vmatprep.subr.mxu0 0.0
        %241 = vmatpush1.msra.mxu0 0.0
        %242 = vmatprep.subr.mxu0 0.0
        %243 = vmatpush1.msra.mxu0 0.0
        %244 = vmatprep.subr.mxu0 0.0
        %245 = vmatpush1.msra.mxu0 0.0
        %246 = vmatprep.subr.mxu0 0.0
        %247 = vmatpush1.msra.mxu0 0.0
        %248 = vmatprep.subr.mxu0 0.0
        %249 = vmatpush1.msra.mxu0 0.0
        %250 = vmatprep.subr.mxu0 0.0
        %251 = vmatpush1.msra.mxu0 0.0
        %252 = vmatprep.subr.mxu0 0.0
        %253 = vmatpush1.msra.mxu0 0.0
        %254 = vmatprep.subr.mxu0 0.0
        %255 = vmatpush1.msra.mxu0 0.0
        %256 = vmatprep.subr.mxu0 0.0
        %257 = vmatpush1.msra.mxu0 0.0
        %258 = vmatprep.subr.mxu0 0.0
        %259 = vmatpush1.msra.mxu0 0.0
        %260 = vmatprep.subr.mxu0 0.0
        %261 = vmatpush1.msra.mxu0 0.0
        %262 = vmatprep.subr.mxu0 0.0
        %263 = vmatpush1.msra.mxu0 0.0
        %264 = vmatprep.subr.mxu0 0.0
        %265 = vmatpush1.msra.mxu0 0.0
        %266 = vmatprep.subr.mxu0 0.0
        %267 = vmatpush1.msra.mxu0 0.0
        %268 = vmatprep.subr.mxu0 0.0
        %269 = vmatpush1.msra.mxu0 0.0
        %270 = vmatprep.mubr.f32.mxu0 0.0
        %271 = vmatmul.mubr.f32.gmra.mrb[0].mxu0 %v177
        %v272 = vpop.f32.mrb[0].mxu0
        %v273 = vadd.f32 0.0, %v272
        %v274 = vpop.f32.mrb[0].mxu0
        %v275 = vadd.f32 0.0, %v274
        %276 = vmatprep.mubr.f32.mxu0 0.0
        %277 = vmatmul.mubr.f32.gmra.mrb[0].mxu0 %v180
        %v278 = vpop.f32.mrb[0].mxu0
        %v279 = vadd.f32 0.0, %v278
        %v280 = vpop.f32.mrb[0].mxu0
        %v281 = vadd.f32 0.0, %v280
        %282 = vmatprep.mubr.f32.mxu0 0.0
        %283 = vmatmul.mubr.f32.gmra.mrb[0].mxu0 %v183
        %v284 = vpop.f32.mrb[0].mxu0
        %v285 = vadd.f32 0.0, %v284
        %v286 = vpop.f32.mrb[0].mxu0
        %v287 = vadd.f32 0.0, %v286
        %288 = vmatprep.mubr.f32.mxu0 0.0
        %289 = vmatmul.mubr.f32.gmra.mrb[0].mxu0 %v186
        %v290 = vpop.f32.mrb[0].mxu0
        %v291 = vadd.f32 0.0, %v290
        %v292 = vpop.f32.mrb[0].mxu0
        %v293 = vadd.f32 0.0, %v292
        %294 = vmatprep.mubr.f32.mxu0 0.0
        %295 = vmatmul.mubr.f32.gmra.mrb[0].mxu0 %v189
        %v296 = vpop.f32.mrb[0].mxu0
        %v297 = vadd.f32 0.0, %v296
        %v298 = vpop.f32.mrb[0].mxu0
        %v299 = vadd.f32 0.0, %v298
        %300 = vmatprep.mubr.f32.mxu0 0.0
        %301 = vmatmul.mubr.f32.gmra.mrb[0].mxu0 %v192
        %v302 = vpop.f32.mrb[0].mxu0
        %v303 = vadd.f32 0.0, %v302
        %v304 = vpop.f32.mrb[0].mxu0
        %v305 = vadd.f32 0.0, %v304
        %306 = vmatprep.mubr.f32.mxu0 0.0
        %307 = vmatmul.mubr.f32.gmra.mrb[0].mxu0 %v195
        %v308 = vpop.f32.mrb[0].mxu0
        %v309 = vadd.f32 0.0, %v308
        %v310 = vpop.f32.mrb[0].mxu0
        %v311 = vadd.f32 0.0, %v310
        %312 = vmatprep.mubr.f32.mxu0 0.0
        %313 = vmatmul.mubr.f32.gmra.mrb[0].mxu0 %v198
        %v314 = vpop.f32.mrb[0].mxu0
        %v315 = vadd.f32 0.0, %v314
        %v316 = vpop.f32.mrb[0].mxu0
        %v317 = vadd.f32 0.0, %v316
        %318 = vmatprep.mubr.f32.mxu0 0.0
        %319 = vmatmul.mubr.f32.gmra.mrb[0].mxu0 %v201
        %v320 = vpop.f32.mrb[0].mxu0
        %v321 = vadd.f32 0.0, %v320
        %v322 = vpop.f32.mrb[0].mxu0
        %v323 = vadd.f32 0.0, %v322
        %324 = vmatprep.mubr.f32.mxu0 0.0
        %325 = vmatmul.mubr.f32.gmra.mrb[0].mxu0 %v204
        %v326 = vpop.f32.mrb[0].mxu0
        %v327 = vadd.f32 0.0, %v326
        %v328 = vpop.f32.mrb[0].mxu0
        %v329 = vadd.f32 0.0, %v328
        %330 = vdwg.mxu0
        %331 = vmatprep.subr.mxu0 %v154
        %332 = vmatpush1.msra.mxu0 %v153
        %333 = vmatprep.subr.mxu0 0.0
        %334 = vmatpush1.msra.mxu0 0.0
        %335 = vmatprep.subr.mxu0 0.0
        %336 = vmatpush1.msra.mxu0 0.0
        %337 = vmatprep.subr.mxu0 0.0
        %338 = vmatpush1.msra.mxu0 0.0
        %339 = vmatprep.subr.mxu0 0.0
        %340 = vmatpush1.msra.mxu0 0.0
        %341 = vmatprep.subr.mxu0 0.0
        %342 = vmatpush1.msra.mxu0 0.0
        %343 = vmatprep.subr.mxu0 0.0
        %344 = vmatpush1.msra.mxu0 0.0
        %345 = vmatprep.subr.mxu0 0.0
        %346 = vmatpush1.msra.mxu0 0.0
        %347 = vmatprep.subr.mxu0 0.0
        %348 = vmatpush1.msra.mxu0 0.0
        %349 = vmatprep.subr.mxu0 0.0
        %350 = vmatpush1.msra.mxu0 0.0
        %351 = vmatprep.subr.mxu0 0.0
        %352 = vmatpush1.msra.mxu0 0.0
        %353 = vmatprep.subr.mxu0 0.0
        %354 = vmatpush1.msra.mxu0 0.0
        %355 = vmatprep.subr.mxu0 0.0
        %356 = vmatpush1.msra.mxu0 0.0
        %357 = vmatprep.subr.mxu0 0.0
        %358 = vmatpush1.msra.mxu0 0.0
        %359 = vmatprep.subr.mxu0 0.0
        %360 = vmatpush1.msra.mxu0 0.0
        %361 = vmatprep.subr.mxu0 0.0
        %362 = vmatpush1.msra.mxu0 0.0
        %363 = vmatprep.subr.mxu0 0.0
        %364 = vmatpush1.msra.mxu0 0.0
        %365 = vmatprep.subr.mxu0 0.0
        %366 = vmatpush1.msra.mxu0 0.0
        %367 = vmatprep.subr.mxu0 0.0
        %368 = vmatpush1.msra.mxu0 0.0
        %369 = vmatprep.subr.mxu0 0.0
        %370 = vmatpush1.msra.mxu0 0.0
        %371 = vmatprep.subr.mxu0 0.0
        %372 = vmatpush1.msra.mxu0 0.0
        %373 = vmatprep.subr.mxu0 0.0
        %374 = vmatpush1.msra.mxu0 0.0
        %375 = vmatprep.subr.mxu0 0.0
        %376 = vmatpush1.msra.mxu0 0.0
        %377 = vmatprep.subr.mxu0 0.0
        %378 = vmatpush1.msra.mxu0 0.0
        %379 = vmatprep.subr.mxu0 0.0
        %380 = vmatpush1.msra.mxu0 0.0
        %381 = vmatprep.subr.mxu0 0.0
        %382 = vmatpush1.msra.mxu0 0.0
        %383 = vmatprep.subr.mxu0 0.0
        %384 = vmatpush1.msra.mxu0 0.0
        %385 = vmatprep.subr.mxu0 0.0
        %386 = vmatpush1.msra.mxu0 0.0
        %387 = vmatprep.subr.mxu0 0.0
        %388 = vmatpush1.msra.mxu0 0.0
        %389 = vmatprep.subr.mxu0 0.0
        %390 = vmatpush1.msra.mxu0 0.0
        %391 = vmatprep.subr.mxu0 0.0
        %392 = vmatpush1.msra.mxu0 0.0
        %393 = vmatprep.subr.mxu0 0.0
        %394 = vmatpush1.msra.mxu0 0.0
        %395 = vmatprep.mubr.f32.mxu0 0.0
        %396 = vmatmul.mubr.f32.gmra.mrb[0].mxu0 %v177
        %v397 = vpop.f32.mrb[0].mxu0
        %v398 = vadd.f32 0.0, %v397
        %v399 = vpop.f32.mrb[0].mxu0
        %v400 = vadd.f32 0.0, %v399
        %401 = vmatprep.mubr.f32.mxu0 0.0
        %402 = vmatmul.mubr.f32.gmra.mrb[0].mxu0 %v180
        %v403 = vpop.f32.mrb[0].mxu0
        %v404 = vadd.f32 0.0, %v403
        %v405 = vpop.f32.mrb[0].mxu0
        %v406 = vadd.f32 0.0, %v405
        %407 = vmatprep.mubr.f32.mxu0 0.0
        %408 = vmatmul.mubr.f32.gmra.mrb[0].mxu0 %v183
        %v409 = vpop.f32.mrb[0].mxu0
        %v410 = vadd.f32 0.0, %v409
        %v411 = vpop.f32.mrb[0].mxu0
        %v412 = vadd.f32 0.0, %v411
        %413 = vmatprep.mubr.f32.mxu0 0.0
        %414 = vmatmul.mubr.f32.gmra.mrb[0].mxu0 %v186
        %v415 = vpop.f32.mrb[0].mxu0
        %v416 = vadd.f32 0.0, %v415
        %v417 = vpop.f32.mrb[0].mxu0
        %v418 = vadd.f32 0.0, %v417
        %419 = vmatprep.mubr.f32.mxu0 0.0
        %420 = vmatmul.mubr.f32.gmra.mrb[0].mxu0 %v189
        %v421 = vpop.f32.mrb[0].mxu0
        %v422 = vadd.f32 0.0, %v421
        %v423 = vpop.f32.mrb[0].mxu0
        %v424 = vadd.f32 0.0, %v423
        %425 = vmatprep.mubr.f32.mxu0 0.0
        %426 = vmatmul.mubr.f32.gmra.mrb[0].mxu0 %v192
        %v427 = vpop.f32.mrb[0].mxu0
        %v428 = vadd.f32 0.0, %v427
        %v429 = vpop.f32.mrb[0].mxu0
        %v430 = vadd.f32 0.0, %v429
        %431 = vmatprep.mubr.f32.mxu0 0.0
        %432 = vmatmul.mubr.f32.gmra.mrb[0].mxu0 %v195
        %v433 = vpop.f32.mrb[0].mxu0
        %v434 = vadd.f32 0.0, %v433
        %v435 = vpop.f32.mrb[0].mxu0
        %v436 = vadd.f32 0.0, %v435
        %437 = vmatprep.mubr.f32.mxu0 0.0
        %438 = vmatmul.mubr.f32.gmra.mrb[0].mxu0 %v198
        %v439 = vpop.f32.mrb[0].mxu0
        %v440 = vadd.f32 0.0, %v439
        %v441 = vpop.f32.mrb[0].mxu0
        %v442 = vadd.f32 0.0, %v441
        %443 = vmatprep.mubr.f32.mxu0 0.0
        %444 = vmatmul.mubr.f32.gmra.mrb[0].mxu0 %v201
        %v445 = vpop.f32.mrb[0].mxu0
        %v446 = vadd.f32 0.0, %v445
        %v447 = vpop.f32.mrb[0].mxu0
        %v448 = vadd.f32 0.0, %v447
        %449 = vmatprep.mubr.f32.mxu0 0.0
        %450 = vmatmul.mubr.f32.gmra.mrb[0].mxu0 %v204
        %v451 = vpop.f32.mrb[0].mxu0
        %v452 = vadd.f32 0.0, %v451
        %v453 = vpop.f32.mrb[0].mxu0
        %v454 = vadd.f32 0.0, %v453
        %455 = vdwg.mxu0
        %456 = vmatprep.subr.mxu0 %v156
        %457 = vmatpush1.msra.mxu0 %v155
        %458 = vmatprep.subr.mxu0 0.0
        %459 = vmatpush1.msra.mxu0 0.0
        %460 = vmatprep.subr.mxu0 0.0
        %461 = vmatpush1.msra.mxu0 0.0
        %462 = vmatprep.subr.mxu0 0.0
        %463 = vmatpush1.msra.mxu0 0.0
        %464 = vmatprep.subr.mxu0 0.0
        %465 = vmatpush1.msra.mxu0 0.0
        %466 = vmatprep.subr.mxu0 0.0
        %467 = vmatpush1.msra.mxu0 0.0
        %468 = vmatprep.subr.mxu0 0.0
        %469 = vmatpush1.msra.mxu0 0.0
        %470 = vmatprep.subr.mxu0 0.0
        %471 = vmatpush1.msra.mxu0 0.0
        %472 = vmatprep.subr.mxu0 0.0
        %473 = vmatpush1.msra.mxu0 0.0
        %474 = vmatprep.subr.mxu0 0.0
        %475 = vmatpush1.msra.mxu0 0.0
        %476 = vmatprep.subr.mxu0 0.0
        %477 = vmatpush1.msra.mxu0 0.0
        %478 = vmatprep.subr.mxu0 0.0
        %479 = vmatpush1.msra.mxu0 0.0
        %480 = vmatprep.subr.mxu0 0.0
        %481 = vmatpush1.msra.mxu0 0.0
        %482 = vmatprep.subr.mxu0 0.0
        %483 = vmatpush1.msra.mxu0 0.0
        %484 = vmatprep.subr.mxu0 0.0
        %485 = vmatpush1.msra.mxu0 0.0
        %486 = vmatprep.subr.mxu0 0.0
        %487 = vmatpush1.msra.mxu0 0.0
        %488 = vmatprep.subr.mxu0 0.0
        %489 = vmatpush1.msra.mxu0 0.0
        %490 = vmatprep.subr.mxu0 0.0
        %491 = vmatpush1.msra.mxu0 0.0
        %492 = vmatprep.subr.mxu0 0.0
        %493 = vmatpush1.msra.mxu0 0.0
        %494 = vmatprep.subr.mxu0 0.0
        %495 = vmatpush1.msra.mxu0 0.0
        %496 = vmatprep.subr.mxu0 0.0
        %497 = vmatpush1.msra.mxu0 0.0
        %498 = vmatprep.subr.mxu0 0.0
        %499 = vmatpush1.msra.mxu0 0.0
        %500 = vmatprep.subr.mxu0 0.0
        %501 = vmatpush1.msra.mxu0 0.0
        %502 = vmatprep.subr.mxu0 0.0
        %503 = vmatpush1.msra.mxu0 0.0
        %504 = vmatprep.subr.mxu0 0.0
        %505 = vmatpush1.msra.mxu0 0.0
        %506 = vmatprep.subr.mxu0 0.0
        %507 = vmatpush1.msra.mxu0 0.0
        %508 = vmatprep.subr.mxu0 0.0
        %509 = vmatpush1.msra.mxu0 0.0
        %510 = vmatprep.subr.mxu0 0.0
        %511 = vmatpush1.msra.mxu0 0.0
        %512 = vmatprep.subr.mxu0 0.0
        %513 = vmatpush1.msra.mxu0 0.0
        %514 = vmatprep.subr.mxu0 0.0
        %515 = vmatpush1.msra.mxu0 0.0
        %516 = vmatprep.subr.mxu0 0.0
        %517 = vmatpush1.msra.mxu0 0.0
        %518 = vmatprep.subr.mxu0 0.0
        %519 = vmatpush1.msra.mxu0 0.0
        %520 = vmatprep.mubr.f32.mxu0 0.0
        %521 = vmatmul.mubr.f32.gmra.mrb[0].mxu0 %v177
        %v522 = vpop.f32.mrb[0].mxu0
        %v523 = vadd.f32 0.0, %v522
        %v524 = vpop.f32.mrb[0].mxu0
        %v525 = vadd.f32 0.0, %v524
        %526 = vmatprep.mubr.f32.mxu0 0.0
        %527 = vmatmul.mubr.f32.gmra.mrb[0].mxu0 %v180
        %v528 = vpop.f32.mrb[0].mxu0
        %v529 = vadd.f32 0.0, %v528
        %v530 = vpop.f32.mrb[0].mxu0
        %v531 = vadd.f32 0.0, %v530
        %532 = vmatprep.mubr.f32.mxu0 0.0
        %533 = vmatmul.mubr.f32.gmra.mrb[0].mxu0 %v183
        %v534 = vpop.f32.mrb[0].mxu0
        %v535 = vadd.f32 0.0, %v534
        %v536 = vpop.f32.mrb[0].mxu0
        %v537 = vadd.f32 0.0, %v536
        %538 = vmatprep.mubr.f32.mxu0 0.0
        %539 = vmatmul.mubr.f32.gmra.mrb[0].mxu0 %v186
        %v540 = vpop.f32.mrb[0].mxu0
        %v541 = vadd.f32 0.0, %v540
        %v542 = vpop.f32.mrb[0].mxu0
        %v543 = vadd.f32 0.0, %v542
        %544 = vmatprep.mubr.f32.mxu0 0.0
        %545 = vmatmul.mubr.f32.gmra.mrb[0].mxu0 %v189
        %v546 = vpop.f32.mrb[0].mxu0
        %v547 = vadd.f32 0.0, %v546
        %v548 = vpop.f32.mrb[0].mxu0
        %v549 = vadd.f32 0.0, %v548
        %550 = vmatprep.mubr.f32.mxu0 0.0
        %551 = vmatmul.mubr.f32.gmra.mrb[0].mxu0 %v192
        %v552 = vpop.f32.mrb[0].mxu0
        %v553 = vadd.f32 0.0, %v552
        %v554 = vpop.f32.mrb[0].mxu0
        %v555 = vadd.f32 0.0, %v554
        %556 = vmatprep.mubr.f32.mxu0 0.0
        %557 = vmatmul.mubr.f32.gmra.mrb[0].mxu0 %v195
        %v558 = vpop.f32.mrb[0].mxu0
        %v559 = vadd.f32 0.0, %v558
        %v560 = vpop.f32.mrb[0].mxu0
        %v561 = vadd.f32 0.0, %v560
        %562 = vmatprep.mubr.f32.mxu0 0.0
        %563 = vmatmul.mubr.f32.gmra.mrb[0].mxu0 %v198
        %v564 = vpop.f32.mrb[0].mxu0
        %v565 = vadd.f32 0.0, %v564
        %v566 = vpop.f32.mrb[0].mxu0
        %v567 = vadd.f32 0.0, %v566
        %568 = vmatprep.mubr.f32.mxu0 0.0
        %569 = vmatmul.mubr.f32.gmra.mrb[0].mxu0 %v201
        %v570 = vpop.f32.mrb[0].mxu0
        %v571 = vadd.f32 0.0, %v570
        %v572 = vpop.f32.mrb[0].mxu0
        %v573 = vadd.f32 0.0, %v572
        %574 = vmatprep.mubr.f32.mxu0 0.0
        %575 = vmatmul.mubr.f32.gmra.mrb[0].mxu0 %v204
        %v576 = vpop.f32.mrb[0].mxu0
        %v577 = vadd.f32 0.0, %v576
        %v578 = vpop.f32.mrb[0].mxu0
        %v579 = vadd.f32 0.0, %v578
        %580 = vdwg.mxu0
        %581 = vmatprep.subr.mxu0 %v158
        %582 = vmatpush1.msra.mxu0 %v157
        %583 = vmatprep.subr.mxu0 0.0
        %584 = vmatpush1.msra.mxu0 0.0
        %585 = vmatprep.subr.mxu0 0.0
        %586 = vmatpush1.msra.mxu0 0.0
        %587 = vmatprep.subr.mxu0 0.0
        %588 = vmatpush1.msra.mxu0 0.0
        %589 = vmatprep.subr.mxu0 0.0
        %590 = vmatpush1.msra.mxu0 0.0
        %591 = vmatprep.subr.mxu0 0.0
        %592 = vmatpush1.msra.mxu0 0.0
        %593 = vmatprep.subr.mxu0 0.0
        %594 = vmatpush1.msra.mxu0 0.0
        %595 = vmatprep.subr.mxu0 0.0
        %596 = vmatpush1.msra.mxu0 0.0
        %597 = vmatprep.subr.mxu0 0.0
        %598 = vmatpush1.msra.mxu0 0.0
        %599 = vmatprep.subr.mxu0 0.0
        %600 = vmatpush1.msra.mxu0 0.0
        %601 = vmatprep.subr.mxu0 0.0
        %602 = vmatpush1.msra.mxu0 0.0
        %603 = vmatprep.subr.mxu0 0.0
        %604 = vmatpush1.msra.mxu0 0.0
        %605 = vmatprep.subr.mxu0 0.0
        %606 = vmatpush1.msra.mxu0 0.0
        %607 = vmatprep.subr.mxu0 0.0
        %608 = vmatpush1.msra.mxu0 0.0
        %609 = vmatprep.subr.mxu0 0.0
        %610 = vmatpush1.msra.mxu0 0.0
        %611 = vmatprep.subr.mxu0 0.0
        %612 = vmatpush1.msra.mxu0 0.0
        %613 = vmatprep.subr.mxu0 0.0
        %614 = vmatpush1.msra.mxu0 0.0
        %615 = vmatprep.subr.mxu0 0.0
        %616 = vmatpush1.msra.mxu0 0.0
        %617 = vmatprep.subr.mxu0 0.0
        %618 = vmatpush1.msra.mxu0 0.0
        %619 = vmatprep.subr.mxu0 0.0
        %620 = vmatpush1.msra.mxu0 0.0
        %621 = vmatprep.subr.mxu0 0.0
        %622 = vmatpush1.msra.mxu0 0.0
        %623 = vmatprep.subr.mxu0 0.0
        %624 = vmatpush1.msra.mxu0 0.0
        %625 = vmatprep.subr.mxu0 0.0
        %626 = vmatpush1.msra.mxu0 0.0
        %627 = vmatprep.subr.mxu0 0.0
        %628 = vmatpush1.msra.mxu0 0.0
        %629 = vmatprep.subr.mxu0 0.0
        %630 = vmatpush1.msra.mxu0 0.0
        %631 = vmatprep.subr.mxu0 0.0
        %632 = vmatpush1.msra.mxu0 0.0
        %633 = vmatprep.subr.mxu0 0.0
        %634 = vmatpush1.msra.mxu0 0.0
        %635 = vmatprep.subr.mxu0 0.0
        %636 = vmatpush1.msra.mxu0 0.0
        %637 = vmatprep.subr.mxu0 0.0
        %638 = vmatpush1.msra.mxu0 0.0
        %639 = vmatprep.subr.mxu0 0.0
        %640 = vmatpush1.msra.mxu0 0.0
        %641 = vmatprep.subr.mxu0 0.0
        %642 = vmatpush1.msra.mxu0 0.0
        %643 = vmatprep.subr.mxu0 0.0
        %644 = vmatpush1.msra.mxu0 0.0
        %645 = vmatprep.mubr.f32.mxu0 0.0
        %646 = vmatmul.mubr.f32.gmra.mrb[0].mxu0 %v177
        %v647 = vpop.f32.mrb[0].mxu0
        %v648 = vadd.f32 0.0, %v647
        %v649 = vpop.f32.mrb[0].mxu0
        %v650 = vadd.f32 0.0, %v649
        %651 = vmatprep.mubr.f32.mxu0 0.0
        %652 = vmatmul.mubr.f32.gmra.mrb[0].mxu0 %v180
        %v653 = vpop.f32.mrb[0].mxu0
        %v654 = vadd.f32 0.0, %v653
        %v655 = vpop.f32.mrb[0].mxu0
        %v656 = vadd.f32 0.0, %v655
        %657 = vmatprep.mubr.f32.mxu0 0.0
        %658 = vmatmul.mubr.f32.gmra.mrb[0].mxu0 %v183
        %v659 = vpop.f32.mrb[0].mxu0
        %v660 = vadd.f32 0.0, %v659
        %v661 = vpop.f32.mrb[0].mxu0
        %v662 = vadd.f32 0.0, %v661
        %663 = vmatprep.mubr.f32.mxu0 0.0
        %664 = vmatmul.mubr.f32.gmra.mrb[0].mxu0 %v186
        %v665 = vpop.f32.mrb[0].mxu0
        %v666 = vadd.f32 0.0, %v665
        %v667 = vpop.f32.mrb[0].mxu0
        %v668 = vadd.f32 0.0, %v667
        %669 = vmatprep.mubr.f32.mxu0 0.0
        %670 = vmatmul.mubr.f32.gmra.mrb[0].mxu0 %v189
        %v671 = vpop.f32.mrb[0].mxu0
        %v672 = vadd.f32 0.0, %v671
        %v673 = vpop.f32.mrb[0].mxu0
        %v674 = vadd.f32 0.0, %v673
        %675 = vmatprep.mubr.f32.mxu0 0.0
        %676 = vmatmul.mubr.f32.gmra.mrb[0].mxu0 %v192
        %v677 = vpop.f32.mrb[0].mxu0
        %v678 = vadd.f32 0.0, %v677
        %v679 = vpop.f32.mrb[0].mxu0
        %v680 = vadd.f32 0.0, %v679
        %681 = vmatprep.mubr.f32.mxu0 0.0
        %682 = vmatmul.mubr.f32.gmra.mrb[0].mxu0 %v195
        %v683 = vpop.f32.mrb[0].mxu0
        %v684 = vadd.f32 0.0, %v683
        %v685 = vpop.f32.mrb[0].mxu0
        %v686 = vadd.f32 0.0, %v685
        %687 = vmatprep.mubr.f32.mxu0 0.0
        %688 = vmatmul.mubr.f32.gmra.mrb[0].mxu0 %v198
        %v689 = vpop.f32.mrb[0].mxu0
        %v690 = vadd.f32 0.0, %v689
        %v691 = vpop.f32.mrb[0].mxu0
        %v692 = vadd.f32 0.0, %v691
        %693 = vmatprep.mubr.f32.mxu0 0.0
        %694 = vmatmul.mubr.f32.gmra.mrb[0].mxu0 %v201
        %v695 = vpop.f32.mrb[0].mxu0
        %v696 = vadd.f32 0.0, %v695
        %v697 = vpop.f32.mrb[0].mxu0
        %v698 = vadd.f32 0.0, %v697
        %699 = vmatprep.mubr.f32.mxu0 0.0
        %700 = vmatmul.mubr.f32.gmra.mrb[0].mxu0 %v204
        %v701 = vpop.f32.mrb[0].mxu0
        %v702 = vadd.f32 0.0, %v701
        %v703 = vpop.f32.mrb[0].mxu0
        %v704 = vadd.f32 0.0, %v703
        %705 = vdwg.mxu0
        %706 = vmatprep.subr.mxu0 %v160
        %707 = vmatpush1.msra.mxu0 %v159
        %708 = vmatprep.subr.mxu0 0.0
        %709 = vmatpush1.msra.mxu0 0.0
        %710 = vmatprep.subr.mxu0 0.0
        %711 = vmatpush1.msra.mxu0 0.0
        %712 = vmatprep.subr.mxu0 0.0
        %713 = vmatpush1.msra.mxu0 0.0
        %714 = vmatprep.subr.mxu0 0.0
        %715 = vmatpush1.msra.mxu0 0.0
        %716 = vmatprep.subr.mxu0 0.0
        %717 = vmatpush1.msra.mxu0 0.0
        %718 = vmatprep.subr.mxu0 0.0
        %719 = vmatpush1.msra.mxu0 0.0
        %720 = vmatprep.subr.mxu0 0.0
        %721 = vmatpush1.msra.mxu0 0.0
        %722 = vmatprep.subr.mxu0 0.0
        %723 = vmatpush1.msra.mxu0 0.0
        %724 = vmatprep.subr.mxu0 0.0
        %725 = vmatpush1.msra.mxu0 0.0
        %726 = vmatprep.subr.mxu0 0.0
        %727 = vmatpush1.msra.mxu0 0.0
        %728 = vmatprep.subr.mxu0 0.0
        %729 = vmatpush1.msra.mxu0 0.0
        %730 = vmatprep.subr.mxu0 0.0
        %731 = vmatpush1.msra.mxu0 0.0
        %732 = vmatprep.subr.mxu0 0.0
        %733 = vmatpush1.msra.mxu0 0.0
        %734 = vmatprep.subr.mxu0 0.0
        %735 = vmatpush1.msra.mxu0 0.0
        %736 = vmatprep.subr.mxu0 0.0
        %737 = vmatpush1.msra.mxu0 0.0
        %738 = vmatprep.subr.mxu0 0.0
        %739 = vmatpush1.msra.mxu0 0.0
        %740 = vmatprep.subr.mxu0 0.0
        %741 = vmatpush1.msra.mxu0 0.0
        %742 = vmatprep.subr.mxu0 0.0
        %743 = vmatpush1.msra.mxu0 0.0
        %744 = vmatprep.subr.mxu0 0.0
        %745 = vmatpush1.msra.mxu0 0.0
        %746 = vmatprep.subr.mxu0 0.0
        %747 = vmatpush1.msra.mxu0 0.0
        %748 = vmatprep.subr.mxu0 0.0
        %749 = vmatpush1.msra.mxu0 0.0
        %750 = vmatprep.subr.mxu0 0.0
        %751 = vmatpush1.msra.mxu0 0.0
        %752 = vmatprep.subr.mxu0 0.0
        %753 = vmatpush1.msra.mxu0 0.0
        %754 = vmatprep.subr.mxu0 0.0
        %755 = vmatpush1.msra.mxu0 0.0
        %756 = vmatprep.subr.mxu0 0.0
        %757 = vmatpush1.msra.mxu0 0.0
        %758 = vmatprep.subr.mxu0 0.0
        %759 = vmatpush1.msra.mxu0 0.0
        %760 = vmatprep.subr.mxu0 0.0
        %761 = vmatpush1.msra.mxu0 0.0
        %762 = vmatprep.subr.mxu0 0.0
        %763 = vmatpush1.msra.mxu0 0.0
        %764 = vmatprep.subr.mxu0 0.0
        %765 = vmatpush1.msra.mxu0 0.0
        %766 = vmatprep.subr.mxu0 0.0
        %767 = vmatpush1.msra.mxu0 0.0
        %768 = vmatprep.subr.mxu0 0.0
        %769 = vmatpush1.msra.mxu0 0.0
        %770 = vmatprep.mubr.f32.mxu0 0.0
        %771 = vmatmul.mubr.f32.gmra.mrb[0].mxu0 %v177
        %v772 = vpop.f32.mrb[0].mxu0
        %v773 = vadd.f32 0.0, %v772
        %v774 = vpop.f32.mrb[0].mxu0
        %v775 = vadd.f32 0.0, %v774
        %776 = vmatprep.mubr.f32.mxu0 0.0
        %777 = vmatmul.mubr.f32.gmra.mrb[0].mxu0 %v180
        %v778 = vpop.f32.mrb[0].mxu0
        %v779 = vadd.f32 0.0, %v778
        %v780 = vpop.f32.mrb[0].mxu0
        %v781 = vadd.f32 0.0, %v780
        %782 = vmatprep.mubr.f32.mxu0 0.0
        %783 = vmatmul.mubr.f32.gmra.mrb[0].mxu0 %v183
        %v784 = vpop.f32.mrb[0].mxu0
        %v785 = vadd.f32 0.0, %v784
        %v786 = vpop.f32.mrb[0].mxu0
        %v787 = vadd.f32 0.0, %v786
        %788 = vmatprep.mubr.f32.mxu0 0.0
        %789 = vmatmul.mubr.f32.gmra.mrb[0].mxu0 %v186
        %v790 = vpop.f32.mrb[0].mxu0
        %v791 = vadd.f32 0.0, %v790
        %v792 = vpop.f32.mrb[0].mxu0
        %v793 = vadd.f32 0.0, %v792
        %794 = vmatprep.mubr.f32.mxu0 0.0
        %795 = vmatmul.mubr.f32.gmra.mrb[0].mxu0 %v189
        %v796 = vpop.f32.mrb[0].mxu0
        %v797 = vadd.f32 0.0, %v796
        %v798 = vpop.f32.mrb[0].mxu0
        %v799 = vadd.f32 0.0, %v798
        %800 = vmatprep.mubr.f32.mxu0 0.0
        %801 = vmatmul.mubr.f32.gmra.mrb[0].mxu0 %v192
        %v802 = vpop.f32.mrb[0].mxu0
        %v803 = vadd.f32 0.0, %v802
        %v804 = vpop.f32.mrb[0].mxu0
        %v805 = vadd.f32 0.0, %v804
        %806 = vmatprep.mubr.f32.mxu0 0.0
        %807 = vmatmul.mubr.f32.gmra.mrb[0].mxu0 %v195
        %v808 = vpop.f32.mrb[0].mxu0
        %v809 = vadd.f32 0.0, %v808
        %v810 = vpop.f32.mrb[0].mxu0
        %v811 = vadd.f32 0.0, %v810
        %812 = vmatprep.mubr.f32.mxu0 0.0
        %813 = vmatmul.mubr.f32.gmra.mrb[0].mxu0 %v198
        %v814 = vpop.f32.mrb[0].mxu0
        %v815 = vadd.f32 0.0, %v814
        %v816 = vpop.f32.mrb[0].mxu0
        %v817 = vadd.f32 0.0, %v816
        %818 = vmatprep.mubr.f32.mxu0 0.0
        %819 = vmatmul.mubr.f32.gmra.mrb[0].mxu0 %v201
        %v820 = vpop.f32.mrb[0].mxu0
        %v821 = vadd.f32 0.0, %v820
        %v822 = vpop.f32.mrb[0].mxu0
        %v823 = vadd.f32 0.0, %v822
        %824 = vmatprep.mubr.f32.mxu0 0.0
        %825 = vmatmul.mubr.f32.gmra.mrb[0].mxu0 %v204
        %v826 = vpop.f32.mrb[0].mxu0
        %v827 = vadd.f32 0.0, %v826
        %v828 = vpop.f32.mrb[0].mxu0
        %v829 = vadd.f32 0.0, %v828
        %830 = vdwg.mxu0
        %831 = vmatprep.subr.mxu0 %v162
        %832 = vmatpush1.msra.mxu0 %v161
        %833 = vmatprep.subr.mxu0 0.0
        %834 = vmatpush1.msra.mxu0 0.0
        %835 = vmatprep.subr.mxu0 0.0
        %836 = vmatpush1.msra.mxu0 0.0
        %837 = vmatprep.subr.mxu0 0.0
        %838 = vmatpush1.msra.mxu0 0.0
        %839 = vmatprep.subr.mxu0 0.0
        %840 = vmatpush1.msra.mxu0 0.0
        %841 = vmatprep.subr.mxu0 0.0
        %842 = vmatpush1.msra.mxu0 0.0
        %843 = vmatprep.subr.mxu0 0.0
        %844 = vmatpush1.msra.mxu0 0.0
        %845 = vmatprep.subr.mxu0 0.0
        %846 = vmatpush1.msra.mxu0 0.0
        %847 = vmatprep.subr.mxu0 0.0
        %848 = vmatpush1.msra.mxu0 0.0
        %849 = vmatprep.subr.mxu0 0.0
        %850 = vmatpush1.msra.mxu0 0.0
        %851 = vmatprep.subr.mxu0 0.0
        %852 = vmatpush1.msra.mxu0 0.0
        %853 = vmatprep.subr.mxu0 0.0
        %854 = vmatpush1.msra.mxu0 0.0
        %855 = vmatprep.subr.mxu0 0.0
        %856 = vmatpush1.msra.mxu0 0.0
        %857 = vmatprep.subr.mxu0 0.0
        %858 = vmatpush1.msra.mxu0 0.0
        %859 = vmatprep.subr.mxu0 0.0
        %860 = vmatpush1.msra.mxu0 0.0
        %861 = vmatprep.subr.mxu0 0.0
        %862 = vmatpush1.msra.mxu0 0.0
        %863 = vmatprep.subr.mxu0 0.0
        %864 = vmatpush1.msra.mxu0 0.0
        %865 = vmatprep.subr.mxu0 0.0
        %866 = vmatpush1.msra.mxu0 0.0
        %867 = vmatprep.subr.mxu0 0.0
        %868 = vmatpush1.msra.mxu0 0.0
        %869 = vmatprep.subr.mxu0 0.0
        %870 = vmatpush1.msra.mxu0 0.0
        %871 = vmatprep.subr.mxu0 0.0
        %872 = vmatpush1.msra.mxu0 0.0
        %873 = vmatprep.subr.mxu0 0.0
        %874 = vmatpush1.msra.mxu0 0.0
        %875 = vmatprep.subr.mxu0 0.0
        %876 = vmatpush1.msra.mxu0 0.0
        %877 = vmatprep.subr.mxu0 0.0
        %878 = vmatpush1.msra.mxu0 0.0
        %879 = vmatprep.subr.mxu0 0.0
        %880 = vmatpush1.msra.mxu0 0.0
        %881 = vmatprep.subr.mxu0 0.0
        %882 = vmatpush1.msra.mxu0 0.0
        %883 = vmatprep.subr.mxu0 0.0
        %884 = vmatpush1.msra.mxu0 0.0
        %885 = vmatprep.subr.mxu0 0.0
        %886 = vmatpush1.msra.mxu0 0.0
        %887 = vmatprep.subr.mxu0 0.0
        %888 = vmatpush1.msra.mxu0 0.0
        %889 = vmatprep.subr.mxu0 0.0
        %890 = vmatpush1.msra.mxu0 0.0
        %891 = vmatprep.subr.mxu0 0.0
        %892 = vmatpush1.msra.mxu0 0.0
        %893 = vmatprep.subr.mxu0 0.0
        %894 = vmatpush1.msra.mxu0 0.0
        %895 = vmatprep.mubr.f32.mxu0 0.0
        %896 = vmatmul.mubr.f32.gmra.mrb[0].mxu0 %v177
        %v897 = vpop.f32.mrb[0].mxu0
        %v898 = vadd.f32 0.0, %v897
        %v899 = vpop.f32.mrb[0].mxu0
        %v900 = vadd.f32 0.0, %v899
        %901 = vmatprep.mubr.f32.mxu0 0.0
        %902 = vmatmul.mubr.f32.gmra.mrb[0].mxu0 %v180
        %v903 = vpop.f32.mrb[0].mxu0
        %v904 = vadd.f32 0.0, %v903
        %v905 = vpop.f32.mrb[0].mxu0
        %v906 = vadd.f32 0.0, %v905
        %907 = vmatprep.mubr.f32.mxu0 0.0
        %908 = vmatmul.mubr.f32.gmra.mrb[0].mxu0 %v183
        %v909 = vpop.f32.mrb[0].mxu0
        %v910 = vadd.f32 0.0, %v909
        %v911 = vpop.f32.mrb[0].mxu0
        %v912 = vadd.f32 0.0, %v911
        %913 = vmatprep.mubr.f32.mxu0 0.0
        %914 = vmatmul.mubr.f32.gmra.mrb[0].mxu0 %v186
        %v915 = vpop.f32.mrb[0].mxu0
        %v916 = vadd.f32 0.0, %v915
        %v917 = vpop.f32.mrb[0].mxu0
        %v918 = vadd.f32 0.0, %v917
        %919 = vmatprep.mubr.f32.mxu0 0.0
        %920 = vmatmul.mubr.f32.gmra.mrb[0].mxu0 %v189
        %v921 = vpop.f32.mrb[0].mxu0
        %v922 = vadd.f32 0.0, %v921
        %v923 = vpop.f32.mrb[0].mxu0
        %v924 = vadd.f32 0.0, %v923
        %925 = vmatprep.mubr.f32.mxu0 0.0
        %926 = vmatmul.mubr.f32.gmra.mrb[0].mxu0 %v192
        %v927 = vpop.f32.mrb[0].mxu0
        %v928 = vadd.f32 0.0, %v927
        %v929 = vpop.f32.mrb[0].mxu0
        %v930 = vadd.f32 0.0, %v929
        %931 = vmatprep.mubr.f32.mxu0 0.0
        %932 = vmatmul.mubr.f32.gmra.mrb[0].mxu0 %v195
        %v933 = vpop.f32.mrb[0].mxu0
        %v934 = vadd.f32 0.0, %v933
        %v935 = vpop.f32.mrb[0].mxu0
        %v936 = vadd.f32 0.0, %v935
        %937 = vmatprep.mubr.f32.mxu0 0.0
        %938 = vmatmul.mubr.f32.gmra.mrb[0].mxu0 %v198
        %v939 = vpop.f32.mrb[0].mxu0
        %v940 = vadd.f32 0.0, %v939
        %v941 = vpop.f32.mrb[0].mxu0
        %v942 = vadd.f32 0.0, %v941
        %943 = vmatprep.mubr.f32.mxu0 0.0
        %944 = vmatmul.mubr.f32.gmra.mrb[0].mxu0 %v201
        %v945 = vpop.f32.mrb[0].mxu0
        %v946 = vadd.f32 0.0, %v945
        %v947 = vpop.f32.mrb[0].mxu0
        %v948 = vadd.f32 0.0, %v947
        %949 = vmatprep.mubr.f32.mxu0 0.0
        %950 = vmatmul.mubr.f32.gmra.mrb[0].mxu0 %v204
        %v951 = vpop.f32.mrb[0].mxu0
        %v952 = vadd.f32 0.0, %v951
        %v953 = vpop.f32.mrb[0].mxu0
        %v954 = vadd.f32 0.0, %v953
        %955 = vdwg.mxu0
        %956 = vmatprep.subr.mxu0 %v164
        %957 = vmatpush1.msra.mxu0 %v163
        %958 = vmatprep.subr.mxu0 0.0
        %959 = vmatpush1.msra.mxu0 0.0
        %960 = vmatprep.subr.mxu0 0.0
        %961 = vmatpush1.msra.mxu0 0.0
        %962 = vmatprep.subr.mxu0 0.0
        %963 = vmatpush1.msra.mxu0 0.0
        %964 = vmatprep.subr.mxu0 0.0
        %965 = vmatpush1.msra.mxu0 0.0
        %966 = vmatprep.subr.mxu0 0.0
        %967 = vmatpush1.msra.mxu0 0.0
        %968 = vmatprep.subr.mxu0 0.0
        %969 = vmatpush1.msra.mxu0 0.0
        %970 = vmatprep.subr.mxu0 0.0
        %971 = vmatpush1.msra.mxu0 0.0
        %972 = vmatprep.subr.mxu0 0.0
        %973 = vmatpush1.msra.mxu0 0.0
        %974 = vmatprep.subr.mxu0 0.0
        %975 = vmatpush1.msra.mxu0 0.0
        %976 = vmatprep.subr.mxu0 0.0
        %977 = vmatpush1.msra.mxu0 0.0
        %978 = vmatprep.subr.mxu0 0.0
        %979 = vmatpush1.msra.mxu0 0.0
        %980 = vmatprep.subr.mxu0 0.0
        %981 = vmatpush1.msra.mxu0 0.0
        %982 = vmatprep.subr.mxu0 0.0
        %983 = vmatpush1.msra.mxu0 0.0
        %984 = vmatprep.subr.mxu0 0.0
        %985 = vmatpush1.msra.mxu0 0.0
        %986 = vmatprep.subr.mxu0 0.0
        %987 = vmatpush1.msra.mxu0 0.0
        %988 = vmatprep.subr.mxu0 0.0
        %989 = vmatpush1.msra.mxu0 0.0
        %990 = vmatprep.subr.mxu0 0.0
        %991 = vmatpush1.msra.mxu0 0.0
        %992 = vmatprep.subr.mxu0 0.0
        %993 = vmatpush1.msra.mxu0 0.0
        %994 = vmatprep.subr.mxu0 0.0
        %995 = vmatpush1.msra.mxu0 0.0
        %996 = vmatprep.subr.mxu0 0.0
        %997 = vmatpush1.msra.mxu0 0.0
        %998 = vmatprep.subr.mxu0 0.0
        %999 = vmatpush1.msra.mxu0 0.0
        %1000 = vmatprep.subr.mxu0 0.0
        %1001 = vmatpush1.msra.mxu0 0.0
        %1002 = vmatprep.subr.mxu0 0.0
        %1003 = vmatpush1.msra.mxu0 0.0
        %1004 = vmatprep.subr.mxu0 0.0
        %1005 = vmatpush1.msra.mxu0 0.0
        %1006 = vmatprep.subr.mxu0 0.0
        %1007 = vmatpush1.msra.mxu0 0.0
        %1008 = vmatprep.subr.mxu0 0.0
        %1009 = vmatpush1.msra.mxu0 0.0
        %1010 = vmatprep.subr.mxu0 0.0
        %1011 = vmatpush1.msra.mxu0 0.0
        %1012 = vmatprep.subr.mxu0 0.0
        %1013 = vmatpush1.msra.mxu0 0.0
        %1014 = vmatprep.subr.mxu0 0.0
        %1015 = vmatpush1.msra.mxu0 0.0
        %1016 = vmatprep.subr.mxu0 0.0
        %1017 = vmatpush1.msra.mxu0 0.0
        %1018 = vmatprep.subr.mxu0 0.0
        %1019 = vmatpush1.msra.mxu0 0.0
        %1020 = vmatprep.mubr.f32.mxu0 0.0
        %1021 = vmatmul.mubr.f32.gmra.mrb[0].mxu0 %v177
        %v1022 = vpop.f32.mrb[0].mxu0
        %v1023 = vadd.f32 0.0, %v1022
        %v1024 = vpop.f32.mrb[0].mxu0
        %v1025 = vadd.f32 0.0, %v1024
        %1026 = vmatprep.mubr.f32.mxu0 0.0
        %1027 = vmatmul.mubr.f32.gmra.mrb[0].mxu0 %v180
        %v1028 = vpop.f32.mrb[0].mxu0
        %v1029 = vadd.f32 0.0, %v1028
        %v1030 = vpop.f32.mrb[0].mxu0
        %v1031 = vadd.f32 0.0, %v1030
        %1032 = vmatprep.mubr.f32.mxu0 0.0
        %1033 = vmatmul.mubr.f32.gmra.mrb[0].mxu0 %v183
        %v1034 = vpop.f32.mrb[0].mxu0
        %v1035 = vadd.f32 0.0, %v1034
        %v1036 = vpop.f32.mrb[0].mxu0
        %v1037 = vadd.f32 0.0, %v1036
        %1038 = vmatprep.mubr.f32.mxu0 0.0
        %1039 = vmatmul.mubr.f32.gmra.mrb[0].mxu0 %v186
        %v1040 = vpop.f32.mrb[0].mxu0
        %v1041 = vadd.f32 0.0, %v1040
        %v1042 = vpop.f32.mrb[0].mxu0
        %v1043 = vadd.f32 0.0, %v1042
        %1044 = vmatprep.mubr.f32.mxu0 0.0
        %1045 = vmatmul.mubr.f32.gmra.mrb[0].mxu0 %v189
        %v1046 = vpop.f32.mrb[0].mxu0
        %v1047 = vadd.f32 0.0, %v1046
        %v1048 = vpop.f32.mrb[0].mxu0
        %v1049 = vadd.f32 0.0, %v1048
        %1050 = vmatprep.mubr.f32.mxu0 0.0
        %1051 = vmatmul.mubr.f32.gmra.mrb[0].mxu0 %v192
        %v1052 = vpop.f32.mrb[0].mxu0
        %v1053 = vadd.f32 0.0, %v1052
        %v1054 = vpop.f32.mrb[0].mxu0
        %v1055 = vadd.f32 0.0, %v1054
        %1056 = vmatprep.mubr.f32.mxu0 0.0
        %1057 = vmatmul.mubr.f32.gmra.mrb[0].mxu0 %v195
        %v1058 = vpop.f32.mrb[0].mxu0
        %v1059 = vadd.f32 0.0, %v1058
        %v1060 = vpop.f32.mrb[0].mxu0
        %v1061 = vadd.f32 0.0, %v1060
        %1062 = vmatprep.mubr.f32.mxu0 0.0
        %1063 = vmatmul.mubr.f32.gmra.mrb[0].mxu0 %v198
        %v1064 = vpop.f32.mrb[0].mxu0
        %v1065 = vadd.f32 0.0, %v1064
        %v1066 = vpop.f32.mrb[0].mxu0
        %v1067 = vadd.f32 0.0, %v1066
        %1068 = vmatprep.mubr.f32.mxu0 0.0
        %1069 = vmatmul.mubr.f32.gmra.mrb[0].mxu0 %v201
        %v1070 = vpop.f32.mrb[0].mxu0
        %v1071 = vadd.f32 0.0, %v1070
        %v1072 = vpop.f32.mrb[0].mxu0
        %v1073 = vadd.f32 0.0, %v1072
        %1074 = vmatprep.mubr.f32.mxu0 0.0
        %1075 = vmatmul.mubr.f32.gmra.mrb[0].mxu0 %v204
        %v1076 = vpop.f32.mrb[0].mxu0
        %v1077 = vadd.f32 0.0, %v1076
        %v1078 = vpop.f32.mrb[0].mxu0
        %v1079 = vadd.f32 0.0, %v1078
        %1080 = vdwg.mxu0
        %1081 = vmatprep.subr.mxu0 %v166
        %1082 = vmatpush1.msra.mxu0 %v165
        %1083 = vmatprep.subr.mxu0 0.0
        %1084 = vmatpush1.msra.mxu0 0.0
        %1085 = vmatprep.subr.mxu0 0.0
        %1086 = vmatpush1.msra.mxu0 0.0
        %1087 = vmatprep.subr.mxu0 0.0
        %1088 = vmatpush1.msra.mxu0 0.0
        %1089 = vmatprep.subr.mxu0 0.0
        %1090 = vmatpush1.msra.mxu0 0.0
        %1091 = vmatprep.subr.mxu0 0.0
        %1092 = vmatpush1.msra.mxu0 0.0
        %1093 = vmatprep.subr.mxu0 0.0
        %1094 = vmatpush1.msra.mxu0 0.0
        %1095 = vmatprep.subr.mxu0 0.0
        %1096 = vmatpush1.msra.mxu0 0.0
        %1097 = vmatprep.subr.mxu0 0.0
        %1098 = vmatpush1.msra.mxu0 0.0
        %1099 = vmatprep.subr.mxu0 0.0
        %1100 = vmatpush1.msra.mxu0 0.0
        %1101 = vmatprep.subr.mxu0 0.0
        %1102 = vmatpush1.msra.mxu0 0.0
        %1103 = vmatprep.subr.mxu0 0.0
        %1104 = vmatpush1.msra.mxu0 0.0
        %1105 = vmatprep.subr.mxu0 0.0
        %1106 = vmatpush1.msra.mxu0 0.0
        %1107 = vmatprep.subr.mxu0 0.0
        %1108 = vmatpush1.msra.mxu0 0.0
        %1109 = vmatprep.subr.mxu0 0.0
        %1110 = vmatpush1.msra.mxu0 0.0
        %1111 = vmatprep.subr.mxu0 0.0
        %1112 = vmatpush1.msra.mxu0 0.0
        %1113 = vmatprep.subr.mxu0 0.0
        %1114 = vmatpush1.msra.mxu0 0.0
        %1115 = vmatprep.subr.mxu0 0.0
        %1116 = vmatpush1.msra.mxu0 0.0
        %1117 = vmatprep.subr.mxu0 0.0
        %1118 = vmatpush1.msra.mxu0 0.0
        %1119 = vmatprep.subr.mxu0 0.0
        %1120 = vmatpush1.msra.mxu0 0.0
        %1121 = vmatprep.subr.mxu0 0.0
        %1122 = vmatpush1.msra.mxu0 0.0
        %1123 = vmatprep.subr.mxu0 0.0
        %1124 = vmatpush1.msra.mxu0 0.0
        %1125 = vmatprep.subr.mxu0 0.0
        %1126 = vmatpush1.msra.mxu0 0.0
        %1127 = vmatprep.subr.mxu0 0.0
        %1128 = vmatpush1.msra.mxu0 0.0
        %1129 = vmatprep.subr.mxu0 0.0
        %1130 = vmatpush1.msra.mxu0 0.0
        %1131 = vmatprep.subr.mxu0 0.0
        %1132 = vmatpush1.msra.mxu0 0.0
        %1133 = vmatprep.subr.mxu0 0.0
        %1134 = vmatpush1.msra.mxu0 0.0
        %1135 = vmatprep.subr.mxu0 0.0
        %1136 = vmatpush1.msra.mxu0 0.0
        %1137 = vmatprep.subr.mxu0 0.0
        %1138 = vmatpush1.msra.mxu0 0.0
        %1139 = vmatprep.subr.mxu0 0.0
        %1140 = vmatpush1.msra.mxu0 0.0
        %1141 = vmatprep.subr.mxu0 0.0
        %1142 = vmatpush1.msra.mxu0 0.0
        %1143 = vmatprep.subr.mxu0 0.0
        %1144 = vmatpush1.msra.mxu0 0.0
        %1145 = vmatprep.mubr.f32.mxu0 0.0
        %1146 = vmatmul.mubr.f32.gmra.mrb[0].mxu0 %v177
        %v1147 = vpop.f32.mrb[0].mxu0
        %v1148 = vadd.f32 0.0, %v1147
        %v1149 = vpop.f32.mrb[0].mxu0
        %v1150 = vadd.f32 0.0, %v1149
        %1151 = vmatprep.mubr.f32.mxu0 0.0
        %1152 = vmatmul.mubr.f32.gmra.mrb[0].mxu0 %v180
        %v1153 = vpop.f32.mrb[0].mxu0
        %v1154 = vadd.f32 0.0, %v1153
        %v1155 = vpop.f32.mrb[0].mxu0
        %v1156 = vadd.f32 0.0, %v1155
        %1157 = vmatprep.mubr.f32.mxu0 0.0
        %1158 = vmatmul.mubr.f32.gmra.mrb[0].mxu0 %v183
        %v1159 = vpop.f32.mrb[0].mxu0
        %v1160 = vadd.f32 0.0, %v1159
        %v1161 = vpop.f32.mrb[0].mxu0
        %v1162 = vadd.f32 0.0, %v1161
        %1163 = vmatprep.mubr.f32.mxu0 0.0
        %1164 = vmatmul.mubr.f32.gmra.mrb[0].mxu0 %v186
        %v1165 = vpop.f32.mrb[0].mxu0
        %v1166 = vadd.f32 0.0, %v1165
        %v1167 = vpop.f32.mrb[0].mxu0
        %v1168 = vadd.f32 0.0, %v1167
        %1169 = vmatprep.mubr.f32.mxu0 0.0
        %1170 = vmatmul.mubr.f32.gmra.mrb[0].mxu0 %v189
        %v1171 = vpop.f32.mrb[0].mxu0
        %v1172 = vadd.f32 0.0, %v1171
        %v1173 = vpop.f32.mrb[0].mxu0
        %v1174 = vadd.f32 0.0, %v1173
        %1175 = vmatprep.mubr.f32.mxu0 0.0
        %1176 = vmatmul.mubr.f32.gmra.mrb[0].mxu0 %v192
        %v1177 = vpop.f32.mrb[0].mxu0
        %v1178 = vadd.f32 0.0, %v1177
        %v1179 = vpop.f32.mrb[0].mxu0
        %v1180 = vadd.f32 0.0, %v1179
        %1181 = vmatprep.mubr.f32.mxu0 0.0
        %1182 = vmatmul.mubr.f32.gmra.mrb[0].mxu0 %v195
        %v1183 = vpop.f32.mrb[0].mxu0
        %v1184 = vadd.f32 0.0, %v1183
        %v1185 = vpop.f32.mrb[0].mxu0
        %v1186 = vadd.f32 0.0, %v1185
        %1187 = vmatprep.mubr.f32.mxu0 0.0
        %1188 = vmatmul.mubr.f32.gmra.mrb[0].mxu0 %v198
        %v1189 = vpop.f32.mrb[0].mxu0
        %v1190 = vadd.f32 0.0, %v1189
        %v1191 = vpop.f32.mrb[0].mxu0
        %v1192 = vadd.f32 0.0, %v1191
        %1193 = vmatprep.mubr.f32.mxu0 0.0
        %1194 = vmatmul.mubr.f32.gmra.mrb[0].mxu0 %v201
        %v1195 = vpop.f32.mrb[0].mxu0
        %v1196 = vadd.f32 0.0, %v1195
        %v1197 = vpop.f32.mrb[0].mxu0
        %v1198 = vadd.f32 0.0, %v1197
        %1199 = vmatprep.mubr.f32.mxu0 0.0
        %1200 = vmatmul.mubr.f32.gmra.mrb[0].mxu0 %v204
        %v1201 = vpop.f32.mrb[0].mxu0
        %v1202 = vadd.f32 0.0, %v1201
        %v1203 = vpop.f32.mrb[0].mxu0
        %v1204 = vadd.f32 0.0, %v1203
        %1205 = vdwg.mxu0
        %1206 = vmatprep.subr.mxu0 %v168
        %1207 = vmatpush1.msra.mxu0 %v167
        %1208 = vmatprep.subr.mxu0 0.0
        %1209 = vmatpush1.msra.mxu0 0.0
        %1210 = vmatprep.subr.mxu0 0.0
        %1211 = vmatpush1.msra.mxu0 0.0
        %1212 = vmatprep.subr.mxu0 0.0
        %1213 = vmatpush1.msra.mxu0 0.0
        %1214 = vmatprep.subr.mxu0 0.0
        %1215 = vmatpush1.msra.mxu0 0.0
        %1216 = vmatprep.subr.mxu0 0.0
        %1217 = vmatpush1.msra.mxu0 0.0
        %1218 = vmatprep.subr.mxu0 0.0
        %1219 = vmatpush1.msra.mxu0 0.0
        %1220 = vmatprep.subr.mxu0 0.0
        %1221 = vmatpush1.msra.mxu0 0.0
        %1222 = vmatprep.subr.mxu0 0.0
        %1223 = vmatpush1.msra.mxu0 0.0
        %1224 = vmatprep.subr.mxu0 0.0
        %1225 = vmatpush1.msra.mxu0 0.0
        %1226 = vmatprep.subr.mxu0 0.0
        %1227 = vmatpush1.msra.mxu0 0.0
        %1228 = vmatprep.subr.mxu0 0.0
        %1229 = vmatpush1.msra.mxu0 0.0
        %1230 = vmatprep.subr.mxu0 0.0
        %1231 = vmatpush1.msra.mxu0 0.0
        %1232 = vmatprep.subr.mxu0 0.0
        %1233 = vmatpush1.msra.mxu0 0.0
        %1234 = vmatprep.subr.mxu0 0.0
        %1235 = vmatpush1.msra.mxu0 0.0
        %1236 = vmatprep.subr.mxu0 0.0
        %1237 = vmatpush1.msra.mxu0 0.0
        %1238 = vmatprep.subr.mxu0 0.0
        %1239 = vmatpush1.msra.mxu0 0.0
        %1240 = vmatprep.subr.mxu0 0.0
        %1241 = vmatpush1.msra.mxu0 0.0
        %1242 = vmatprep.subr.mxu0 0.0
        %1243 = vmatpush1.msra.mxu0 0.0
        %1244 = vmatprep.subr.mxu0 0.0
        %1245 = vmatpush1.msra.mxu0 0.0
        %1246 = vmatprep.subr.mxu0 0.0
        %1247 = vmatpush1.msra.mxu0 0.0
        %1248 = vmatprep.subr.mxu0 0.0
        %1249 = vmatpush1.msra.mxu0 0.0
        %1250 = vmatprep.subr.mxu0 0.0
        %1251 = vmatpush1.msra.mxu0 0.0
        %1252 = vmatprep.subr.mxu0 0.0
        %1253 = vmatpush1.msra.mxu0 0.0
        %1254 = vmatprep.subr.mxu0 0.0
        %1255 = vmatpush1.msra.mxu0 0.0
        %1256 = vmatprep.subr.mxu0 0.0
        %1257 = vmatpush1.msra.mxu0 0.0
        %1258 = vmatprep.subr.mxu0 0.0
        %1259 = vmatpush1.msra.mxu0 0.0
        %1260 = vmatprep.subr.mxu0 0.0
        %1261 = vmatpush1.msra.mxu0 0.0
        %1262 = vmatprep.subr.mxu0 0.0
        %1263 = vmatpush1.msra.mxu0 0.0
        %1264 = vmatprep.subr.mxu0 0.0
        %1265 = vmatpush1.msra.mxu0 0.0
        %1266 = vmatprep.subr.mxu0 0.0
        %1267 = vmatpush1.msra.mxu0 0.0
        %1268 = vmatprep.subr.mxu0 0.0
        %1269 = vmatpush1.msra.mxu0 0.0
        %1270 = vmatprep.mubr.f32.mxu0 0.0
        %1271 = vmatmul.mubr.f32.gmra.mrb[0].mxu0 %v177
        %v1272 = vpop.f32.mrb[0].mxu0
        %v1273 = vadd.f32 0.0, %v1272
        %v1274 = vpop.f32.mrb[0].mxu0
        %v1275 = vadd.f32 0.0, %v1274
        %1276 = vmatprep.mubr.f32.mxu0 0.0
        %1277 = vmatmul.mubr.f32.gmra.mrb[0].mxu0 %v180
        %v1278 = vpop.f32.mrb[0].mxu0
        %v1279 = vadd.f32 0.0, %v1278
        %v1280 = vpop.f32.mrb[0].mxu0
        %v1281 = vadd.f32 0.0, %v1280
        %1282 = vmatprep.mubr.f32.mxu0 0.0
        %1283 = vmatmul.mubr.f32.gmra.mrb[0].mxu0 %v183
        %v1284 = vpop.f32.mrb[0].mxu0
        %v1285 = vadd.f32 0.0, %v1284
        %v1286 = vpop.f32.mrb[0].mxu0
        %v1287 = vadd.f32 0.0, %v1286
        %1288 = vmatprep.mubr.f32.mxu0 0.0
        %1289 = vmatmul.mubr.f32.gmra.mrb[0].mxu0 %v186
        %v1290 = vpop.f32.mrb[0].mxu0
        %v1291 = vadd.f32 0.0, %v1290
        %v1292 = vpop.f32.mrb[0].mxu0
        %v1293 = vadd.f32 0.0, %v1292
        %1294 = vmatprep.mubr.f32.mxu0 0.0
        %1295 = vmatmul.mubr.f32.gmra.mrb[0].mxu0 %v189
        %v1296 = vpop.f32.mrb[0].mxu0
        %v1297 = vadd.f32 0.0, %v1296
        %v1298 = vpop.f32.mrb[0].mxu0
        %v1299 = vadd.f32 0.0, %v1298
        %1300 = vmatprep.mubr.f32.mxu0 0.0
        %1301 = vmatmul.mubr.f32.gmra.mrb[0].mxu0 %v192
        %v1302 = vpop.f32.mrb[0].mxu0
        %v1303 = vadd.f32 0.0, %v1302
        %v1304 = vpop.f32.mrb[0].mxu0
        %v1305 = vadd.f32 0.0, %v1304
        %1306 = vmatprep.mubr.f32.mxu0 0.0
        %1307 = vmatmul.mubr.f32.gmra.mrb[0].mxu0 %v195
        %v1308 = vpop.f32.mrb[0].mxu0
        %v1309 = vadd.f32 0.0, %v1308
        %v1310 = vpop.f32.mrb[0].mxu0
        %v1311 = vadd.f32 0.0, %v1310
        %1312 = vmatprep.mubr.f32.mxu0 0.0
        %1313 = vmatmul.mubr.f32.gmra.mrb[0].mxu0 %v198
        %v1314 = vpop.f32.mrb[0].mxu0
        %v1315 = vadd.f32 0.0, %v1314
        %v1316 = vpop.f32.mrb[0].mxu0
        %v1317 = vadd.f32 0.0, %v1316
        %1318 = vmatprep.mubr.f32.mxu0 0.0
        %1319 = vmatmul.mubr.f32.gmra.mrb[0].mxu0 %v201
        %v1320 = vpop.f32.mrb[0].mxu0
        %v1321 = vadd.f32 0.0, %v1320
        %v1322 = vpop.f32.mrb[0].mxu0
        %v1323 = vadd.f32 0.0, %v1322
        %1324 = vmatprep.mubr.f32.mxu0 0.0
        %1325 = vmatmul.mubr.f32.gmra.mrb[0].mxu0 %v204
        %v1326 = vpop.f32.mrb[0].mxu0
        %v1327 = vadd.f32 0.0, %v1326
        %v1328 = vpop.f32.mrb[0].mxu0
        %v1329 = vadd.f32 0.0, %v1328
        %1330 = vdwg.mxu0
        %1331 = vmatprep.subr.mxu0 %v170
        %1332 = vmatpush1.msra.mxu0 %v169
        %1333 = vmatprep.subr.mxu0 0.0
        %1334 = vmatpush1.msra.mxu0 0.0
        %1335 = vmatprep.subr.mxu0 0.0
        %1336 = vmatpush1.msra.mxu0 0.0
        %1337 = vmatprep.subr.mxu0 0.0
        %1338 = vmatpush1.msra.mxu0 0.0
        %1339 = vmatprep.subr.mxu0 0.0
        %1340 = vmatpush1.msra.mxu0 0.0
        %1341 = vmatprep.subr.mxu0 0.0
        %1342 = vmatpush1.msra.mxu0 0.0
        %1343 = vmatprep.subr.mxu0 0.0
        %1344 = vmatpush1.msra.mxu0 0.0
        %1345 = vmatprep.subr.mxu0 0.0
        %1346 = vmatpush1.msra.mxu0 0.0
        %1347 = vmatprep.subr.mxu0 0.0
        %1348 = vmatpush1.msra.mxu0 0.0
        %1349 = vmatprep.subr.mxu0 0.0
        %1350 = vmatpush1.msra.mxu0 0.0
        %1351 = vmatprep.subr.mxu0 0.0
        %1352 = vmatpush1.msra.mxu0 0.0
        %1353 = vmatprep.subr.mxu0 0.0
        %1354 = vmatpush1.msra.mxu0 0.0
        %1355 = vmatprep.subr.mxu0 0.0
        %1356 = vmatpush1.msra.mxu0 0.0
        %1357 = vmatprep.subr.mxu0 0.0
        %1358 = vmatpush1.msra.mxu0 0.0
        %1359 = vmatprep.subr.mxu0 0.0
        %1360 = vmatpush1.msra.mxu0 0.0
        %1361 = vmatprep.subr.mxu0 0.0
        %1362 = vmatpush1.msra.mxu0 0.0
        %1363 = vmatprep.subr.mxu0 0.0
        %1364 = vmatpush1.msra.mxu0 0.0
        %1365 = vmatprep.subr.mxu0 0.0
        %1366 = vmatpush1.msra.mxu0 0.0
        %1367 = vmatprep.subr.mxu0 0.0
        %1368 = vmatpush1.msra.mxu0 0.0
        %1369 = vmatprep.subr.mxu0 0.0
        %1370 = vmatpush1.msra.mxu0 0.0
        %1371 = vmatprep.subr.mxu0 0.0
        %1372 = vmatpush1.msra.mxu0 0.0
        %1373 = vmatprep.subr.mxu0 0.0
        %1374 = vmatpush1.msra.mxu0 0.0
        %1375 = vmatprep.subr.mxu0 0.0
        %1376 = vmatpush1.msra.mxu0 0.0
        %1377 = vmatprep.subr.mxu0 0.0
        %1378 = vmatpush1.msra.mxu0 0.0
        %1379 = vmatprep.subr.mxu0 0.0
        %1380 = vmatpush1.msra.mxu0 0.0
        %1381 = vmatprep.subr.mxu0 0.0
        %1382 = vmatpush1.msra.mxu0 0.0
        %1383 = vmatprep.subr.mxu0 0.0
        %1384 = vmatpush1.msra.mxu0 0.0
        %1385 = vmatprep.subr.mxu0 0.0
        %1386 = vmatpush1.msra.mxu0 0.0
        %1387 = vmatprep.subr.mxu0 0.0
        %1388 = vmatpush1.msra.mxu0 0.0
        %1389 = vmatprep.subr.mxu0 0.0
        %1390 = vmatpush1.msra.mxu0 0.0
        %1391 = vmatprep.subr.mxu0 0.0
        %1392 = vmatpush1.msra.mxu0 0.0
        %1393 = vmatprep.subr.mxu0 0.0
        %1394 = vmatpush1.msra.mxu0 0.0
        %1395 = vmatprep.mubr.f32.mxu0 0.0
        %1396 = vmatmul.mubr.f32.gmra.mrb[0].mxu0 %v177
        %v1397 = vpop.f32.mrb[0].mxu0
        %v1398 = vadd.f32 0.0, %v1397
        %v1399 = vpop.f32.mrb[0].mxu0
        %v1400 = vadd.f32 0.0, %v1399
        %1401 = vmatprep.mubr.f32.mxu0 0.0
        %1402 = vmatmul.mubr.f32.gmra.mrb[0].mxu0 %v180
        %v1403 = vpop.f32.mrb[0].mxu0
        %v1404 = vadd.f32 0.0, %v1403
        %v1405 = vpop.f32.mrb[0].mxu0
        %v1406 = vadd.f32 0.0, %v1405
        %1407 = vmatprep.mubr.f32.mxu0 0.0
        %1408 = vmatmul.mubr.f32.gmra.mrb[0].mxu0 %v183
        %v1409 = vpop.f32.mrb[0].mxu0
        %v1410 = vadd.f32 0.0, %v1409
        %v1411 = vpop.f32.mrb[0].mxu0
        %v1412 = vadd.f32 0.0, %v1411
        %1413 = vmatprep.mubr.f32.mxu0 0.0
        %1414 = vmatmul.mubr.f32.gmra.mrb[0].mxu0 %v186
        %v1415 = vpop.f32.mrb[0].mxu0
        %v1416 = vadd.f32 0.0, %v1415
        %v1417 = vpop.f32.mrb[0].mxu0
        %v1418 = vadd.f32 0.0, %v1417
        %1419 = vmatprep.mubr.f32.mxu0 0.0
        %1420 = vmatmul.mubr.f32.gmra.mrb[0].mxu0 %v189
        %v1421 = vpop.f32.mrb[0].mxu0
        %v1422 = vadd.f32 0.0, %v1421
        %v1423 = vpop.f32.mrb[0].mxu0
        %v1424 = vadd.f32 0.0, %v1423
        %1425 = vmatprep.mubr.f32.mxu0 0.0
        %1426 = vmatmul.mubr.f32.gmra.mrb[0].mxu0 %v192
        %v1427 = vpop.f32.mrb[0].mxu0
        %v1428 = vadd.f32 0.0, %v1427
        %v1429 = vpop.f32.mrb[0].mxu0
        %v1430 = vadd.f32 0.0, %v1429
        %1431 = vmatprep.mubr.f32.mxu0 0.0
        %1432 = vmatmul.mubr.f32.gmra.mrb[0].mxu0 %v195
        %v1433 = vpop.f32.mrb[0].mxu0
        %v1434 = vadd.f32 0.0, %v1433
        %v1435 = vpop.f32.mrb[0].mxu0
        %v1436 = vadd.f32 0.0, %v1435
        %1437 = vmatprep.mubr.f32.mxu0 0.0
        %1438 = vmatmul.mubr.f32.gmra.mrb[0].mxu0 %v198
        %v1439 = vpop.f32.mrb[0].mxu0
        %v1440 = vadd.f32 0.0, %v1439
        %v1441 = vpop.f32.mrb[0].mxu0
        %v1442 = vadd.f32 0.0, %v1441
        %1443 = vmatprep.mubr.f32.mxu0 0.0
        %1444 = vmatmul.mubr.f32.gmra.mrb[0].mxu0 %v201
        %v1445 = vpop.f32.mrb[0].mxu0
        %v1446 = vadd.f32 0.0, %v1445
        %v1447 = vpop.f32.mrb[0].mxu0
        %v1448 = vadd.f32 0.0, %v1447
        %1449 = vmatprep.mubr.f32.mxu0 0.0
        %1450 = vmatmul.mubr.f32.gmra.mrb[0].mxu0 %v204
        %v1451 = vpop.f32.mrb[0].mxu0
        %v1452 = vadd.f32 0.0, %v1451
        %v1453 = vpop.f32.mrb[0].mxu0
        %v1454 = vadd.f32 0.0, %v1453
        %1455 = vdwg.mxu0
        %1456 = vmatprep.subr.mxu0 %v172
        %1457 = vmatpush1.msra.mxu0 %v171
        %1458 = vmatprep.subr.mxu0 0.0
        %1459 = vmatpush1.msra.mxu0 0.0
        %1460 = vmatprep.subr.mxu0 0.0
        %1461 = vmatpush1.msra.mxu0 0.0
        %1462 = vmatprep.subr.mxu0 0.0
        %1463 = vmatpush1.msra.mxu0 0.0
        %1464 = vmatprep.subr.mxu0 0.0
        %1465 = vmatpush1.msra.mxu0 0.0
        %1466 = vmatprep.subr.mxu0 0.0
        %1467 = vmatpush1.msra.mxu0 0.0
        %1468 = vmatprep.subr.mxu0 0.0
        %1469 = vmatpush1.msra.mxu0 0.0
        %1470 = vmatprep.subr.mxu0 0.0
        %1471 = vmatpush1.msra.mxu0 0.0
        %1472 = vmatprep.subr.mxu0 0.0
        %1473 = vmatpush1.msra.mxu0 0.0
        %1474 = vmatprep.subr.mxu0 0.0
        %1475 = vmatpush1.msra.mxu0 0.0
        %1476 = vmatprep.subr.mxu0 0.0
        %1477 = vmatpush1.msra.mxu0 0.0
        %1478 = vmatprep.subr.mxu0 0.0
        %1479 = vmatpush1.msra.mxu0 0.0
        %1480 = vmatprep.subr.mxu0 0.0
        %1481 = vmatpush1.msra.mxu0 0.0
        %1482 = vmatprep.subr.mxu0 0.0
        %1483 = vmatpush1.msra.mxu0 0.0
        %1484 = vmatprep.subr.mxu0 0.0
        %1485 = vmatpush1.msra.mxu0 0.0
        %1486 = vmatprep.subr.mxu0 0.0
        %1487 = vmatpush1.msra.mxu0 0.0
        %1488 = vmatprep.subr.mxu0 0.0
        %1489 = vmatpush1.msra.mxu0 0.0
        %1490 = vmatprep.subr.mxu0 0.0
        %1491 = vmatpush1.msra.mxu0 0.0
        %1492 = vmatprep.subr.mxu0 0.0
        %1493 = vmatpush1.msra.mxu0 0.0
        %1494 = vmatprep.subr.mxu0 0.0
        %1495 = vmatpush1.msra.mxu0 0.0
        %1496 = vmatprep.subr.mxu0 0.0
        %1497 = vmatpush1.msra.mxu0 0.0
        %1498 = vmatprep.subr.mxu0 0.0
        %1499 = vmatpush1.msra.mxu0 0.0
        %1500 = vmatprep.subr.mxu0 0.0
        %1501 = vmatpush1.msra.mxu0 0.0
        %1502 = vmatprep.subr.mxu0 0.0
        %1503 = vmatpush1.msra.mxu0 0.0
        %1504 = vmatprep.subr.mxu0 0.0
        %1505 = vmatpush1.msra.mxu0 0.0
        %1506 = vmatprep.subr.mxu0 0.0
        %1507 = vmatpush1.msra.mxu0 0.0
        %1508 = vmatprep.subr.mxu0 0.0
        %1509 = vmatpush1.msra.mxu0 0.0
        %1510 = vmatprep.subr.mxu0 0.0
        %1511 = vmatpush1.msra.mxu0 0.0
        %1512 = vmatprep.subr.mxu0 0.0
        %1513 = vmatpush1.msra.mxu0 0.0
        %1514 = vmatprep.subr.mxu0 0.0
        %1515 = vmatpush1.msra.mxu0 0.0
        %1516 = vmatprep.subr.mxu0 0.0
        %1517 = vmatpush1.msra.mxu0 0.0
        %1518 = vmatprep.subr.mxu0 0.0
        %1519 = vmatpush1.msra.mxu0 0.0
        %1520 = vmatprep.mubr.f32.mxu0 0.0
        %1521 = vmatmul.mubr.f32.gmra.mrb[0].mxu0 %v177
        %v1522 = vpop.f32.mrb[0].mxu0
        %v1523 = vadd.f32 0.0, %v1522
        %v1524 = vpop.f32.mrb[0].mxu0
        %v1525 = vadd.f32 0.0, %v1524
        %1526 = vmatprep.mubr.f32.mxu0 0.0
        %1527 = vmatmul.mubr.f32.gmra.mrb[0].mxu0 %v180
        %v1528 = vpop.f32.mrb[0].mxu0
        %v1529 = vadd.f32 0.0, %v1528
        %v1530 = vpop.f32.mrb[0].mxu0
        %v1531 = vadd.f32 0.0, %v1530
        %1532 = vmatprep.mubr.f32.mxu0 0.0
        %1533 = vmatmul.mubr.f32.gmra.mrb[0].mxu0 %v183
        %v1534 = vpop.f32.mrb[0].mxu0
        %v1535 = vadd.f32 0.0, %v1534
        %v1536 = vpop.f32.mrb[0].mxu0
        %v1537 = vadd.f32 0.0, %v1536
        %1538 = vmatprep.mubr.f32.mxu0 0.0
        %1539 = vmatmul.mubr.f32.gmra.mrb[0].mxu0 %v186
        %v1540 = vpop.f32.mrb[0].mxu0
        %v1541 = vadd.f32 0.0, %v1540
        %v1542 = vpop.f32.mrb[0].mxu0
        %v1543 = vadd.f32 0.0, %v1542
        %1544 = vmatprep.mubr.f32.mxu0 0.0
        %1545 = vmatmul.mubr.f32.gmra.mrb[0].mxu0 %v189
        %v1546 = vpop.f32.mrb[0].mxu0
        %v1547 = vadd.f32 0.0, %v1546
        %v1548 = vpop.f32.mrb[0].mxu0
        %v1549 = vadd.f32 0.0, %v1548
        %1550 = vmatprep.mubr.f32.mxu0 0.0
        %1551 = vmatmul.mubr.f32.gmra.mrb[0].mxu0 %v192
        %v1552 = vpop.f32.mrb[0].mxu0
        %v1553 = vadd.f32 0.0, %v1552
        %v1554 = vpop.f32.mrb[0].mxu0
        %v1555 = vadd.f32 0.0, %v1554
        %1556 = vmatprep.mubr.f32.mxu0 0.0
        %1557 = vmatmul.mubr.f32.gmra.mrb[0].mxu0 %v195
        %v1558 = vpop.f32.mrb[0].mxu0
        %v1559 = vadd.f32 0.0, %v1558
        %v1560 = vpop.f32.mrb[0].mxu0
        %v1561 = vadd.f32 0.0, %v1560
        %1562 = vmatprep.mubr.f32.mxu0 0.0
        %1563 = vmatmul.mubr.f32.gmra.mrb[0].mxu0 %v198
        %v1564 = vpop.f32.mrb[0].mxu0
        %v1565 = vadd.f32 0.0, %v1564
        %v1566 = vpop.f32.mrb[0].mxu0
        %v1567 = vadd.f32 0.0, %v1566
        %1568 = vmatprep.mubr.f32.mxu0 0.0
        %1569 = vmatmul.mubr.f32.gmra.mrb[0].mxu0 %v201
        %v1570 = vpop.f32.mrb[0].mxu0
        %v1571 = vadd.f32 0.0, %v1570
        %v1572 = vpop.f32.mrb[0].mxu0
        %v1573 = vadd.f32 0.0, %v1572
        %1574 = vmatprep.mubr.f32.mxu0 0.0
        %1575 = vmatmul.mubr.f32.gmra.mrb[0].mxu0 %v204
        %v1576 = vpop.f32.mrb[0].mxu0
        %v1577 = vadd.f32 0.0, %v1576
        %v1578 = vpop.f32.mrb[0].mxu0
        %v1579 = vadd.f32 0.0, %v1578
        %1580 = vdwg.mxu0
        %1581 = vmatprep.subr.mxu0 %v174
        %1582 = vmatpush1.msra.mxu0 %v173
        %1583 = vmatprep.subr.mxu0 0.0
        %1584 = vmatpush1.msra.mxu0 0.0
        %1585 = vmatprep.subr.mxu0 0.0
        %1586 = vmatpush1.msra.mxu0 0.0
        %1587 = vmatprep.subr.mxu0 0.0
        %1588 = vmatpush1.msra.mxu0 0.0
        %1589 = vmatprep.subr.mxu0 0.0
        %1590 = vmatpush1.msra.mxu0 0.0
        %1591 = vmatprep.subr.mxu0 0.0
        %1592 = vmatpush1.msra.mxu0 0.0
        %1593 = vmatprep.subr.mxu0 0.0
        %1594 = vmatpush1.msra.mxu0 0.0
        %1595 = vmatprep.subr.mxu0 0.0
        %1596 = vmatpush1.msra.mxu0 0.0
        %1597 = vmatprep.subr.mxu0 0.0
        %1598 = vmatpush1.msra.mxu0 0.0
        %1599 = vmatprep.subr.mxu0 0.0
        %1600 = vmatpush1.msra.mxu0 0.0
        %1601 = vmatprep.subr.mxu0 0.0
        %1602 = vmatpush1.msra.mxu0 0.0
        %1603 = vmatprep.subr.mxu0 0.0
        %1604 = vmatpush1.msra.mxu0 0.0
        %1605 = vmatprep.subr.mxu0 0.0
        %1606 = vmatpush1.msra.mxu0 0.0
        %1607 = vmatprep.subr.mxu0 0.0
        %1608 = vmatpush1.msra.mxu0 0.0
        %1609 = vmatprep.subr.mxu0 0.0
        %1610 = vmatpush1.msra.mxu0 0.0
        %1611 = vmatprep.subr.mxu0 0.0
        %1612 = vmatpush1.msra.mxu0 0.0
        %1613 = vmatprep.subr.mxu0 0.0
        %1614 = vmatpush1.msra.mxu0 0.0
        %1615 = vmatprep.subr.mxu0 0.0
        %1616 = vmatpush1.msra.mxu0 0.0
        %1617 = vmatprep.subr.mxu0 0.0
        %1618 = vmatpush1.msra.mxu0 0.0
        %1619 = vmatprep.subr.mxu0 0.0
        %1620 = vmatpush1.msra.mxu0 0.0
        %1621 = vmatprep.subr.mxu0 0.0
        %1622 = vmatpush1.msra.mxu0 0.0
        %1623 = vmatprep.subr.mxu0 0.0
        %1624 = vmatpush1.msra.mxu0 0.0
        %1625 = vmatprep.subr.mxu0 0.0
        %1626 = vmatpush1.msra.mxu0 0.0
        %1627 = vmatprep.subr.mxu0 0.0
        %1628 = vmatpush1.msra.mxu0 0.0
        %1629 = vmatprep.subr.mxu0 0.0
        %1630 = vmatpush1.msra.mxu0 0.0
        %1631 = vmatprep.subr.mxu0 0.0
        %1632 = vmatpush1.msra.mxu0 0.0
        %1633 = vmatprep.subr.mxu0 0.0
        %1634 = vmatpush1.msra.mxu0 0.0
        %1635 = vmatprep.subr.mxu0 0.0
        %1636 = vmatpush1.msra.mxu0 0.0
        %1637 = vmatprep.subr.mxu0 0.0
        %1638 = vmatpush1.msra.mxu0 0.0
        %1639 = vmatprep.subr.mxu0 0.0
        %1640 = vmatpush1.msra.mxu0 0.0
        %1641 = vmatprep.subr.mxu0 0.0
        %1642 = vmatpush1.msra.mxu0 0.0
        %1643 = vmatprep.subr.mxu0 0.0
        %1644 = vmatpush1.msra.mxu0 0.0
        %1645 = vmatprep.mubr.f32.mxu0 0.0
        %1646 = vmatmul.mubr.f32.gmra.mrb[0].mxu0 %v177
        %v1647 = vpop.f32.mrb[0].mxu0
        %v1648 = vadd.f32 0.0, %v1647
        %v1649 = vpop.f32.mrb[0].mxu0
        %v1650 = vadd.f32 0.0, %v1649
        %1651 = vmatprep.mubr.f32.mxu0 0.0
        %1652 = vmatmul.mubr.f32.gmra.mrb[0].mxu0 %v180
        %v1653 = vpop.f32.mrb[0].mxu0
        %v1654 = vadd.f32 0.0, %v1653
        %v1655 = vpop.f32.mrb[0].mxu0
        %v1656 = vadd.f32 0.0, %v1655
        %1657 = vmatprep.mubr.f32.mxu0 0.0
        %1658 = vmatmul.mubr.f32.gmra.mrb[0].mxu0 %v183
        %v1659 = vpop.f32.mrb[0].mxu0
        %v1660 = vadd.f32 0.0, %v1659
        %v1661 = vpop.f32.mrb[0].mxu0
        %v1662 = vadd.f32 0.0, %v1661
        %1663 = vmatprep.mubr.f32.mxu0 0.0
        %1664 = vmatmul.mubr.f32.gmra.mrb[0].mxu0 %v186
        %v1665 = vpop.f32.mrb[0].mxu0
        %v1666 = vadd.f32 0.0, %v1665
        %v1667 = vpop.f32.mrb[0].mxu0
        %v1668 = vadd.f32 0.0, %v1667
        %1669 = vmatprep.mubr.f32.mxu0 0.0
        %1670 = vmatmul.mubr.f32.gmra.mrb[0].mxu0 %v189
        %v1671 = vpop.f32.mrb[0].mxu0
        %v1672 = vadd.f32 0.0, %v1671
        %v1673 = vpop.f32.mrb[0].mxu0
        %v1674 = vadd.f32 0.0, %v1673
        %1675 = vmatprep.mubr.f32.mxu0 0.0
        %1676 = vmatmul.mubr.f32.gmra.mrb[0].mxu0 %v192
        %v1677 = vpop.f32.mrb[0].mxu0
        %v1678 = vadd.f32 0.0, %v1677
        %v1679 = vpop.f32.mrb[0].mxu0
        %v1680 = vadd.f32 0.0, %v1679
        %1681 = vmatprep.mubr.f32.mxu0 0.0
        %1682 = vmatmul.mubr.f32.gmra.mrb[0].mxu0 %v195
        %v1683 = vpop.f32.mrb[0].mxu0
        %v1684 = vadd.f32 0.0, %v1683
        %v1685 = vpop.f32.mrb[0].mxu0
        %v1686 = vadd.f32 0.0, %v1685
        %1687 = vmatprep.mubr.f32.mxu0 0.0
        %1688 = vmatmul.mubr.f32.gmra.mrb[0].mxu0 %v198
        %v1689 = vpop.f32.mrb[0].mxu0
        %v1690 = vadd.f32 0.0, %v1689
        %v1691 = vpop.f32.mrb[0].mxu0
        %v1692 = vadd.f32 0.0, %v1691
        %1693 = vmatprep.mubr.f32.mxu0 0.0
        %1694 = vmatmul.mubr.f32.gmra.mrb[0].mxu0 %v201
        %v1695 = vpop.f32.mrb[0].mxu0
        %v1696 = vadd.f32 0.0, %v1695
        %v1697 = vpop.f32.mrb[0].mxu0
        %v1698 = vadd.f32 0.0, %v1697
        %1699 = vmatprep.mubr.f32.mxu0 0.0
        %1700 = vmatmul.mubr.f32.gmra.mrb[0].mxu0 %v204
        %v1701 = vpop.f32.mrb[0].mxu0
        %v1702 = vadd.f32 0.0, %v1701
        %v1703 = vpop.f32.mrb[0].mxu0
        %v1704 = vadd.f32 0.0, %v1703
        %1705 = vdwg.mxu0
        %1706 = vst [vmem:[%s133] sm:$0xff] %v273
        %1707 = vst [vmem:[%s133 + $0x8] sm:$0xff] %v275
        %1708 = vst [vmem:[%s133 + $0x10] sm:$0xff] %v398
        %1709 = vst [vmem:[%s133 + $0x18] sm:$0xff] %v400
        %1710 = vst [vmem:[%s133 + $0x20] sm:$0xff] %v523
        %1711 = vst [vmem:[%s133 + $0x28] sm:$0xff] %v525
        %1712 = vst [vmem:[%s133 + $0x30] sm:$0xff] %v648
        %1713 = vst [vmem:[%s133 + $0x38] sm:$0xff] %v650
        %1714 = vst [vmem:[%s133 + $0x40] sm:$0xff] %v773
        %1715 = vst [vmem:[%s133 + $0x48] sm:$0xff] %v775
        %1716 = vst [vmem:[%s133 + $0x50] sm:$0xff] %v898
        %1717 = vst [vmem:[%s133 + $0x58] sm:$0xff] %v900
        %1718 = vst [vmem:[%s133 + $0x60] sm:$0xff] %v1023
        %1719 = vst [vmem:[%s133 + $0x68] sm:$0xff] %v1025
        %1720 = vst [vmem:[%s133 + $0x70] sm:$0xff] %v1148
        %1721 = vst [vmem:[%s133 + $0x78] sm:$0xff] %v1150
        %1722 = vst [vmem:[%s133 + $0x80] sm:$0xff] %v1273
        %1723 = vst [vmem:[%s133 + $0x88] sm:$0xff] %v1275
        %1724 = vst [vmem:[%s133 + $0x90] sm:$0xff] %v1398
        %1725 = vst [vmem:[%s133 + $0x98] sm:$0xff] %v1400
        %1726 = vst [vmem:[%s133 + $0xa0] sm:$0xff] %v1523
        %1727 = vst [vmem:[%s133 + $0xa8] sm:$0xff] %v1525
        %1728 = vst [vmem:[%s133 + $0xb0] sm:$0xff] %v1648
        %1729 = vst [vmem:[%s133 + $0xb8] sm:$0xff] %v1650
        %1730 = vst [vmem:[%s133 + $0xc0] sm:$0xff] %v279
        %1731 = vst [vmem:[%s133 + $0xc8] sm:$0xff] %v281
        %1732 = vst [vmem:[%s133 + $0xd0] sm:$0xff] %v404
        %1733 = vst [vmem:[%s133 + $0xd8] sm:$0xff] %v406
        %1734 = vst [vmem:[%s133 + $0xe0] sm:$0xff] %v529
        %1735 = vst [vmem:[%s133 + $0xe8] sm:$0xff] %v531
        %1736 = vst [vmem:[%s133 + $0xf0] sm:$0xff] %v654
        %1737 = vst [vmem:[%s133 + $0xf8] sm:$0xff] %v656
        %1738 = vst [vmem:[%s133 + $0x100] sm:$0xff] %v779
        %1739 = vst [vmem:[%s133 + $0x108] sm:$0xff] %v781
        %1740 = vst [vmem:[%s133 + $0x110] sm:$0xff] %v904
        %1741 = vst [vmem:[%s133 + $0x118] sm:$0xff] %v906
        %1742 = vst [vmem:[%s133 + $0x120] sm:$0xff] %v1029
        %1743 = vst [vmem:[%s133 + $0x128] sm:$0xff] %v1031
        %1744 = vst [vmem:[%s133 + $0x130] sm:$0xff] %v1154
        %1745 = vst [vmem:[%s133 + $0x138] sm:$0xff] %v1156
        %1746 = vst [vmem:[%s133 + $0x140] sm:$0xff] %v1279
        %1747 = vst [vmem:[%s133 + $0x148] sm:$0xff] %v1281
        %1748 = vst [vmem:[%s133 + $0x150] sm:$0xff] %v1404
        %1749 = vst [vmem:[%s133 + $0x158] sm:$0xff] %v1406
        %1750 = vst [vmem:[%s133 + $0x160] sm:$0xff] %v1529
        %1751 = vst [vmem:[%s133 + $0x168] sm:$0xff] %v1531
        %1752 = vst [vmem:[%s133 + $0x170] sm:$0xff] %v1654
        %1753 = vst [vmem:[%s133 + $0x178] sm:$0xff] %v1656
        %1754 = vst [vmem:[%s133 + $0x180] sm:$0xff] %v285
        %1755 = vst [vmem:[%s133 + $0x188] sm:$0xff] %v287
        %1756 = vst [vmem:[%s133 + $0x190] sm:$0xff] %v410
        %1757 = vst [vmem:[%s133 + $0x198] sm:$0xff] %v412
        %1758 = vst [vmem:[%s133 + $0x1a0] sm:$0xff] %v535
        %1759 = vst [vmem:[%s133 + $0x1a8] sm:$0xff] %v537
        %1760 = vst [vmem:[%s133 + $0x1b0] sm:$0xff] %v660
        %1761 = vst [vmem:[%s133 + $0x1b8] sm:$0xff] %v662
        %1762 = vst [vmem:[%s133 + $0x1c0] sm:$0xff] %v785
        %1763 = vst [vmem:[%s133 + $0x1c8] sm:$0xff] %v787
        %1764 = vst [vmem:[%s133 + $0x1d0] sm:$0xff] %v910
        %1765 = vst [vmem:[%s133 + $0x1d8] sm:$0xff] %v912
        %1766 = vst [vmem:[%s133 + $0x1e0] sm:$0xff] %v1035
        %1767 = vst [vmem:[%s133 + $0x1e8] sm:$0xff] %v1037
        %1768 = vst [vmem:[%s133 + $0x1f0] sm:$0xff] %v1160
        %1769 = vst [vmem:[%s133 + $0x1f8] sm:$0xff] %v1162
        %1770 = vst [vmem:[%s133 + $0x200] sm:$0xff] %v1285
        %1771 = vst [vmem:[%s133 + $0x208] sm:$0xff] %v1287
        %1772 = vst [vmem:[%s133 + $0x210] sm:$0xff] %v1410
        %1773 = vst [vmem:[%s133 + $0x218] sm:$0xff] %v1412
        %1774 = vst [vmem:[%s133 + $0x220] sm:$0xff] %v1535
        %1775 = vst [vmem:[%s133 + $0x228] sm:$0xff] %v1537
        %1776 = vst [vmem:[%s133 + $0x230] sm:$0xff] %v1660
        %1777 = vst [vmem:[%s133 + $0x238] sm:$0xff] %v1662
        %1778 = vst [vmem:[%s133 + $0x240] sm:$0xff] %v291
        %1779 = vst [vmem:[%s133 + $0x248] sm:$0xff] %v293
        %1780 = vst [vmem:[%s133 + $0x250] sm:$0xff] %v416
        %1781 = vst [vmem:[%s133 + $0x258] sm:$0xff] %v418
        %1782 = vst [vmem:[%s133 + $0x260] sm:$0xff] %v541
        %1783 = vst [vmem:[%s133 + $0x268] sm:$0xff] %v543
        %1784 = vst [vmem:[%s133 + $0x270] sm:$0xff] %v666
        %1785 = vst [vmem:[%s133 + $0x278] sm:$0xff] %v668
        %1786 = vst [vmem:[%s133 + $0x280] sm:$0xff] %v791
        %1787 = vst [vmem:[%s133 + $0x288] sm:$0xff] %v793
        %1788 = vst [vmem:[%s133 + $0x290] sm:$0xff] %v916
        %1789 = vst [vmem:[%s133 + $0x298] sm:$0xff] %v918
        %1790 = vst [vmem:[%s133 + $0x2a0] sm:$0xff] %v1041
        %1791 = vst [vmem:[%s133 + $0x2a8] sm:$0xff] %v1043
        %1792 = vst [vmem:[%s133 + $0x2b0] sm:$0xff] %v1166
        %1793 = vst [vmem:[%s133 + $0x2b8] sm:$0xff] %v1168
        %1794 = vst [vmem:[%s133 + $0x2c0] sm:$0xff] %v1291
        %1795 = vst [vmem:[%s133 + $0x2c8] sm:$0xff] %v1293
        %1796 = vst [vmem:[%s133 + $0x2d0] sm:$0xff] %v1416
        %1797 = vst [vmem:[%s133 + $0x2d8] sm:$0xff] %v1418
        %1798 = vst [vmem:[%s133 + $0x2e0] sm:$0xff] %v1541
        %1799 = vst [vmem:[%s133 + $0x2e8] sm:$0xff] %v1543
        %1800 = vst [vmem:[%s133 + $0x2f0] sm:$0xff] %v1666
        %1801 = vst [vmem:[%s133 + $0x2f8] sm:$0xff] %v1668
        %1802 = vst [vmem:[%s133 + $0x300] sm:$0xff] %v297
        %1803 = vst [vmem:[%s133 + $0x308] sm:$0xff] %v299
        %1804 = vst [vmem:[%s133 + $0x310] sm:$0xff] %v422
        %1805 = vst [vmem:[%s133 + $0x318] sm:$0xff] %v424
        %1806 = vst [vmem:[%s133 + $0x320] sm:$0xff] %v547
        %1807 = vst [vmem:[%s133 + $0x328] sm:$0xff] %v549
        %1808 = vst [vmem:[%s133 + $0x330] sm:$0xff] %v672
        %1809 = vst [vmem:[%s133 + $0x338] sm:$0xff] %v674
        %1810 = vst [vmem:[%s133 + $0x340] sm:$0xff] %v797
        %1811 = vst [vmem:[%s133 + $0x348] sm:$0xff] %v799
        %1812 = vst [vmem:[%s133 + $0x350] sm:$0xff] %v922
        %1813 = vst [vmem:[%s133 + $0x358] sm:$0xff] %v924
        %1814 = vst [vmem:[%s133 + $0x360] sm:$0xff] %v1047
        %1815 = vst [vmem:[%s133 + $0x368] sm:$0xff] %v1049
        %1816 = vst [vmem:[%s133 + $0x370] sm:$0xff] %v1172
        %1817 = vst [vmem:[%s133 + $0x378] sm:$0xff] %v1174
        %1818 = vst [vmem:[%s133 + $0x380] sm:$0xff] %v1297
        %1819 = vst [vmem:[%s133 + $0x388] sm:$0xff] %v1299
        %1820 = vst [vmem:[%s133 + $0x390] sm:$0xff] %v1422
        %1821 = vst [vmem:[%s133 + $0x398] sm:$0xff] %v1424
        %1822 = vst [vmem:[%s133 + $0x3a0] sm:$0xff] %v1547
        %1823 = vst [vmem:[%s133 + $0x3a8] sm:$0xff] %v1549
        %1824 = vst [vmem:[%s133 + $0x3b0] sm:$0xff] %v1672
        %1825 = vst [vmem:[%s133 + $0x3b8] sm:$0xff] %v1674
        %1826 = vst [vmem:[%s133 + $0x3c0] sm:$0xff] %v303
        %1827 = vst [vmem:[%s133 + $0x3c8] sm:$0xff] %v305
        %1828 = vst [vmem:[%s133 + $0x3d0] sm:$0xff] %v428
        %1829 = vst [vmem:[%s133 + $0x3d8] sm:$0xff] %v430
        %1830 = vst [vmem:[%s133 + $0x3e0] sm:$0xff] %v553
        %1831 = vst [vmem:[%s133 + $0x3e8] sm:$0xff] %v555
        %1832 = vst [vmem:[%s133 + $0x3f0] sm:$0xff] %v678
        %1833 = vst [vmem:[%s133 + $0x3f8] sm:$0xff] %v680
        %1834 = vst [vmem:[%s133 + $0x400] sm:$0xff] %v803
        %1835 = vst [vmem:[%s133 + $0x408] sm:$0xff] %v805
        %1836 = vst [vmem:[%s133 + $0x410] sm:$0xff] %v928
        %1837 = vst [vmem:[%s133 + $0x418] sm:$0xff] %v930
        %1838 = vst [vmem:[%s133 + $0x420] sm:$0xff] %v1053
        %1839 = vst [vmem:[%s133 + $0x428] sm:$0xff] %v1055
        %1840 = vst [vmem:[%s133 + $0x430] sm:$0xff] %v1178
        %1841 = vst [vmem:[%s133 + $0x438] sm:$0xff] %v1180
        %1842 = vst [vmem:[%s133 + $0x440] sm:$0xff] %v1303
        %1843 = vst [vmem:[%s133 + $0x448] sm:$0xff] %v1305
        %1844 = vst [vmem:[%s133 + $0x450] sm:$0xff] %v1428
        %1845 = vst [vmem:[%s133 + $0x458] sm:$0xff] %v1430
        %1846 = vst [vmem:[%s133 + $0x460] sm:$0xff] %v1553
        %1847 = vst [vmem:[%s133 + $0x468] sm:$0xff] %v1555
        %1848 = vst [vmem:[%s133 + $0x470] sm:$0xff] %v1678
        %1849 = vst [vmem:[%s133 + $0x478] sm:$0xff] %v1680
        %1850 = vst [vmem:[%s133 + $0x480] sm:$0xff] %v309
        %1851 = vst [vmem:[%s133 + $0x488] sm:$0xff] %v311
        %1852 = vst [vmem:[%s133 + $0x490] sm:$0xff] %v434
        %1853 = vst [vmem:[%s133 + $0x498] sm:$0xff] %v436
        %1854 = vst [vmem:[%s133 + $0x4a0] sm:$0xff] %v559
        %1855 = vst [vmem:[%s133 + $0x4a8] sm:$0xff] %v561
        %1856 = vst [vmem:[%s133 + $0x4b0] sm:$0xff] %v684
        %1857 = vst [vmem:[%s133 + $0x4b8] sm:$0xff] %v686
        %1858 = vst [vmem:[%s133 + $0x4c0] sm:$0xff] %v809
        %1859 = vst [vmem:[%s133 + $0x4c8] sm:$0xff] %v811
        %1860 = vst [vmem:[%s133 + $0x4d0] sm:$0xff] %v934
        %1861 = vst [vmem:[%s133 + $0x4d8] sm:$0xff] %v936
        %1862 = vst [vmem:[%s133 + $0x4e0] sm:$0xff] %v1059
        %1863 = vst [vmem:[%s133 + $0x4e8] sm:$0xff] %v1061
        %1864 = vst [vmem:[%s133 + $0x4f0] sm:$0xff] %v1184
        %1865 = vst [vmem:[%s133 + $0x4f8] sm:$0xff] %v1186
        %1866 = vst [vmem:[%s133 + $0x500] sm:$0xff] %v1309
        %1867 = vst [vmem:[%s133 + $0x508] sm:$0xff] %v1311
        %1868 = vst [vmem:[%s133 + $0x510] sm:$0xff] %v1434
        %1869 = vst [vmem:[%s133 + $0x518] sm:$0xff] %v1436
        %1870 = vst [vmem:[%s133 + $0x520] sm:$0xff] %v1559
        %1871 = vst [vmem:[%s133 + $0x528] sm:$0xff] %v1561
        %1872 = vst [vmem:[%s133 + $0x530] sm:$0xff] %v1684
        %1873 = vst [vmem:[%s133 + $0x538] sm:$0xff] %v1686
        %1874 = vst [vmem:[%s133 + $0x540] sm:$0xff] %v315
        %1875 = vst [vmem:[%s133 + $0x548] sm:$0xff] %v317
        %1876 = vst [vmem:[%s133 + $0x550] sm:$0xff] %v440
        %1877 = vst [vmem:[%s133 + $0x558] sm:$0xff] %v442
        %1878 = vst [vmem:[%s133 + $0x560] sm:$0xff] %v565
        %1879 = vst [vmem:[%s133 + $0x568] sm:$0xff] %v567
        %1880 = vst [vmem:[%s133 + $0x570] sm:$0xff] %v690
        %1881 = vst [vmem:[%s133 + $0x578] sm:$0xff] %v692
        %1882 = vst [vmem:[%s133 + $0x580] sm:$0xff] %v815
        %1883 = vst [vmem:[%s133 + $0x588] sm:$0xff] %v817
        %1884 = vst [vmem:[%s133 + $0x590] sm:$0xff] %v940
        %1885 = vst [vmem:[%s133 + $0x598] sm:$0xff] %v942
        %1886 = vst [vmem:[%s133 + $0x5a0] sm:$0xff] %v1065
        %1887 = vst [vmem:[%s133 + $0x5a8] sm:$0xff] %v1067
        %1888 = vst [vmem:[%s133 + $0x5b0] sm:$0xff] %v1190
        %1889 = vst [vmem:[%s133 + $0x5b8] sm:$0xff] %v1192
        %1890 = vst [vmem:[%s133 + $0x5c0] sm:$0xff] %v1315
        %1891 = vst [vmem:[%s133 + $0x5c8] sm:$0xff] %v1317
        %1892 = vst [vmem:[%s133 + $0x5d0] sm:$0xff] %v1440
        %1893 = vst [vmem:[%s133 + $0x5d8] sm:$0xff] %v1442
        %1894 = vst [vmem:[%s133 + $0x5e0] sm:$0xff] %v1565
        %1895 = vst [vmem:[%s133 + $0x5e8] sm:$0xff] %v1567
        %1896 = vst [vmem:[%s133 + $0x5f0] sm:$0xff] %v1690
        %1897 = vst [vmem:[%s133 + $0x5f8] sm:$0xff] %v1692
        %1898 = vst [vmem:[%s133 + $0x600] sm:$0xff] %v321
        %1899 = vst [vmem:[%s133 + $0x608] sm:$0xff] %v323
        %1900 = vst [vmem:[%s133 + $0x610] sm:$0xff] %v446
        %1901 = vst [vmem:[%s133 + $0x618] sm:$0xff] %v448
        %1902 = vst [vmem:[%s133 + $0x620] sm:$0xff] %v571
        %1903 = vst [vmem:[%s133 + $0x628] sm:$0xff] %v573
        %1904 = vst [vmem:[%s133 + $0x630] sm:$0xff] %v696
        %1905 = vst [vmem:[%s133 + $0x638] sm:$0xff] %v698
        %1906 = vst [vmem:[%s133 + $0x640] sm:$0xff] %v821
        %1907 = vst [vmem:[%s133 + $0x648] sm:$0xff] %v823
        %1908 = vst [vmem:[%s133 + $0x650] sm:$0xff] %v946
        %1909 = vst [vmem:[%s133 + $0x658] sm:$0xff] %v948
        %1910 = vst [vmem:[%s133 + $0x660] sm:$0xff] %v1071
        %1911 = vst [vmem:[%s133 + $0x668] sm:$0xff] %v1073
        %1912 = vst [vmem:[%s133 + $0x670] sm:$0xff] %v1196
        %1913 = vst [vmem:[%s133 + $0x678] sm:$0xff] %v1198
        %1914 = vst [vmem:[%s133 + $0x680] sm:$0xff] %v1321
        %1915 = vst [vmem:[%s133 + $0x688] sm:$0xff] %v1323
        %1916 = vst [vmem:[%s133 + $0x690] sm:$0xff] %v1446
        %1917 = vst [vmem:[%s133 + $0x698] sm:$0xff] %v1448
        %1918 = vst [vmem:[%s133 + $0x6a0] sm:$0xff] %v1571
        %1919 = vst [vmem:[%s133 + $0x6a8] sm:$0xff] %v1573
        %1920 = vst [vmem:[%s133 + $0x6b0] sm:$0xff] %v1696
        %1921 = vst [vmem:[%s133 + $0x6b8] sm:$0xff] %v1698
        %1922 = vst [vmem:[%s133 + $0x6c0] sm:$0xff] %v327
        %1923 = vst [vmem:[%s133 + $0x6c8] sm:$0xff] %v329
        %1924 = vst [vmem:[%s133 + $0x6d0] sm:$0xff] %v452
        %1925 = vst [vmem:[%s133 + $0x6d8] sm:$0xff] %v454
        %1926 = vst [vmem:[%s133 + $0x6e0] sm:$0xff] %v577
        %1927 = vst [vmem:[%s133 + $0x6e8] sm:$0xff] %v579
        %1928 = vst [vmem:[%s133 + $0x6f0] sm:$0xff] %v702
        %1929 = vst [vmem:[%s133 + $0x6f8] sm:$0xff] %v704
        %1930 = vst [vmem:[%s133 + $0x700] sm:$0xff] %v827
        %1931 = vst [vmem:[%s133 + $0x708] sm:$0xff] %v829
        %1932 = vst [vmem:[%s133 + $0x710] sm:$0xff] %v952
        %1933 = vst [vmem:[%s133 + $0x718] sm:$0xff] %v954
        %1934 = vst [vmem:[%s133 + $0x720] sm:$0xff] %v1077
        %1935 = vst [vmem:[%s133 + $0x728] sm:$0xff] %v1079
        %1936 = vst [vmem:[%s133 + $0x730] sm:$0xff] %v1202
        %1937 = vst [vmem:[%s133 + $0x738] sm:$0xff] %v1204
        %1938 = vst [vmem:[%s133 + $0x740] sm:$0xff] %v1327
        %1939 = vst [vmem:[%s133 + $0x748] sm:$0xff] %v1329
        %1940 = vst [vmem:[%s133 + $0x750] sm:$0xff] %v1452
        %1941 = vst [vmem:[%s133 + $0x758] sm:$0xff] %v1454
        %1942 = vst [vmem:[%s133 + $0x760] sm:$0xff] %v1577
        %1943 = vst [vmem:[%s133 + $0x768] sm:$0xff] %v1579
        %1944 = vst [vmem:[%s133 + $0x770] sm:$0xff] %v1702
        %1945 = vst [vmem:[%s133 + $0x778] sm:$0xff] %v1704
        %s1946 = sand.u32 %s68, 1
        %s1947 = sand.u32 %s68, 1
        %s1948 = smul.addr %s1947, 1920
        %s1949 = scalar_lea.vmem [#allocation2], %s1948
        // Predicated region
        $region29: #{forward.13} parent=27 // pred_check
          %p1950 = pneg %p78
        $region30: #{forward.13} parent=27 // pred_check_branch
          %1952 = sbr.rel (%p1950) target = $region32
        $region31: #{forward.13} parent=27 // pred_region
          %s1953 = smul.u32 24, %s13
          %s1954 = smul.addr %s1953, 8
          %s1955 = scalar_lea.vmem %s2, %s1954
          // Predicated region
          $region33: #{forward.13} parent=31 // pred_check
            _
          $region34: #{forward.13} parent=31 // pred_check_branch
            %1957 = sbr.rel (0) target = $region36
          $region35: #{forward.13} parent=31 // pred_region
            // Predicated region
            $region37: #{forward.13} parent=35 // pred_check
              _
            $region38: #{forward.13} parent=35 // pred_check_branch
              %1959 = sbr.rel (0) target = $region40
            $region39: #{forward.13} parent=35 // pred_region
              loop: start=0, step=1, limit=1
              $region41: #{forward.13} parent=39 // loop_pre_header
                _
              $region42: #{forward.13} parent=39 // loop_header
                %s1961 = sphi 0, %s1965
                %p1962 = scmp.ge.s32.totalorder %s1961, 1
                %s1966 = sphi %s1949, %s1949
                %s1967 = sphi %s1955, %s1955
              $region43: #{forward.13} parent=39 // loop_header_branch
                %1964 = sbr.rel (%p1962) target = $region47
              $region44: #{forward.13} parent=39 // loop_body
                %v1968 = vld [vmem:[%s1966] sm:$0xff]
                %1969 = vst [vmem:[%s1967] sm:$0xff] %v1968
                %v1970 = vld [vmem:[%s1966 + $0x8] sm:$0xff]
                %1971 = vst [vmem:[%s1967 + $0x8] sm:$0xff] %v1970
                %v1972 = vld [vmem:[%s1966 + $0x10] sm:$0xff]
                %1973 = vst [vmem:[%s1967 + $0x10] sm:$0xff] %v1972
                %v1974 = vld [vmem:[%s1966 + $0x18] sm:$0xff]
                %1975 = vst [vmem:[%s1967 + $0x18] sm:$0xff] %v1974
                %v1976 = vld [vmem:[%s1966 + $0x20] sm:$0xff]
                %1977 = vst [vmem:[%s1967 + $0x20] sm:$0xff] %v1976
                %v1978 = vld [vmem:[%s1966 + $0x28] sm:$0xff]
                %1979 = vst [vmem:[%s1967 + $0x28] sm:$0xff] %v1978
                %v1980 = vld [vmem:[%s1966 + $0x30] sm:$0xff]
                %1981 = vst [vmem:[%s1967 + $0x30] sm:$0xff] %v1980
                %v1982 = vld [vmem:[%s1966 + $0x38] sm:$0xff]
                %1983 = vst [vmem:[%s1967 + $0x38] sm:$0xff] %v1982
                %v1984 = vld [vmem:[%s1966 + $0x40] sm:$0xff]
                %1985 = vst [vmem:[%s1967 + $0x40] sm:$0xff] %v1984
                %v1986 = vld [vmem:[%s1966 + $0x48] sm:$0xff]
                %1987 = vst [vmem:[%s1967 + $0x48] sm:$0xff] %v1986
                %v1988 = vld [vmem:[%s1966 + $0x50] sm:$0xff]
                %1989 = vst [vmem:[%s1967 + $0x50] sm:$0xff] %v1988
                %v1990 = vld [vmem:[%s1966 + $0x58] sm:$0xff]
                %1991 = vst [vmem:[%s1967 + $0x58] sm:$0xff] %v1990
                %v1992 = vld [vmem:[%s1966 + $0x60] sm:$0xff]
                %1993 = vst [vmem:[%s1967 + $0x60] sm:$0xff] %v1992
                %v1994 = vld [vmem:[%s1966 + $0x68] sm:$0xff]
                %1995 = vst [vmem:[%s1967 + $0x68] sm:$0xff] %v1994
                %v1996 = vld [vmem:[%s1966 + $0x70] sm:$0xff]
                %1997 = vst [vmem:[%s1967 + $0x70] sm:$0xff] %v1996
                %v1998 = vld [vmem:[%s1966 + $0x78] sm:$0xff]
                %1999 = vst [vmem:[%s1967 + $0x78] sm:$0xff] %v1998
                %v2000 = vld [vmem:[%s1966 + $0x80] sm:$0xff]
                %2001 = vst [vmem:[%s1967 + $0x80] sm:$0xff] %v2000
                %v2002 = vld [vmem:[%s1966 + $0x88] sm:$0xff]
                %2003 = vst [vmem:[%s1967 + $0x88] sm:$0xff] %v2002
                %v2004 = vld [vmem:[%s1966 + $0x90] sm:$0xff]
                %2005 = vst [vmem:[%s1967 + $0x90] sm:$0xff] %v2004
                %v2006 = vld [vmem:[%s1966 + $0x98] sm:$0xff]
                %2007 = vst [vmem:[%s1967 + $0x98] sm:$0xff] %v2006
                %v2008 = vld [vmem:[%s1966 + $0xa0] sm:$0xff]
                %2009 = vst [vmem:[%s1967 + $0xa0] sm:$0xff] %v2008
                %v2010 = vld [vmem:[%s1966 + $0xa8] sm:$0xff]
                %2011 = vst [vmem:[%s1967 + $0xa8] sm:$0xff] %v2010
                %v2012 = vld [vmem:[%s1966 + $0xb0] sm:$0xff]
                %2013 = vst [vmem:[%s1967 + $0xb0] sm:$0xff] %v2012
                %v2014 = vld [vmem:[%s1966 + $0xb8] sm:$0xff]
                %2015 = vst [vmem:[%s1967 + $0xb8] sm:$0xff] %v2014
                %v2016 = vld [vmem:[%s1966 + $0xc0] sm:$0xff]
                %2017 = vst [vmem:[%s1967 + $0x480] sm:$0xff] %v2016
                %v2018 = vld [vmem:[%s1966 + $0xc8] sm:$0xff]
                %2019 = vst [vmem:[%s1967 + $0x488] sm:$0xff] %v2018
                %v2020 = vld [vmem:[%s1966 + $0xd0] sm:$0xff]
                %2021 = vst [vmem:[%s1967 + $0x490] sm:$0xff] %v2020
                %v2022 = vld [vmem:[%s1966 + $0xd8] sm:$0xff]
                %2023 = vst [vmem:[%s1967 + $0x498] sm:$0xff] %v2022
                %v2024 = vld [vmem:[%s1966 + $0xe0] sm:$0xff]
                %2025 = vst [vmem:[%s1967 + $0x4a0] sm:$0xff] %v2024
                %v2026 = vld [vmem:[%s1966 + $0xe8] sm:$0xff]
                %2027 = vst [vmem:[%s1967 + $0x4a8] sm:$0xff] %v2026
                %v2028 = vld [vmem:[%s1966 + $0xf0] sm:$0xff]
                %2029 = vst [vmem:[%s1967 + $0x4b0] sm:$0xff] %v2028
                %v2030 = vld [vmem:[%s1966 + $0xf8] sm:$0xff]
                %2031 = vst [vmem:[%s1967 + $0x4b8] sm:$0xff] %v2030
                %v2032 = vld [vmem:[%s1966 + $0x100] sm:$0xff]
                %2033 = vst [vmem:[%s1967 + $0x4c0] sm:$0xff] %v2032
                %v2034 = vld [vmem:[%s1966 + $0x108] sm:$0xff]
                %2035 = vst [vmem:[%s1967 + $0x4c8] sm:$0xff] %v2034
                %v2036 = vld [vmem:[%s1966 + $0x110] sm:$0xff]
                %2037 = vst [vmem:[%s1967 + $0x4d0] sm:$0xff] %v2036
                %v2038 = vld [vmem:[%s1966 + $0x118] sm:$0xff]
                %2039 = vst [vmem:[%s1967 + $0x4d8] sm:$0xff] %v2038
                %v2040 = vld [vmem:[%s1966 + $0x120] sm:$0xff]
                %2041 = vst [vmem:[%s1967 + $0x4e0] sm:$0xff] %v2040
                %v2042 = vld [vmem:[%s1966 + $0x128] sm:$0xff]
                %2043 = vst [vmem:[%s1967 + $0x4e8] sm:$0xff] %v2042
                %v2044 = vld [vmem:[%s1966 + $0x130] sm:$0xff]
                %2045 = vst [vmem:[%s1967 + $0x4f0] sm:$0xff] %v2044
                %v2046 = vld [vmem:[%s1966 + $0x138] sm:$0xff]
                %2047 = vst [vmem:[%s1967 + $0x4f8] sm:$0xff] %v2046
                %v2048 = vld [vmem:[%s1966 + $0x140] sm:$0xff]
                %2049 = vst [vmem:[%s1967 + $0x500] sm:$0xff] %v2048
                %v2050 = vld [vmem:[%s1966 + $0x148] sm:$0xff]
                %2051 = vst [vmem:[%s1967 + $0x508] sm:$0xff] %v2050
                %v2052 = vld [vmem:[%s1966 + $0x150] sm:$0xff]
                %2053 = vst [vmem:[%s1967 + $0x510] sm:$0xff] %v2052
                %v2054 = vld [vmem:[%s1966 + $0x158] sm:$0xff]
                %2055 = vst [vmem:[%s1967 + $0x518] sm:$0xff] %v2054
                %v2056 = vld [vmem:[%s1966 + $0x160] sm:$0xff]
                %2057 = vst [vmem:[%s1967 + $0x520] sm:$0xff] %v2056
                %v2058 = vld [vmem:[%s1966 + $0x168] sm:$0xff]
                %2059 = vst [vmem:[%s1967 + $0x528] sm:$0xff] %v2058
                %v2060 = vld [vmem:[%s1966 + $0x170] sm:$0xff]
                %2061 = vst [vmem:[%s1967 + $0x530] sm:$0xff] %v2060
                %v2062 = vld [vmem:[%s1966 + $0x178] sm:$0xff]
                %2063 = vst [vmem:[%s1967 + $0x538] sm:$0xff] %v2062
                %v2064 = vld [vmem:[%s1966 + $0x180] sm:$0xff]
                %2065 = vst [vmem:[%s1967 + $0x900] sm:$0xff] %v2064
                %v2066 = vld [vmem:[%s1966 + $0x188] sm:$0xff]
                %2067 = vst [vmem:[%s1967 + $0x908] sm:$0xff] %v2066
                %v2068 = vld [vmem:[%s1966 + $0x190] sm:$0xff]
                %2069 = vst [vmem:[%s1967 + $0x910] sm:$0xff] %v2068
                %v2070 = vld [vmem:[%s1966 + $0x198] sm:$0xff]
                %2071 = vst [vmem:[%s1967 + $0x918] sm:$0xff] %v2070
                %v2072 = vld [vmem:[%s1966 + $0x1a0] sm:$0xff]
                %2073 = vst [vmem:[%s1967 + $0x920] sm:$0xff] %v2072
                %v2074 = vld [vmem:[%s1966 + $0x1a8] sm:$0xff]
                %2075 = vst [vmem:[%s1967 + $0x928] sm:$0xff] %v2074
                %v2076 = vld [vmem:[%s1966 + $0x1b0] sm:$0xff]
                %2077 = vst [vmem:[%s1967 + $0x930] sm:$0xff] %v2076
                %v2078 = vld [vmem:[%s1966 + $0x1b8] sm:$0xff]
                %2079 = vst [vmem:[%s1967 + $0x938] sm:$0xff] %v2078
                %v2080 = vld [vmem:[%s1966 + $0x1c0] sm:$0xff]
                %2081 = vst [vmem:[%s1967 + $0x940] sm:$0xff] %v2080
                %v2082 = vld [vmem:[%s1966 + $0x1c8] sm:$0xff]
                %2083 = vst [vmem:[%s1967 + $0x948] sm:$0xff] %v2082
                %v2084 = vld [vmem:[%s1966 + $0x1d0] sm:$0xff]
                %2085 = vst [vmem:[%s1967 + $0x950] sm:$0xff] %v2084
                %v2086 = vld [vmem:[%s1966 + $0x1d8] sm:$0xff]
                %2087 = vst [vmem:[%s1967 + $0x958] sm:$0xff] %v2086
                %v2088 = vld [vmem:[%s1966 + $0x1e0] sm:$0xff]
                %2089 = vst [vmem:[%s1967 + $0x960] sm:$0xff] %v2088
                %v2090 = vld [vmem:[%s1966 + $0x1e8] sm:$0xff]
                %2091 = vst [vmem:[%s1967 + $0x968] sm:$0xff] %v2090
                %v2092 = vld [vmem:[%s1966 + $0x1f0] sm:$0xff]
                %2093 = vst [vmem:[%s1967 + $0x970] sm:$0xff] %v2092
                %v2094 = vld [vmem:[%s1966 + $0x1f8] sm:$0xff]
                %2095 = vst [vmem:[%s1967 + $0x978] sm:$0xff] %v2094
                %v2096 = vld [vmem:[%s1966 + $0x200] sm:$0xff]
                %2097 = vst [vmem:[%s1967 + $0x980] sm:$0xff] %v2096
                %v2098 = vld [vmem:[%s1966 + $0x208] sm:$0xff]
                %2099 = vst [vmem:[%s1967 + $0x988] sm:$0xff] %v2098
                %v2100 = vld [vmem:[%s1966 + $0x210] sm:$0xff]
                %2101 = vst [vmem:[%s1967 + $0x990] sm:$0xff] %v2100
                %v2102 = vld [vmem:[%s1966 + $0x218] sm:$0xff]
                %2103 = vst [vmem:[%s1967 + $0x998] sm:$0xff] %v2102
                %v2104 = vld [vmem:[%s1966 + $0x220] sm:$0xff]
                %2105 = vst [vmem:[%s1967 + $0x9a0] sm:$0xff] %v2104
                %v2106 = vld [vmem:[%s1966 + $0x228] sm:$0xff]
                %2107 = vst [vmem:[%s1967 + $0x9a8] sm:$0xff] %v2106
                %v2108 = vld [vmem:[%s1966 + $0x230] sm:$0xff]
                %2109 = vst [vmem:[%s1967 + $0x9b0] sm:$0xff] %v2108
                %v2110 = vld [vmem:[%s1966 + $0x238] sm:$0xff]
                %2111 = vst [vmem:[%s1967 + $0x9b8] sm:$0xff] %v2110
                %v2112 = vld [vmem:[%s1966 + $0x240] sm:$0xff]
                %2113 = vst [vmem:[%s1967 + $0xd80] sm:$0xff] %v2112
                %v2114 = vld [vmem:[%s1966 + $0x248] sm:$0xff]
                %2115 = vst [vmem:[%s1967 + $0xd88] sm:$0xff] %v2114
                %v2116 = vld [vmem:[%s1966 + $0x250] sm:$0xff]
                %2117 = vst [vmem:[%s1967 + $0xd90] sm:$0xff] %v2116
                %v2118 = vld [vmem:[%s1966 + $0x258] sm:$0xff]
                %2119 = vst [vmem:[%s1967 + $0xd98] sm:$0xff] %v2118
                %v2120 = vld [vmem:[%s1966 + $0x260] sm:$0xff]
                %2121 = vst [vmem:[%s1967 + $0xda0] sm:$0xff] %v2120
                %v2122 = vld [vmem:[%s1966 + $0x268] sm:$0xff]
                %2123 = vst [vmem:[%s1967 + $0xda8] sm:$0xff] %v2122
                %v2124 = vld [vmem:[%s1966 + $0x270] sm:$0xff]
                %2125 = vst [vmem:[%s1967 + $0xdb0] sm:$0xff] %v2124
                %v2126 = vld [vmem:[%s1966 + $0x278] sm:$0xff]
                %2127 = vst [vmem:[%s1967 + $0xdb8] sm:$0xff] %v2126
                %v2128 = vld [vmem:[%s1966 + $0x280] sm:$0xff]
                %2129 = vst [vmem:[%s1967 + $0xdc0] sm:$0xff] %v2128
                %v2130 = vld [vmem:[%s1966 + $0x288] sm:$0xff]
                %2131 = vst [vmem:[%s1967 + $0xdc8] sm:$0xff] %v2130
                %v2132 = vld [vmem:[%s1966 + $0x290] sm:$0xff]
                %2133 = vst [vmem:[%s1967 + $0xdd0] sm:$0xff] %v2132
                %v2134 = vld [vmem:[%s1966 + $0x298] sm:$0xff]
                %2135 = vst [vmem:[%s1967 + $0xdd8] sm:$0xff] %v2134
                %v2136 = vld [vmem:[%s1966 + $0x2a0] sm:$0xff]
                %2137 = vst [vmem:[%s1967 + $0xde0] sm:$0xff] %v2136
                %v2138 = vld [vmem:[%s1966 + $0x2a8] sm:$0xff]
                %2139 = vst [vmem:[%s1967 + $0xde8] sm:$0xff] %v2138
                %v2140 = vld [vmem:[%s1966 + $0x2b0] sm:$0xff]
                %2141 = vst [vmem:[%s1967 + $0xdf0] sm:$0xff] %v2140
                %v2142 = vld [vmem:[%s1966 + $0x2b8] sm:$0xff]
                %2143 = vst [vmem:[%s1967 + $0xdf8] sm:$0xff] %v2142
                %v2144 = vld [vmem:[%s1966 + $0x2c0] sm:$0xff]
                %2145 = vst [vmem:[%s1967 + $0xe00] sm:$0xff] %v2144
                %v2146 = vld [vmem:[%s1966 + $0x2c8] sm:$0xff]
                %2147 = vst [vmem:[%s1967 + $0xe08] sm:$0xff] %v2146
                %v2148 = vld [vmem:[%s1966 + $0x2d0] sm:$0xff]
                %2149 = vst [vmem:[%s1967 + $0xe10] sm:$0xff] %v2148
                %v2150 = vld [vmem:[%s1966 + $0x2d8] sm:$0xff]
                %2151 = vst [vmem:[%s1967 + $0xe18] sm:$0xff] %v2150
                %v2152 = vld [vmem:[%s1966 + $0x2e0] sm:$0xff]
                %2153 = vst [vmem:[%s1967 + $0xe20] sm:$0xff] %v2152
                %v2154 = vld [vmem:[%s1966 + $0x2e8] sm:$0xff]
                %2155 = vst [vmem:[%s1967 + $0xe28] sm:$0xff] %v2154
                %v2156 = vld [vmem:[%s1966 + $0x2f0] sm:$0xff]
                %2157 = vst [vmem:[%s1967 + $0xe30] sm:$0xff] %v2156
                %v2158 = vld [vmem:[%s1966 + $0x2f8] sm:$0xff]
                %2159 = vst [vmem:[%s1967 + $0xe38] sm:$0xff] %v2158
                %v2160 = vld [vmem:[%s1966 + $0x300] sm:$0xff]
                %2161 = vst [vmem:[%s1967 + $0x1200] sm:$0xff] %v2160
                %v2162 = vld [vmem:[%s1966 + $0x308] sm:$0xff]
                %2163 = vst [vmem:[%s1967 + $0x1208] sm:$0xff] %v2162
                %v2164 = vld [vmem:[%s1966 + $0x310] sm:$0xff]
                %2165 = vst [vmem:[%s1967 + $0x1210] sm:$0xff] %v2164
                %v2166 = vld [vmem:[%s1966 + $0x318] sm:$0xff]
                %2167 = vst [vmem:[%s1967 + $0x1218] sm:$0xff] %v2166
                %v2168 = vld [vmem:[%s1966 + $0x320] sm:$0xff]
                %2169 = vst [vmem:[%s1967 + $0x1220] sm:$0xff] %v2168
                %v2170 = vld [vmem:[%s1966 + $0x328] sm:$0xff]
                %2171 = vst [vmem:[%s1967 + $0x1228] sm:$0xff] %v2170
                %v2172 = vld [vmem:[%s1966 + $0x330] sm:$0xff]
                %2173 = vst [vmem:[%s1967 + $0x1230] sm:$0xff] %v2172
                %v2174 = vld [vmem:[%s1966 + $0x338] sm:$0xff]
                %2175 = vst [vmem:[%s1967 + $0x1238] sm:$0xff] %v2174
                %v2176 = vld [vmem:[%s1966 + $0x340] sm:$0xff]
                %2177 = vst [vmem:[%s1967 + $0x1240] sm:$0xff] %v2176
                %v2178 = vld [vmem:[%s1966 + $0x348] sm:$0xff]
                %2179 = vst [vmem:[%s1967 + $0x1248] sm:$0xff] %v2178
                %v2180 = vld [vmem:[%s1966 + $0x350] sm:$0xff]
                %2181 = vst [vmem:[%s1967 + $0x1250] sm:$0xff] %v2180
                %v2182 = vld [vmem:[%s1966 + $0x358] sm:$0xff]
                %2183 = vst [vmem:[%s1967 + $0x1258] sm:$0xff] %v2182
                %v2184 = vld [vmem:[%s1966 + $0x360] sm:$0xff]
                %2185 = vst [vmem:[%s1967 + $0x1260] sm:$0xff] %v2184
                %v2186 = vld [vmem:[%s1966 + $0x368] sm:$0xff]
                %2187 = vst [vmem:[%s1967 + $0x1268] sm:$0xff] %v2186
                %v2188 = vld [vmem:[%s1966 + $0x370] sm:$0xff]
                %2189 = vst [vmem:[%s1967 + $0x1270] sm:$0xff] %v2188
                %v2190 = vld [vmem:[%s1966 + $0x378] sm:$0xff]
                %2191 = vst [vmem:[%s1967 + $0x1278] sm:$0xff] %v2190
                %v2192 = vld [vmem:[%s1966 + $0x380] sm:$0xff]
                %2193 = vst [vmem:[%s1967 + $0x1280] sm:$0xff] %v2192
                %v2194 = vld [vmem:[%s1966 + $0x388] sm:$0xff]
                %2195 = vst [vmem:[%s1967 + $0x1288] sm:$0xff] %v2194
                %v2196 = vld [vmem:[%s1966 + $0x390] sm:$0xff]
                %2197 = vst [vmem:[%s1967 + $0x1290] sm:$0xff] %v2196
                %v2198 = vld [vmem:[%s1966 + $0x398] sm:$0xff]
                %2199 = vst [vmem:[%s1967 + $0x1298] sm:$0xff] %v2198
                %v2200 = vld [vmem:[%s1966 + $0x3a0] sm:$0xff]
                %2201 = vst [vmem:[%s1967 + $0x12a0] sm:$0xff] %v2200
                %v2202 = vld [vmem:[%s1966 + $0x3a8] sm:$0xff]
                %2203 = vst [vmem:[%s1967 + $0x12a8] sm:$0xff] %v2202
                %v2204 = vld [vmem:[%s1966 + $0x3b0] sm:$0xff]
                %2205 = vst [vmem:[%s1967 + $0x12b0] sm:$0xff] %v2204
                %v2206 = vld [vmem:[%s1966 + $0x3b8] sm:$0xff]
                %2207 = vst [vmem:[%s1967 + $0x12b8] sm:$0xff] %v2206
                %v2208 = vld [vmem:[%s1966 + $0x3c0] sm:$0xff]
                %2209 = vst [vmem:[%s1967 + $0x1680] sm:$0xff] %v2208
                %v2210 = vld [vmem:[%s1966 + $0x3c8] sm:$0xff]
                %2211 = vst [vmem:[%s1967 + $0x1688] sm:$0xff] %v2210
                %v2212 = vld [vmem:[%s1966 + $0x3d0] sm:$0xff]
                %2213 = vst [vmem:[%s1967 + $0x1690] sm:$0xff] %v2212
                %v2214 = vld [vmem:[%s1966 + $0x3d8] sm:$0xff]
                %2215 = vst [vmem:[%s1967 + $0x1698] sm:$0xff] %v2214
                %v2216 = vld [vmem:[%s1966 + $0x3e0] sm:$0xff]
                %2217 = vst [vmem:[%s1967 + $0x16a0] sm:$0xff] %v2216
                %v2218 = vld [vmem:[%s1966 + $0x3e8] sm:$0xff]
                %2219 = vst [vmem:[%s1967 + $0x16a8] sm:$0xff] %v2218
                %v2220 = vld [vmem:[%s1966 + $0x3f0] sm:$0xff]
                %2221 = vst [vmem:[%s1967 + $0x16b0] sm:$0xff] %v2220
                %v2222 = vld [vmem:[%s1966 + $0x3f8] sm:$0xff]
                %2223 = vst [vmem:[%s1967 + $0x16b8] sm:$0xff] %v2222
                %v2224 = vld [vmem:[%s1966 + $0x400] sm:$0xff]
                %2225 = vst [vmem:[%s1967 + $0x16c0] sm:$0xff] %v2224
                %v2226 = vld [vmem:[%s1966 + $0x408] sm:$0xff]
                %2227 = vst [vmem:[%s1967 + $0x16c8] sm:$0xff] %v2226
                %v2228 = vld [vmem:[%s1966 + $0x410] sm:$0xff]
                %2229 = vst [vmem:[%s1967 + $0x16d0] sm:$0xff] %v2228
                %v2230 = vld [vmem:[%s1966 + $0x418] sm:$0xff]
                %2231 = vst [vmem:[%s1967 + $0x16d8] sm:$0xff] %v2230
                %v2232 = vld [vmem:[%s1966 + $0x420] sm:$0xff]
                %2233 = vst [vmem:[%s1967 + $0x16e0] sm:$0xff] %v2232
                %v2234 = vld [vmem:[%s1966 + $0x428] sm:$0xff]
                %2235 = vst [vmem:[%s1967 + $0x16e8] sm:$0xff] %v2234
                %v2236 = vld [vmem:[%s1966 + $0x430] sm:$0xff]
                %2237 = vst [vmem:[%s1967 + $0x16f0] sm:$0xff] %v2236
                %v2238 = vld [vmem:[%s1966 + $0x438] sm:$0xff]
                %2239 = vst [vmem:[%s1967 + $0x16f8] sm:$0xff] %v2238
                %v2240 = vld [vmem:[%s1966 + $0x440] sm:$0xff]
                %2241 = vst [vmem:[%s1967 + $0x1700] sm:$0xff] %v2240
                %v2242 = vld [vmem:[%s1966 + $0x448] sm:$0xff]
                %2243 = vst [vmem:[%s1967 + $0x1708] sm:$0xff] %v2242
                %v2244 = vld [vmem:[%s1966 + $0x450] sm:$0xff]
                %2245 = vst [vmem:[%s1967 + $0x1710] sm:$0xff] %v2244
                %v2246 = vld [vmem:[%s1966 + $0x458] sm:$0xff]
                %2247 = vst [vmem:[%s1967 + $0x1718] sm:$0xff] %v2246
                %v2248 = vld [vmem:[%s1966 + $0x460] sm:$0xff]
                %2249 = vst [vmem:[%s1967 + $0x1720] sm:$0xff] %v2248
                %v2250 = vld [vmem:[%s1966 + $0x468] sm:$0xff]
                %2251 = vst [vmem:[%s1967 + $0x1728] sm:$0xff] %v2250
                %v2252 = vld [vmem:[%s1966 + $0x470] sm:$0xff]
                %2253 = vst [vmem:[%s1967 + $0x1730] sm:$0xff] %v2252
                %v2254 = vld [vmem:[%s1966 + $0x478] sm:$0xff]
                %2255 = vst [vmem:[%s1967 + $0x1738] sm:$0xff] %v2254
                %v2256 = vld [vmem:[%s1966 + $0x480] sm:$0xff]
                %2257 = vst [vmem:[%s1967 + $0x1b00] sm:$0xff] %v2256
                %v2258 = vld [vmem:[%s1966 + $0x488] sm:$0xff]
                %2259 = vst [vmem:[%s1967 + $0x1b08] sm:$0xff] %v2258
                %v2260 = vld [vmem:[%s1966 + $0x490] sm:$0xff]
                %2261 = vst [vmem:[%s1967 + $0x1b10] sm:$0xff] %v2260
                %v2262 = vld [vmem:[%s1966 + $0x498] sm:$0xff]
                %2263 = vst [vmem:[%s1967 + $0x1b18] sm:$0xff] %v2262
                %v2264 = vld [vmem:[%s1966 + $0x4a0] sm:$0xff]
                %2265 = vst [vmem:[%s1967 + $0x1b20] sm:$0xff] %v2264
                %v2266 = vld [vmem:[%s1966 + $0x4a8] sm:$0xff]
                %2267 = vst [vmem:[%s1967 + $0x1b28] sm:$0xff] %v2266
                %v2268 = vld [vmem:[%s1966 + $0x4b0] sm:$0xff]
                %2269 = vst [vmem:[%s1967 + $0x1b30] sm:$0xff] %v2268
                %v2270 = vld [vmem:[%s1966 + $0x4b8] sm:$0xff]
                %2271 = vst [vmem:[%s1967 + $0x1b38] sm:$0xff] %v2270
                %v2272 = vld [vmem:[%s1966 + $0x4c0] sm:$0xff]
                %2273 = vst [vmem:[%s1967 + $0x1b40] sm:$0xff] %v2272
                %v2274 = vld [vmem:[%s1966 + $0x4c8] sm:$0xff]
                %2275 = vst [vmem:[%s1967 + $0x1b48] sm:$0xff] %v2274
                %v2276 = vld [vmem:[%s1966 + $0x4d0] sm:$0xff]
                %2277 = vst [vmem:[%s1967 + $0x1b50] sm:$0xff] %v2276
                %v2278 = vld [vmem:[%s1966 + $0x4d8] sm:$0xff]
                %2279 = vst [vmem:[%s1967 + $0x1b58] sm:$0xff] %v2278
                %v2280 = vld [vmem:[%s1966 + $0x4e0] sm:$0xff]
                %2281 = vst [vmem:[%s1967 + $0x1b60] sm:$0xff] %v2280
                %v2282 = vld [vmem:[%s1966 + $0x4e8] sm:$0xff]
                %2283 = vst [vmem:[%s1967 + $0x1b68] sm:$0xff] %v2282
                %v2284 = vld [vmem:[%s1966 + $0x4f0] sm:$0xff]
                %2285 = vst [vmem:[%s1967 + $0x1b70] sm:$0xff] %v2284
                %v2286 = vld [vmem:[%s1966 + $0x4f8] sm:$0xff]
                %2287 = vst [vmem:[%s1967 + $0x1b78] sm:$0xff] %v2286
                %v2288 = vld [vmem:[%s1966 + $0x500] sm:$0xff]
                %2289 = vst [vmem:[%s1967 + $0x1b80] sm:$0xff] %v2288
                %v2290 = vld [vmem:[%s1966 + $0x508] sm:$0xff]
                %2291 = vst [vmem:[%s1967 + $0x1b88] sm:$0xff] %v2290
                %v2292 = vld [vmem:[%s1966 + $0x510] sm:$0xff]
                %2293 = vst [vmem:[%s1967 + $0x1b90] sm:$0xff] %v2292
                %v2294 = vld [vmem:[%s1966 + $0x518] sm:$0xff]
                %2295 = vst [vmem:[%s1967 + $0x1b98] sm:$0xff] %v2294
                %v2296 = vld [vmem:[%s1966 + $0x520] sm:$0xff]
                %2297 = vst [vmem:[%s1967 + $0x1ba0] sm:$0xff] %v2296
                %v2298 = vld [vmem:[%s1966 + $0x528] sm:$0xff]
                %2299 = vst [vmem:[%s1967 + $0x1ba8] sm:$0xff] %v2298
                %v2300 = vld [vmem:[%s1966 + $0x530] sm:$0xff]
                %2301 = vst [vmem:[%s1967 + $0x1bb0] sm:$0xff] %v2300
                %v2302 = vld [vmem:[%s1966 + $0x538] sm:$0xff]
                %2303 = vst [vmem:[%s1967 + $0x1bb8] sm:$0xff] %v2302
                %v2304 = vld [vmem:[%s1966 + $0x540] sm:$0xff]
                %2305 = vst [vmem:[%s1967 + $0x1f80] sm:$0xff] %v2304
                %v2306 = vld [vmem:[%s1966 + $0x548] sm:$0xff]
                %2307 = vst [vmem:[%s1967 + $0x1f88] sm:$0xff] %v2306
                %v2308 = vld [vmem:[%s1966 + $0x550] sm:$0xff]
                %2309 = vst [vmem:[%s1967 + $0x1f90] sm:$0xff] %v2308
                %v2310 = vld [vmem:[%s1966 + $0x558] sm:$0xff]
                %2311 = vst [vmem:[%s1967 + $0x1f98] sm:$0xff] %v2310
                %v2312 = vld [vmem:[%s1966 + $0x560] sm:$0xff]
                %2313 = vst [vmem:[%s1967 + $0x1fa0] sm:$0xff] %v2312
                %v2314 = vld [vmem:[%s1966 + $0x568] sm:$0xff]
                %2315 = vst [vmem:[%s1967 + $0x1fa8] sm:$0xff] %v2314
                %v2316 = vld [vmem:[%s1966 + $0x570] sm:$0xff]
                %2317 = vst [vmem:[%s1967 + $0x1fb0] sm:$0xff] %v2316
                %v2318 = vld [vmem:[%s1966 + $0x578] sm:$0xff]
                %2319 = vst [vmem:[%s1967 + $0x1fb8] sm:$0xff] %v2318
                %v2320 = vld [vmem:[%s1966 + $0x580] sm:$0xff]
                %2321 = vst [vmem:[%s1967 + $0x1fc0] sm:$0xff] %v2320
                %v2322 = vld [vmem:[%s1966 + $0x588] sm:$0xff]
                %2323 = vst [vmem:[%s1967 + $0x1fc8] sm:$0xff] %v2322
                %v2324 = vld [vmem:[%s1966 + $0x590] sm:$0xff]
                %2325 = vst [vmem:[%s1967 + $0x1fd0] sm:$0xff] %v2324
                %v2326 = vld [vmem:[%s1966 + $0x598] sm:$0xff]
                %2327 = vst [vmem:[%s1967 + $0x1fd8] sm:$0xff] %v2326
                %v2328 = vld [vmem:[%s1966 + $0x5a0] sm:$0xff]
                %2329 = vst [vmem:[%s1967 + $0x1fe0] sm:$0xff] %v2328
                %v2330 = vld [vmem:[%s1966 + $0x5a8] sm:$0xff]
                %2331 = vst [vmem:[%s1967 + $0x1fe8] sm:$0xff] %v2330
                %v2332 = vld [vmem:[%s1966 + $0x5b0] sm:$0xff]
                %2333 = vst [vmem:[%s1967 + $0x1ff0] sm:$0xff] %v2332
                %v2334 = vld [vmem:[%s1966 + $0x5b8] sm:$0xff]
                %2335 = vst [vmem:[%s1967 + $0x1ff8] sm:$0xff] %v2334
                %v2336 = vld [vmem:[%s1966 + $0x5c0] sm:$0xff]
                %2337 = vst [vmem:[%s1967 + $0x2000] sm:$0xff] %v2336
                %v2338 = vld [vmem:[%s1966 + $0x5c8] sm:$0xff]
                %2339 = vst [vmem:[%s1967 + $0x2008] sm:$0xff] %v2338
                %v2340 = vld [vmem:[%s1966 + $0x5d0] sm:$0xff]
                %2341 = vst [vmem:[%s1967 + $0x2010] sm:$0xff] %v2340
                %v2342 = vld [vmem:[%s1966 + $0x5d8] sm:$0xff]
                %2343 = vst [vmem:[%s1967 + $0x2018] sm:$0xff] %v2342
                %v2344 = vld [vmem:[%s1966 + $0x5e0] sm:$0xff]
                %2345 = vst [vmem:[%s1967 + $0x2020] sm:$0xff] %v2344
                %v2346 = vld [vmem:[%s1966 + $0x5e8] sm:$0xff]
                %2347 = vst [vmem:[%s1967 + $0x2028] sm:$0xff] %v2346
                %v2348 = vld [vmem:[%s1966 + $0x5f0] sm:$0xff]
                %2349 = vst [vmem:[%s1967 + $0x2030] sm:$0xff] %v2348
                %v2350 = vld [vmem:[%s1966 + $0x5f8] sm:$0xff]
                %2351 = vst [vmem:[%s1967 + $0x2038] sm:$0xff] %v2350
                %v2352 = vld [vmem:[%s1966 + $0x600] sm:$0xff]
                %2353 = vst [vmem:[%s1967 + $0x2400] sm:$0xff] %v2352
                %v2354 = vld [vmem:[%s1966 + $0x608] sm:$0xff]
                %2355 = vst [vmem:[%s1967 + $0x2408] sm:$0xff] %v2354
                %v2356 = vld [vmem:[%s1966 + $0x610] sm:$0xff]
                %2357 = vst [vmem:[%s1967 + $0x2410] sm:$0xff] %v2356
                %v2358 = vld [vmem:[%s1966 + $0x618] sm:$0xff]
                %2359 = vst [vmem:[%s1967 + $0x2418] sm:$0xff] %v2358
                %v2360 = vld [vmem:[%s1966 + $0x620] sm:$0xff]
                %2361 = vst [vmem:[%s1967 + $0x2420] sm:$0xff] %v2360
                %v2362 = vld [vmem:[%s1966 + $0x628] sm:$0xff]
                %2363 = vst [vmem:[%s1967 + $0x2428] sm:$0xff] %v2362
                %v2364 = vld [vmem:[%s1966 + $0x630] sm:$0xff]
                %2365 = vst [vmem:[%s1967 + $0x2430] sm:$0xff] %v2364
                %v2366 = vld [vmem:[%s1966 + $0x638] sm:$0xff]
                %2367 = vst [vmem:[%s1967 + $0x2438] sm:$0xff] %v2366
                %v2368 = vld [vmem:[%s1966 + $0x640] sm:$0xff]
                %2369 = vst [vmem:[%s1967 + $0x2440] sm:$0xff] %v2368
                %v2370 = vld [vmem:[%s1966 + $0x648] sm:$0xff]
                %2371 = vst [vmem:[%s1967 + $0x2448] sm:$0xff] %v2370
                %v2372 = vld [vmem:[%s1966 + $0x650] sm:$0xff]
                %2373 = vst [vmem:[%s1967 + $0x2450] sm:$0xff] %v2372
                %v2374 = vld [vmem:[%s1966 + $0x658] sm:$0xff]
                %2375 = vst [vmem:[%s1967 + $0x2458] sm:$0xff] %v2374
                %v2376 = vld [vmem:[%s1966 + $0x660] sm:$0xff]
                %2377 = vst [vmem:[%s1967 + $0x2460] sm:$0xff] %v2376
                %v2378 = vld [vmem:[%s1966 + $0x668] sm:$0xff]
                %2379 = vst [vmem:[%s1967 + $0x2468] sm:$0xff] %v2378
                %v2380 = vld [vmem:[%s1966 + $0x670] sm:$0xff]
                %2381 = vst [vmem:[%s1967 + $0x2470] sm:$0xff] %v2380
                %v2382 = vld [vmem:[%s1966 + $0x678] sm:$0xff]
                %2383 = vst [vmem:[%s1967 + $0x2478] sm:$0xff] %v2382
                %v2384 = vld [vmem:[%s1966 + $0x680] sm:$0xff]
                %2385 = vst [vmem:[%s1967 + $0x2480] sm:$0xff] %v2384
                %v2386 = vld [vmem:[%s1966 + $0x688] sm:$0xff]
                %2387 = vst [vmem:[%s1967 + $0x2488] sm:$0xff] %v2386
                %v2388 = vld [vmem:[%s1966 + $0x690] sm:$0xff]
                %2389 = vst [vmem:[%s1967 + $0x2490] sm:$0xff] %v2388
                %v2390 = vld [vmem:[%s1966 + $0x698] sm:$0xff]
                %2391 = vst [vmem:[%s1967 + $0x2498] sm:$0xff] %v2390
                %v2392 = vld [vmem:[%s1966 + $0x6a0] sm:$0xff]
                %2393 = vst [vmem:[%s1967 + $0x24a0] sm:$0xff] %v2392
                %v2394 = vld [vmem:[%s1966 + $0x6a8] sm:$0xff]
                %2395 = vst [vmem:[%s1967 + $0x24a8] sm:$0xff] %v2394
                %v2396 = vld [vmem:[%s1966 + $0x6b0] sm:$0xff]
                %2397 = vst [vmem:[%s1967 + $0x24b0] sm:$0xff] %v2396
                %v2398 = vld [vmem:[%s1966 + $0x6b8] sm:$0xff]
                %2399 = vst [vmem:[%s1967 + $0x24b8] sm:$0xff] %v2398
                %v2400 = vld [vmem:[%s1966 + $0x6c0] sm:$0xff]
                %2401 = vst [vmem:[%s1967 + $0x2880] sm:$0xff] %v2400
                %v2402 = vld [vmem:[%s1966 + $0x6c8] sm:$0xff]
                %2403 = vst [vmem:[%s1967 + $0x2888] sm:$0xff] %v2402
                %v2404 = vld [vmem:[%s1966 + $0x6d0] sm:$0xff]
                %2405 = vst [vmem:[%s1967 + $0x2890] sm:$0xff] %v2404
                %v2406 = vld [vmem:[%s1966 + $0x6d8] sm:$0xff]
                %2407 = vst [vmem:[%s1967 + $0x2898] sm:$0xff] %v2406
                %v2408 = vld [vmem:[%s1966 + $0x6e0] sm:$0xff]
                %2409 = vst [vmem:[%s1967 + $0x28a0] sm:$0xff] %v2408
                %v2410 = vld [vmem:[%s1966 + $0x6e8] sm:$0xff]
                %2411 = vst [vmem:[%s1967 + $0x28a8] sm:$0xff] %v2410
                %v2412 = vld [vmem:[%s1966 + $0x6f0] sm:$0xff]
                %2413 = vst [vmem:[%s1967 + $0x28b0] sm:$0xff] %v2412
                %v2414 = vld [vmem:[%s1966 + $0x6f8] sm:$0xff]
                %2415 = vst [vmem:[%s1967 + $0x28b8] sm:$0xff] %v2414
                %v2416 = vld [vmem:[%s1966 + $0x700] sm:$0xff]
                %2417 = vst [vmem:[%s1967 + $0x28c0] sm:$0xff] %v2416
                %v2418 = vld [vmem:[%s1966 + $0x708] sm:$0xff]
                %2419 = vst [vmem:[%s1967 + $0x28c8] sm:$0xff] %v2418
                %v2420 = vld [vmem:[%s1966 + $0x710] sm:$0xff]
                %2421 = vst [vmem:[%s1967 + $0x28d0] sm:$0xff] %v2420
                %v2422 = vld [vmem:[%s1966 + $0x718] sm:$0xff]
                %2423 = vst [vmem:[%s1967 + $0x28d8] sm:$0xff] %v2422
                %v2424 = vld [vmem:[%s1966 + $0x720] sm:$0xff]
                %2425 = vst [vmem:[%s1967 + $0x28e0] sm:$0xff] %v2424
                %v2426 = vld [vmem:[%s1966 + $0x728] sm:$0xff]
                %2427 = vst [vmem:[%s1967 + $0x28e8] sm:$0xff] %v2426
                %v2428 = vld [vmem:[%s1966 + $0x730] sm:$0xff]
                %2429 = vst [vmem:[%s1967 + $0x28f0] sm:$0xff] %v2428
                %v2430 = vld [vmem:[%s1966 + $0x738] sm:$0xff]
                %2431 = vst [vmem:[%s1967 + $0x28f8] sm:$0xff] %v2430
                %v2432 = vld [vmem:[%s1966 + $0x740] sm:$0xff]
                %2433 = vst [vmem:[%s1967 + $0x2900] sm:$0xff] %v2432
                %v2434 = vld [vmem:[%s1966 + $0x748] sm:$0xff]
                %2435 = vst [vmem:[%s1967 + $0x2908] sm:$0xff] %v2434
                %v2436 = vld [vmem:[%s1966 + $0x750] sm:$0xff]
                %2437 = vst [vmem:[%s1967 + $0x2910] sm:$0xff] %v2436
                %v2438 = vld [vmem:[%s1966 + $0x758] sm:$0xff]
                %2439 = vst [vmem:[%s1967 + $0x2918] sm:$0xff] %v2438
                %v2440 = vld [vmem:[%s1966 + $0x760] sm:$0xff]
                %2441 = vst [vmem:[%s1967 + $0x2920] sm:$0xff] %v2440
                %v2442 = vld [vmem:[%s1966 + $0x768] sm:$0xff]
                %2443 = vst [vmem:[%s1967 + $0x2928] sm:$0xff] %v2442
                %v2444 = vld [vmem:[%s1966 + $0x770] sm:$0xff]
                %2445 = vst [vmem:[%s1967 + $0x2930] sm:$0xff] %v2444
                %v2446 = vld [vmem:[%s1966 + $0x778] sm:$0xff]
                %2447 = vst [vmem:[%s1967 + $0x2938] sm:$0xff] %v2446
              $region45: #{forward.13} parent=39 // loop_footer
                %s1965 = sadd.s32 1, %s1961
              $region46: #{forward.13} parent=39 // loop_footer_branch
                %1960 = sbr.rel target = $region42
              $region47: #{forward.13} parent=39 // loop_exit
                _
            $region40: #{forward.13} parent=35 // pred_fallthru
              _
            // Predicated region
            $region48: #{forward.13} parent=35 // pred_check
              _
            $region49: #{forward.13} parent=35 // pred_check_branch
              %2449 = sbr.rel target = $region51
            $region50: #{forward.13} parent=35 // pred_region
              _
            $region51: #{forward.13} parent=35 // pred_fallthru
              _
          $region36: #{forward.13} parent=31 // pred_fallthru
            _
          %2450 = vnop
        $region32: #{forward.13} parent=27 // pred_fallthru
          _
      $region28: #{forward.13} parent=5 // pred_fallthru
        _
      %p2451 = scmp.le.s32.totalorder 2, %s8
      // Predicated region
      $region52: #{forward.13} parent=5 // pred_check
        %p2452 = pneg %p2451
      $region53: #{forward.13} parent=5 // pred_check_branch
        %2454 = sbr.rel (%p2452) target = $region55
      $region54: #{forward.13} parent=5 // pred_region
        %s2455 = ssub.s32 %s8, 2
        // Predicated region
        $region56: #{forward.13} parent=54 // pred_check
          %p2456 = pneg %p84
        $region57: #{forward.13} parent=54 // pred_check_branch
          %2458 = sbr.rel (%p2456) target = $region59
        $region58: #{forward.13} parent=54 // pred_region
          %s2459 = sand.u32 %s69, 1
          %s2460 = sand.u32 %s69, 1
          %s2461 = smul.addr %s2460, 1920
          %s2462 = scalar_lea.vmem [#allocation2], %s2461
        $region59: #{forward.13} parent=54 // pred_fallthru
          _
      $region55: #{forward.13} parent=5 // pred_fallthru
        _
    $region6: #{forward.13} parent=1 // loop_footer
      %s12 = sadd.s32 1, %s8
    $region7: #{forward.13} parent=1 // loop_footer_branch
      %7 = sbr.rel target = $region3
    $region8: #{forward.13} parent=1 // loop_exit
      _

// kernel: forward.9
$region0: #{forward.9}
  #allocation0 [shape = 'u32[]', space=smem, size = 0x4, offset = 0x4, fixed_abs, tag = 'smem constant byte address 0x4 - core index']
  #allocation1 [shape = 'u32[144,128]{1,0:T(1,128)}', space=vmem, size = 0x12000, scoped, tag = 'internal scratch']
  %s0 = inlined_call_operand.vmem [shape: f32[32,16], index: 0, kind: input, shape index: {}]
  %s1 = inlined_call_operand.vmem [shape: f32[16,128], index: 1, kind: input, shape index: {}]
  %s2 = inlined_call_operand.vmem [shape: f32[32,128], index: 2, kind: output, shape index: {}]
  %s3 = sld [smem:[#allocation0]]
  $region18: #{forward.9} parent=0
    _
  %s5 = ssub.s32 1, %s3
  %s6 = scalar_select 0, %s5, %s3
  // Predicated region
  $region2: #{forward.9} parent=0 // pred_check
    _
  $region3: #{forward.9} parent=0 // pred_check_branch
    %8 = sbr.rel (0) target = $region5
  $region4: #{forward.9} parent=0 // pred_region
    _
  $region5: #{forward.9} parent=0 // pred_fallthru
    _
  // Predicated region
  $region6: #{forward.9} parent=0 // pred_check
    _
  $region7: #{forward.9} parent=0 // pred_check_branch
    %10 = sbr.rel (0) target = $region9
  $region8: #{forward.9} parent=0 // pred_region
    _
  $region9: #{forward.9} parent=0 // pred_fallthru
    _
  %v11 = vld [vmem:[%s0] sm:$0xff]
  %v12 = vld [vmem:[%s0 + $0x8] sm:$0xff]
  %v13 = vld [vmem:[%s0 + $0x10] sm:$0xff]
  %v14 = vld [vmem:[%s0 + $0x18] sm:$0xff]
  %v15 = vld [vmem:[%s1] sm:$0xff]
  %v16 = vld [vmem:[%s1 + $0x8] sm:$0xff]
  %vm17 = vcmask 130048
  %v19 = vsel %vm17, %v11, 0
  %v22 = vsel %vm17, %v12, 0
  %v25 = vsel %vm17, %v13, 0
  %v28 = vsel %vm17, %v14, 0
  %30 = vmatprep.subr.mxu0 0.0
  %31 = vmatpush1.msra.mxu0 %v15
  %32 = vmatprep.subr.mxu0 0.0
  %33 = vmatpush1.msra.mxu0 %v16
  %34 = vmatprep.subr.mxu0 0.0
  %35 = vmatpush1.msra.mxu0 0.0
  %36 = vmatprep.subr.mxu0 0.0
  %37 = vmatpush1.msra.mxu0 0.0
  %38 = vmatprep.subr.mxu0 0.0
  %39 = vmatpush1.msra.mxu0 0.0
  %40 = vmatprep.subr.mxu0 0.0
  %41 = vmatpush1.msra.mxu0 0.0
  %42 = vmatprep.subr.mxu0 0.0
  %43 = vmatpush1.msra.mxu0 0.0
  %44 = vmatprep.subr.mxu0 0.0
  %45 = vmatpush1.msra.mxu0 0.0
  %46 = vmatprep.subr.mxu0 0.0
  %47 = vmatpush1.msra.mxu0 0.0
  %48 = vmatprep.subr.mxu0 0.0
  %49 = vmatpush1.msra.mxu0 0.0
  %50 = vmatprep.subr.mxu0 0.0
  %51 = vmatpush1.msra.mxu0 0.0
  %52 = vmatprep.subr.mxu0 0.0
  %53 = vmatpush1.msra.mxu0 0.0
  %54 = vmatprep.subr.mxu0 0.0
  %55 = vmatpush1.msra.mxu0 0.0
  %56 = vmatprep.subr.mxu0 0.0
  %57 = vmatpush1.msra.mxu0 0.0
  %58 = vmatprep.subr.mxu0 0.0
  %59 = vmatpush1.msra.mxu0 0.0
  %60 = vmatprep.subr.mxu0 0.0
  %61 = vmatpush1.msra.mxu0 0.0
  %62 = vmatprep.subr.mxu0 0.0
  %63 = vmatpush1.msra.mxu0 0.0
  %64 = vmatprep.subr.mxu0 0.0
  %65 = vmatpush1.msra.mxu0 0.0
  %66 = vmatprep.subr.mxu0 0.0
  %67 = vmatpush1.msra.mxu0 0.0
  %68 = vmatprep.subr.mxu0 0.0
  %69 = vmatpush1.msra.mxu0 0.0
  %70 = vmatprep.subr.mxu0 0.0
  %71 = vmatpush1.msra.mxu0 0.0
  %72 = vmatprep.subr.mxu0 0.0
  %73 = vmatpush1.msra.mxu0 0.0
  %74 = vmatprep.subr.mxu0 0.0
  %75 = vmatpush1.msra.mxu0 0.0
  %76 = vmatprep.subr.mxu0 0.0
  %77 = vmatpush1.msra.mxu0 0.0
  %78 = vmatprep.subr.mxu0 0.0
  %79 = vmatpush1.msra.mxu0 0.0
  %80 = vmatprep.subr.mxu0 0.0
  %81 = vmatpush1.msra.mxu0 0.0
  %82 = vmatprep.subr.mxu0 0.0
  %83 = vmatpush1.msra.mxu0 0.0
  %84 = vmatprep.subr.mxu0 0.0
  %85 = vmatpush1.msra.mxu0 0.0
  %86 = vmatprep.subr.mxu0 0.0
  %87 = vmatpush1.msra.mxu0 0.0
  %88 = vmatprep.subr.mxu0 0.0
  %89 = vmatpush1.msra.mxu0 0.0
  %90 = vmatprep.subr.mxu0 0.0
  %91 = vmatpush1.msra.mxu0 0.0
  %92 = vmatprep.subr.mxu0 0.0
  %93 = vmatpush1.msra.mxu0 0.0
  %94 = vmatprep.mubr.f32.mxu0 0.0
  %95 = vmatmul.mubr.f32.gmra.mrb[0].mxu0 %v19
  %v96 = vpop.f32.mrb[0].mxu0
  %v97 = vadd.f32 0.0, %v96
  %v98 = vpop.f32.mrb[0].mxu0
  %99 = vmatprep.mubr.f32.mxu0 0.0
  %100 = vmatmul.mubr.f32.gmra.mrb[0].mxu0 %v22
  %v101 = vpop.f32.mrb[0].mxu0
  %v102 = vadd.f32 0.0, %v101
  %v103 = vpop.f32.mrb[0].mxu0
  %104 = vmatprep.mubr.f32.mxu0 0.0
  %105 = vmatmul.mubr.f32.gmra.mrb[0].mxu0 %v25
  %v106 = vpop.f32.mrb[0].mxu0
  %v107 = vadd.f32 0.0, %v106
  %v108 = vpop.f32.mrb[0].mxu0
  %109 = vmatprep.mubr.f32.mxu0 0.0
  %110 = vmatmul.mubr.f32.gmra.mrb[0].mxu0 %v28
  %v111 = vpop.f32.mrb[0].mxu0
  %v112 = vadd.f32 0.0, %v111
  %v113 = vpop.f32.mrb[0].mxu0
  %114 = vdwg.mxu0
  %115 = vst [vmem:[%s2] sm:$0xff] %v97
  %116 = vst [vmem:[%s2 + $0x8] sm:$0xff] %v102
  %117 = vst [vmem:[%s2 + $0x10] sm:$0xff] %v107
  %118 = vst [vmem:[%s2 + $0x18] sm:$0xff] %v112
  // Predicated region
  $region10: #{forward.9} parent=0 // pred_check
    _
  $region11: #{forward.9} parent=0 // pred_check_branch
    %120 = sbr.rel (0) target = $region13
  $region12: #{forward.9} parent=0 // pred_region
    _
  $region13: #{forward.9} parent=0 // pred_fallthru
    _
  // Predicated region
  $region14: #{forward.9} parent=0 // pred_check
    _
  $region15: #{forward.9} parent=0 // pred_check_branch
    %122 = sbr.rel (0) target = $region17
  $region16: #{forward.9} parent=0 // pred_region
    _
  $region17: #{forward.9} parent=0 // pred_fallthru
    _

// kernel: forward.10
$region0: #{forward.10}
  #allocation0 [shape = 'u32[]', space=smem, size = 0x4, offset = 0x4, fixed_abs, tag = 'smem constant byte address 0x4 - core index']
  #allocation1 [shape = 'u32[144,128]{1,0:T(1,128)}', space=vmem, size = 0x12000, scoped, tag = 'internal scratch']
  %s0 = inlined_call_operand.vmem [shape: f32[72,16], index: 0, kind: input, shape index: {}]
  %s1 = inlined_call_operand.vmem [shape: f32[16,256], index: 1, kind: input, shape index: {}]
  %s2 = inlined_call_operand.vmem [shape: f32[72,256], index: 2, kind: output, shape index: {}]
  %s3 = sld [smem:[#allocation0]]
  $region113: #{forward.10} parent=0
    _
  %s5 = ssub.s32 1, %s3
  %s6 = scalar_select 0, %s5, %s3
  $region1: #{forward.10} parent=0
    #allocation2 [shape = 'u8[16384]{0}', space=vmem, size = 0x4000, scoped, tag = 'input window, operand 1']
    #allocation3 [shape = 'u8[73728]{0}', space=vmem, size = 0x12000, scoped, tag = 'output window, operand 0']
    loop: start=0, step=1, limit=4
    $region2: #{forward.10} parent=1 // loop_pre_header
      _
    $region3: #{forward.10} parent=1 // loop_header
      %s8 = sphi 0, %s12
      %p9 = scmp.ge.s32.totalorder %s8, 4
      %s16 = sphi 0, %s16
      %s18 = sphi 0, %s16
      %s19 = sphi 0, %s18
      %s33 = sphi 0, %s19
      %s39 = sphi 0, %s41
      %s42 = sphi 0, %s39
      %s43 = sphi 0, %s42
      %s59 = sphi 0, %s43
      %s65 = sphi 0, %s67
      %s68 = sphi 0, %s65
      %s69 = sphi 0, %s68
      %s85 = sphi 0, %s69
    $region4: #{forward.10} parent=1 // loop_header_branch
      %11 = sbr.rel (%p9) target = $region8
    $region5: #{forward.10} parent=1 // loop_body
      %s13 = ssub.s32 %s8, 1
      %s14 = ssub.s32 %s8, 2
      %s15 = sadd.s32 %s8, 1
      %s17 = sadd.s32 %s16, 1
      %p20 = scmp.eq.s32.totalorder %s8, 1
      %p21 = scmp.ne.s32.totalorder %s16, %s18
      %p22 = scmp.eq.s32.totalorder %s8, 0
      %p23 = por %p21, %p22
      %p24 = scmp.ne.s32.totalorder %s16, %s18
      %p25 = scmp.eq.s32.totalorder %s13, 1
      %p26 = por %p24, %p25
      %p27 = scmp.ne.s32.totalorder %s18, %s19
      %p28 = scmp.eq.s32.totalorder %s13, 0
      %p29 = por %p27, %p28
      %p30 = scmp.ne.s32.totalorder %s18, %s19
      %p31 = scmp.eq.s32.totalorder %s14, 1
      %p32 = por %p30, %p31
      %p34 = scmp.ne.s32.totalorder %s19, %s33
      %p35 = scmp.eq.s32.totalorder %s14, 0
      %p36 = por %p34, %p35
      %s37 = ssub.s32 %s8, %s15
      %p38 = scmp.eq.s32.totalorder %s37, 0
      %s40 = sadd.s32 %s39, 1
      %s41 = scalar_select %p38, %s39, %s40
      %p44 = pneg %p38
      %p45 = scmp.eq.s32.totalorder %s8, 1
      %p46 = por %p44, %p45
      %p47 = scmp.ne.s32.totalorder %s39, %s42
      %p48 = scmp.eq.s32.totalorder %s8, 0
      %p49 = por %p47, %p48
      %p50 = scmp.ne.s32.totalorder %s39, %s42
      %p51 = scmp.eq.s32.totalorder %s13, 1
      %p52 = por %p50, %p51
      %p53 = scmp.ne.s32.totalorder %s42, %s43
      %p54 = scmp.eq.s32.totalorder %s13, 0
      %p55 = por %p53, %p54
      %p56 = scmp.ne.s32.totalorder %s42, %s43
      %p57 = scmp.eq.s32.totalorder %s14, 1
      %p58 = por %p56, %p57
      %p60 = scmp.ne.s32.totalorder %s43, %s59
      %p61 = scmp.eq.s32.totalorder %s14, 0
      %p62 = por %p60, %p61
      %s63 = ssub.s32 %s8, %s15
      %p64 = scmp.eq.s32.totalorder %s63, 0
      %s66 = sadd.s32 %s65, 1
      %s67 = scalar_select %p64, %s65, %s66
      %p70 = pneg %p64
      %p71 = scmp.eq.s32.totalorder %s8, 1
      %p72 = por %p70, %p71
      %p73 = scmp.ne.s32.totalorder %s65, %s68
      %p74 = scmp.eq.s32.totalorder %s8, 0
      %p75 = por %p73, %p74
      %p76 = scmp.ne.s32.totalorder %s65, %s68
      %p77 = scmp.eq.s32.totalorder %s13, 1
      %p78 = por %p76, %p77
      %p79 = scmp.ne.s32.totalorder %s68, %s69
      %p80 = scmp.eq.s32.totalorder %s13, 0
      %p81 = por %p79, %p80
      %p82 = scmp.ne.s32.totalorder %s68, %s69
      %p83 = scmp.eq.s32.totalorder %s14, 1
      %p84 = por %p82, %p83
      %p86 = scmp.ne.s32.totalorder %s69, %s85
      %p87 = scmp.eq.s32.totalorder %s14, 0
      %p88 = por %p86, %p87
      %p89 = scmp.le.s32.totalorder 1, %s8
      %p90 = scmp.lt.s32.totalorder %s8, 3
      %p91 = pnand %p89, %p90
      %p92 = pneg %p91
      // Predicated region
      $region9: #{forward.10} parent=5 // pred_check
        _
      $region10: #{forward.10} parent=5 // pred_check_branch
        %94 = sbr.rel (%p91) target = $region12
      $region11: #{forward.10} parent=5 // pred_region
        %s95 = ssub.s32 %s8, 1
        // Predicated region
        $region13: #{forward.10} parent=11 // pred_check
          %p96 = pneg %p29
        $region14: #{forward.10} parent=11 // pred_check_branch
          %98 = sbr.rel (%p96) target = $region16
        $region15: #{forward.10} parent=11 // pred_region
          _
        $region16: #{forward.10} parent=11 // pred_fallthru
          _
      $region12: #{forward.10} parent=5 // pred_fallthru
        _
      %p99 = scmp.lt.s32.totalorder %s8, 2
      // Predicated region
      $region17: #{forward.10} parent=5 // pred_check
        %p100 = pneg %p99
      $region18: #{forward.10} parent=5 // pred_check_branch
        %102 = sbr.rel (%p100) target = $region20
      $region19: #{forward.10} parent=5 // pred_region
        // Predicated region
        $region21: #{forward.10} parent=19 // pred_check
          %p103 = pneg %p49
        $region22: #{forward.10} parent=19 // pred_check_branch
          %105 = sbr.rel (%p103) target = $region24
        $region23: #{forward.10} parent=19 // pred_region
          %s106 = sand.u32 %s39, 1
          %s107 = sand.u32 %s39, 1
          %s108 = smul.addr %s107, 16
          %s109 = scalar_lea.vmem [#allocation2], %s108
          %s110 = smul.addr %s8, 8
          %s111 = scalar_lea.vmem %s1, %s110
          // Predicated region
          $region25: #{forward.10} parent=23 // pred_check
            _
          $region26: #{forward.10} parent=23 // pred_check_branch
            %113 = sbr.rel (0) target = $region28
          $region27: #{forward.10} parent=23 // pred_region
            // Predicated region
            $region29: #{forward.10} parent=27 // pred_check
              _
            $region30: #{forward.10} parent=27 // pred_check_branch
              %115 = sbr.rel (0) target = $region32
            $region31: #{forward.10} parent=27 // pred_region
              // Predicated region
              $region44: #{forward.10} parent=31 // pred_check
                _
              $region45: #{forward.10} parent=31 // pred_check_branch
                %132 = sbr.rel (0) target = $region47
              $region46: #{forward.10} parent=31 // pred_region
                loop: start=0, step=1, limit=1
                $region48: #{forward.10} parent=46 // loop_pre_header
                  _
                $region49: #{forward.10} parent=46 // loop_header
                  %s134 = sphi 0, %s138
                  %p135 = scmp.ge.s32.totalorder %s134, 1
                  %s139 = sphi %s111, %s111
                  %s140 = sphi %s109, %s109
                $region50: #{forward.10} parent=46 // loop_header_branch
                  %137 = sbr.rel (%p135) target = $region54
                $region51: #{forward.10} parent=46 // loop_body
                  %v141 = vld [vmem:[%s139] sm:$0xff]
                  %142 = vst [vmem:[%s140] sm:$0xff] %v141
                  %v143 = vld [vmem:[%s139 + $0x10] sm:$0xff]
                  %144 = vst [vmem:[%s140 + $0x8] sm:$0xff] %v143
                $region52: #{forward.10} parent=46 // loop_footer
                  %s138 = sadd.s32 1, %s134
                $region53: #{forward.10} parent=46 // loop_footer_branch
                  %133 = sbr.rel target = $region49
                $region54: #{forward.10} parent=46 // loop_exit
                  _
              $region47: #{forward.10} parent=31 // pred_fallthru
                _
              // Predicated region
              $region55: #{forward.10} parent=31 // pred_check
                _
              $region56: #{forward.10} parent=31 // pred_check_branch
                %146 = sbr.rel target = $region58
              $region57: #{forward.10} parent=31 // pred_region
                _
              $region58: #{forward.10} parent=31 // pred_fallthru
                _
            $region32: #{forward.10} parent=27 // pred_fallthru
              _
            // Predicated region
            $region33: #{forward.10} parent=27 // pred_check
              _
            $region34: #{forward.10} parent=27 // pred_check_branch
              %117 = sbr.rel target = $region36
            $region35: #{forward.10} parent=27 // pred_region
              loop: start=0, step=1, limit=1
              $region37: #{forward.10} parent=35 // loop_pre_header
                _
              $region38: #{forward.10} parent=35 // loop_header
                %s120 = sphi 0, %s124
                %p121 = scmp.ge.s32.totalorder %s120, 1
                %s125 = sphi %s111, %s111
                %s126 = sphi %s109, %s109
              $region39: #{forward.10} parent=35 // loop_header_branch
                %123 = sbr.rel (%p121) target = $region43
              $region40: #{forward.10} parent=35 // loop_body
                %v127 = vld [vmem:[%s125] sm:$0xff]
                %128 = vst [vmem:[%s126] sm:$0xff] %v127
                %v129 = vld [vmem:[%s125 + $0x10] sm:$0xff]
                %130 = vst [vmem:[%s126 + $0x8] sm:$0xff] %v129
              $region41: #{forward.10} parent=35 // loop_footer
                %s124 = sadd.s32 1, %s120
              $region42: #{forward.10} parent=35 // loop_footer_branch
                %119 = sbr.rel target = $region38
              $region43: #{forward.10} parent=35 // loop_exit
                _
            $region36: #{forward.10} parent=27 // pred_fallthru
              _
          $region28: #{forward.10} parent=23 // pred_fallthru
            _
          %147 = vnop
        $region24: #{forward.10} parent=19 // pred_fallthru
          _
      $region20: #{forward.10} parent=5 // pred_fallthru
        _
      %p148 = scmp.le.s32.totalorder 1, %s8
      %p149 = scmp.lt.s32.totalorder %s8, 3
      %p150 = pnand %p148, %p149
      %p151 = pneg %p150
      // Predicated region
      $region59: #{forward.10} parent=5 // pred_check
        _
      $region60: #{forward.10} parent=5 // pred_check_branch
        %153 = sbr.rel (%p150) target = $region62
      $region61: #{forward.10} parent=5 // pred_region
        %s154 = ssub.s32 %s8, 1
        %s155 = sand.u32 %s42, 1
        %s156 = sand.u32 %s42, 1
        %s157 = smul.addr %s156, 16
        %s158 = scalar_lea.vmem [#allocation2], %s157
        // Predicated region
        $region63: #{forward.10} parent=61 // pred_check
          %p159 = pneg %p55
        $region64: #{forward.10} parent=61 // pred_check_branch
          %161 = sbr.rel (%p159) target = $region66
        $region65: #{forward.10} parent=61 // pred_region
          _
        $region66: #{forward.10} parent=61 // pred_fallthru
          _
        %p162 = pneg %p29
        %p163 = pneg %p26
        %s164 = sand.u32 %s42, 1
        %s165 = sand.u32 %s42, 1
        %s166 = smul.addr %s165, 16
        %s167 = scalar_lea.vmem [#allocation2], %s166
        %p168 = pneg %p55
        %p169 = pneg %p52
        %p170 = pneg %p81
        %p171 = pneg %p78
        %s172 = sand.u32 %s68, 1
        %s173 = sand.u32 %s68, 1
        %s174 = smul.addr %s173, 72
        %s175 = scalar_lea.vmem [#allocation3], %s174
        %v176 = vld [vmem:[%s0] sm:$0xff]
        %v177 = vld [vmem:[%s0 + $0x8] sm:$0xff]
        %v178 = vld [vmem:[%s0 + $0x10] sm:$0xff]
        %v179 = vld [vmem:[%s0 + $0x18] sm:$0xff]
        %v180 = vld [vmem:[%s0 + $0x20] sm:$0xff]
        %v181 = vld [vmem:[%s0 + $0x28] sm:$0xff]
        %v182 = vld [vmem:[%s0 + $0x30] sm:$0xff]
        %v183 = vld [vmem:[%s0 + $0x38] sm:$0xff]
        %v184 = vld [vmem:[%s0 + $0x40] sm:$0xff]
        %v185 = vld [vmem:[%s158] sm:$0xff]
        %v186 = vld [vmem:[%s158 + $0x8] sm:$0xff]
        %vm187 = vcmask 130048
        %v189 = vsel %vm187, %v176, 0
        %v192 = vsel %vm187, %v177, 0
        %v195 = vsel %vm187, %v178, 0
        %v198 = vsel %vm187, %v179, 0
        %v201 = vsel %vm187, %v180, 0
        %v204 = vsel %vm187, %v181, 0
        %v207 = vsel %vm187, %v182, 0
        %v210 = vsel %vm187, %v183, 0
        %v213 = vsel %vm187, %v184, 0
        %215 = vmatprep.subr.mxu0 0.0
        %216 = vmatpush1.msra.mxu0 %v185
        %217 = vmatprep.subr.mxu0 0.0
        %218 = vmatpush1.msra.mxu0 %v186
        %219 = vmatprep.subr.mxu0 0.0
        %220 = vmatpush1.msra.mxu0 0.0
        %221 = vmatprep.subr.mxu0 0.0
        %222 = vmatpush1.msra.mxu0 0.0
        %223 = vmatprep.subr.mxu0 0.0
        %224 = vmatpush1.msra.mxu0 0.0
        %225 = vmatprep.subr.mxu0 0.0
        %226 = vmatpush1.msra.mxu0 0.0
        %227 = vmatprep.subr.mxu0 0.0
        %228 = vmatpush1.msra.mxu0 0.0
        %229 = vmatprep.subr.mxu0 0.0
        %230 = vmatpush1.msra.mxu0 0.0
        %231 = vmatprep.subr.mxu0 0.0
        %232 = vmatpush1.msra.mxu0 0.0
        %233 = vmatprep.subr.mxu0 0.0
        %234 = vmatpush1.msra.mxu0 0.0
        %235 = vmatprep.subr.mxu0 0.0
        %236 = vmatpush1.msra.mxu0 0.0
        %237 = vmatprep.subr.mxu0 0.0
        %238 = vmatpush1.msra.mxu0 0.0
        %239 = vmatprep.subr.mxu0 0.0
        %240 = vmatpush1.msra.mxu0 0.0
        %241 = vmatprep.subr.mxu0 0.0
        %242 = vmatpush1.msra.mxu0 0.0
        %243 = vmatprep.subr.mxu0 0.0
        %244 = vmatpush1.msra.mxu0 0.0
        %245 = vmatprep.subr.mxu0 0.0
        %246 = vmatpush1.msra.mxu0 0.0
        %247 = vmatprep.subr.mxu0 0.0
        %248 = vmatpush1.msra.mxu0 0.0
        %249 = vmatprep.subr.mxu0 0.0
        %250 = vmatpush1.msra.mxu0 0.0
        %251 = vmatprep.subr.mxu0 0.0
        %252 = vmatpush1.msra.mxu0 0.0
        %253 = vmatprep.subr.mxu0 0.0
        %254 = vmatpush1.msra.mxu0 0.0
        %255 = vmatprep.subr.mxu0 0.0
        %256 = vmatpush1.msra.mxu0 0.0
        %257 = vmatprep.subr.mxu0 0.0
        %258 = vmatpush1.msra.mxu0 0.0
        %259 = vmatprep.subr.mxu0 0.0
        %260 = vmatpush1.msra.mxu0 0.0
        %261 = vmatprep.subr.mxu0 0.0
        %262 = vmatpush1.msra.mxu0 0.0
        %263 = vmatprep.subr.mxu0 0.0
        %264 = vmatpush1.msra.mxu0 0.0
        %265 = vmatprep.subr.mxu0 0.0
        %266 = vmatpush1.msra.mxu0 0.0
        %267 = vmatprep.subr.mxu0 0.0
        %268 = vmatpush1.msra.mxu0 0.0
        %269 = vmatprep.subr.mxu0 0.0
        %270 = vmatpush1.msra.mxu0 0.0
        %271 = vmatprep.subr.mxu0 0.0
        %272 = vmatpush1.msra.mxu0 0.0
        %273 = vmatprep.subr.mxu0 0.0
        %274 = vmatpush1.msra.mxu0 0.0
        %275 = vmatprep.subr.mxu0 0.0
        %276 = vmatpush1.msra.mxu0 0.0
        %277 = vmatprep.subr.mxu0 0.0
        %278 = vmatpush1.msra.mxu0 0.0
        %279 = vmatprep.mubr.f32.mxu0 0.0
        %280 = vmatmul.mubr.f32.gmra.mrb[0].mxu0 %v189
        %v281 = vpop.f32.mrb[0].mxu0
        %v282 = vadd.f32 0.0, %v281
        %v283 = vpop.f32.mrb[0].mxu0
        %284 = vmatprep.mubr.f32.mxu0 0.0
        %285 = vmatmul.mubr.f32.gmra.mrb[0].mxu0 %v192
        %v286 = vpop.f32.mrb[0].mxu0
        %v287 = vadd.f32 0.0, %v286
        %v288 = vpop.f32.mrb[0].mxu0
        %289 = vmatprep.mubr.f32.mxu0 0.0
        %290 = vmatmul.mubr.f32.gmra.mrb[0].mxu0 %v195
        %v291 = vpop.f32.mrb[0].mxu0
        %v292 = vadd.f32 0.0, %v291
        %v293 = vpop.f32.mrb[0].mxu0
        %294 = vmatprep.mubr.f32.mxu0 0.0
        %295 = vmatmul.mubr.f32.gmra.mrb[0].mxu0 %v198
        %v296 = vpop.f32.mrb[0].mxu0
        %v297 = vadd.f32 0.0, %v296
        %v298 = vpop.f32.mrb[0].mxu0
        %299 = vmatprep.mubr.f32.mxu0 0.0
        %300 = vmatmul.mubr.f32.gmra.mrb[0].mxu0 %v201
        %v301 = vpop.f32.mrb[0].mxu0
        %v302 = vadd.f32 0.0, %v301
        %v303 = vpop.f32.mrb[0].mxu0
        %304 = vmatprep.mubr.f32.mxu0 0.0
        %305 = vmatmul.mubr.f32.gmra.mrb[0].mxu0 %v204
        %v306 = vpop.f32.mrb[0].mxu0
        %v307 = vadd.f32 0.0, %v306
        %v308 = vpop.f32.mrb[0].mxu0
        %309 = vmatprep.mubr.f32.mxu0 0.0
        %310 = vmatmul.mubr.f32.gmra.mrb[0].mxu0 %v207
        %v311 = vpop.f32.mrb[0].mxu0
        %v312 = vadd.f32 0.0, %v311
        %v313 = vpop.f32.mrb[0].mxu0
        %314 = vmatprep.mubr.f32.mxu0 0.0
        %315 = vmatmul.mubr.f32.gmra.mrb[0].mxu0 %v210
        %v316 = vpop.f32.mrb[0].mxu0
        %v317 = vadd.f32 0.0, %v316
        %v318 = vpop.f32.mrb[0].mxu0
        %319 = vmatprep.mubr.f32.mxu0 0.0
        %320 = vmatmul.mubr.f32.gmra.mrb[0].mxu0 %v213
        %v321 = vpop.f32.mrb[0].mxu0
        %v322 = vadd.f32 0.0, %v321
        %v323 = vpop.f32.mrb[0].mxu0
        %324 = vdwg.mxu0
        %325 = vst [vmem:[%s175] sm:$0xff] %v282
        %326 = vst [vmem:[%s175 + $0x8] sm:$0xff] %v287
        %327 = vst [vmem:[%s175 + $0x10] sm:$0xff] %v292
        %328 = vst [vmem:[%s175 + $0x18] sm:$0xff] %v297
        %329 = vst [vmem:[%s175 + $0x20] sm:$0xff] %v302
        %330 = vst [vmem:[%s175 + $0x28] sm:$0xff] %v307
        %331 = vst [vmem:[%s175 + $0x30] sm:$0xff] %v312
        %332 = vst [vmem:[%s175 + $0x38] sm:$0xff] %v317
        %333 = vst [vmem:[%s175 + $0x40] sm:$0xff] %v322
        %s334 = sand.u32 %s68, 1
        %s335 = sand.u32 %s68, 1
        %s336 = smul.addr %s335, 72
        %s337 = scalar_lea.vmem [#allocation3], %s336
        // Predicated region
        $region67: #{forward.10} parent=61 // pred_check
          %p338 = pneg %p78
        $region68: #{forward.10} parent=61 // pred_check_branch
          %340 = sbr.rel (%p338) target = $region70
        $region69: #{forward.10} parent=61 // pred_region
          %s341 = smul.addr %s13, 8
          %s342 = scalar_lea.vmem %s2, %s341
          // Predicated region
          $region71: #{forward.10} parent=69 // pred_check
            _
          $region72: #{forward.10} parent=69 // pred_check_branch
            %344 = sbr.rel (0) target = $region74
          $region73: #{forward.10} parent=69 // pred_region
            // Predicated region
            $region75: #{forward.10} parent=73 // pred_check
              _
            $region76: #{forward.10} parent=73 // pred_check_branch
              %346 = sbr.rel (0) target = $region78
            $region77: #{forward.10} parent=73 // pred_region
              // Predicated region
              $region90: #{forward.10} parent=77 // pred_check
                _
              $region91: #{forward.10} parent=77 // pred_check_branch
                %377 = sbr.rel (0) target = $region93
              $region92: #{forward.10} parent=77 // pred_region
                loop: start=0, step=1, limit=1
                $region94: #{forward.10} parent=92 // loop_pre_header
                  _
                $region95: #{forward.10} parent=92 // loop_header
                  %s379 = sphi 0, %s383
                  %p380 = scmp.ge.s32.totalorder %s379, 1
                  %s384 = sphi %s337, %s337
                  %s385 = sphi %s342, %s342
                $region96: #{forward.10} parent=92 // loop_header_branch
                  %382 = sbr.rel (%p380) target = $region100
                $region97: #{forward.10} parent=92 // loop_body
                  %v386 = vld [vmem:[%s384] sm:$0xff]
                  %387 = vst [vmem:[%s385] sm:$0xff] %v386
                  %v388 = vld [vmem:[%s384 + $0x8] sm:$0xff]
                  %389 = vst [vmem:[%s385 + $0x10] sm:$0xff] %v388
                  %v390 = vld [vmem:[%s384 + $0x10] sm:$0xff]
                  %391 = vst [vmem:[%s385 + $0x20] sm:$0xff] %v390
                  %v392 = vld [vmem:[%s384 + $0x18] sm:$0xff]
                  %393 = vst [vmem:[%s385 + $0x30] sm:$0xff] %v392
                  %v394 = vld [vmem:[%s384 + $0x20] sm:$0xff]
                  %395 = vst [vmem:[%s385 + $0x40] sm:$0xff] %v394
                  %v396 = vld [vmem:[%s384 + $0x28] sm:$0xff]
                  %397 = vst [vmem:[%s385 + $0x50] sm:$0xff] %v396
                  %v398 = vld [vmem:[%s384 + $0x30] sm:$0xff]
                  %399 = vst [vmem:[%s385 + $0x60] sm:$0xff] %v398
                  %v400 = vld [vmem:[%s384 + $0x38] sm:$0xff]
                  %401 = vst [vmem:[%s385 + $0x70] sm:$0xff] %v400
                  %v402 = vld [vmem:[%s384 + $0x40] sm:$0xff]
                  %403 = vst [vmem:[%s385 + $0x80] sm:$0xff] %v402
                $region98: #{forward.10} parent=92 // loop_footer
                  %s383 = sadd.s32 1, %s379
                $region99: #{forward.10} parent=92 // loop_footer_branch
                  %378 = sbr.rel target = $region95
                $region100: #{forward.10} parent=92 // loop_exit
                  _
              $region93: #{forward.10} parent=77 // pred_fallthru
                _
              // Predicated region
              $region101: #{forward.10} parent=77 // pred_check
                _
              $region102: #{forward.10} parent=77 // pred_check_branch
                %405 = sbr.rel target = $region104
              $region103: #{forward.10} parent=77 // pred_region
                _
              $region104: #{forward.10} parent=77 // pred_fallthru
                _
            $region78: #{forward.10} parent=73 // pred_fallthru
              _
            // Predicated region
            $region79: #{forward.10} parent=73 // pred_check
              _
            $region80: #{forward.10} parent=73 // pred_check_branch
              %348 = sbr.rel target = $region82
            $region81: #{forward.10} parent=73 // pred_region
              loop: start=0, step=1, limit=1
              $region83: #{forward.10} parent=81 // loop_pre_header
                _
              $region84: #{forward.10} parent=81 // loop_header
                %s351 = sphi 0, %s355
                %p352 = scmp.ge.s32.totalorder %s351, 1
                %s356 = sphi %s337, %s337
                %s357 = sphi %s342, %s342
              $region85: #{forward.10} parent=81 // loop_header_branch
                %354 = sbr.rel (%p352) target = $region89
              $region86: #{forward.10} parent=81 // loop_body
                %v358 = vld [vmem:[%s356] sm:$0xff]
                %359 = vst [vmem:[%s357] sm:$0xff] %v358
                %v360 = vld [vmem:[%s356 + $0x8] sm:$0xff]
                %361 = vst [vmem:[%s357 + $0x10] sm:$0xff] %v360
                %v362 = vld [vmem:[%s356 + $0x10] sm:$0xff]
                %363 = vst [vmem:[%s357 + $0x20] sm:$0xff] %v362
                %v364 = vld [vmem:[%s356 + $0x18] sm:$0xff]
                %365 = vst [vmem:[%s357 + $0x30] sm:$0xff] %v364
                %v366 = vld [vmem:[%s356 + $0x20] sm:$0xff]
                %367 = vst [vmem:[%s357 + $0x40] sm:$0xff] %v366
                %v368 = vld [vmem:[%s356 + $0x28] sm:$0xff]
                %369 = vst [vmem:[%s357 + $0x50] sm:$0xff] %v368
                %v370 = vld [vmem:[%s356 + $0x30] sm:$0xff]
                %371 = vst [vmem:[%s357 + $0x60] sm:$0xff] %v370
                %v372 = vld [vmem:[%s356 + $0x38] sm:$0xff]
                %373 = vst [vmem:[%s357 + $0x70] sm:$0xff] %v372
                %v374 = vld [vmem:[%s356 + $0x40] sm:$0xff]
                %375 = vst [vmem:[%s357 + $0x80] sm:$0xff] %v374
              $region87: #{forward.10} parent=81 // loop_footer
                %s355 = sadd.s32 1, %s351
              $region88: #{forward.10} parent=81 // loop_footer_branch
                %350 = sbr.rel target = $region84
              $region89: #{forward.10} parent=81 // loop_exit
                _
            $region82: #{forward.10} parent=73 // pred_fallthru
              _
          $region74: #{forward.10} parent=69 // pred_fallthru
            _
          %406 = vnop
        $region70: #{forward.10} parent=61 // pred_fallthru
          _
      $region62: #{forward.10} parent=5 // pred_fallthru
        _
      %p407 = scmp.le.s32.totalorder 2, %s8
      // Predicated region
      $region105: #{forward.10} parent=5 // pred_check
        %p408 = pneg %p407
      $region106: #{forward.10} parent=5 // pred_check_branch
        %410 = sbr.rel (%p408) target = $region108
      $region107: #{forward.10} parent=5 // pred_region
        %s411 = ssub.s32 %s8, 2
        // Predicated region
        $region109: #{forward.10} parent=107 // pred_check
          %p412 = pneg %p84
        $region110: #{forward.10} parent=107 // pred_check_branch
          %414 = sbr.rel (%p412) target = $region112
        $region111: #{forward.10} parent=107 // pred_region
          %s415 = sand.u32 %s69, 1
          %s416 = sand.u32 %s69, 1
          %s417 = smul.addr %s416, 72
          %s418 = scalar_lea.vmem [#allocation3], %s417
        $region112: #{forward.10} parent=107 // pred_fallthru
          _
      $region108: #{forward.10} parent=5 // pred_fallthru
        _
    $region6: #{forward.10} parent=1 // loop_footer
      %s12 = sadd.s32 1, %s8
    $region7: #{forward.10} parent=1 // loop_footer_branch
      %7 = sbr.rel target = $region3
    $region8: #{forward.10} parent=1 // loop_exit
      _

// kernel: forward.14
$region0: #{forward.14}
  #allocation0 [shape = 'u32[]', space=smem, size = 0x4, offset = 0x4, fixed_abs, tag = 'smem constant byte address 0x4 - core index']
  #allocation1 [shape = 'u32[144,128]{1,0:T(1,128)}', space=vmem, size = 0x12000, scoped, tag = 'internal scratch']
  %s0 = inlined_call_operand.vmem [shape: f32[17,12], index: 0, kind: input, shape index: {}]
  %s1 = inlined_call_operand.vmem [shape: f32[12,96], index: 1, kind: input, shape index: {}]
  %s2 = inlined_call_operand.vmem [shape: f32[17,96], index: 2, kind: output, shape index: {}]
  %s3 = sld [smem:[#allocation0]]
  $region18: #{forward.14} parent=0
    _
  %s5 = ssub.s32 1, %s3
  %s6 = scalar_select 0, %s5, %s3
  // Predicated region
  $region2: #{forward.14} parent=0 // pred_check
    _
  $region3: #{forward.14} parent=0 // pred_check_branch
    %8 = sbr.rel (0) target = $region5
  $region4: #{forward.14} parent=0 // pred_region
    _
  $region5: #{forward.14} parent=0 // pred_fallthru
    _
  // Predicated region
  $region6: #{forward.14} parent=0 // pred_check
    _
  $region7: #{forward.14} parent=0 // pred_check_branch
    %10 = sbr.rel (0) target = $region9
  $region8: #{forward.14} parent=0 // pred_region
    _
  $region9: #{forward.14} parent=0 // pred_fallthru
    _
  %v11 = vld [vmem:[%s0] sm:$0xff]
  %v12 = vld [vmem:[%s0 + $0x8] sm:$0xff]
  %v13 = vld [vmem:[%s0 + $0x10] sm:$0x1]
  %v14 = vld [vmem:[%s1] sm:$0xff]
  %v15 = vld [vmem:[%s1 + $0x8] sm:$0xf]
  %vm16 = vcmask 97280
  %v18 = vsel %vm16, %v11, 0
  %v21 = vsel %vm16, %v12, 0
  %v24 = vsel %vm16, %v13, 0
  %vm26 = vcmask 1043456
  %v28 = vsel %vm26, %v15, 0
  %30 = vmatprep.subr.mxu0 0.0
  %31 = vmatpush1.msra.mxu0 %v14
  %32 = vmatprep.subr.mxu0 0.0
  %33 = vmatpush1.msra.mxu0 %v28
  %34 = vmatprep.subr.mxu0 0.0
  %35 = vmatpush1.msra.mxu0 0.0
  %36 = vmatprep.subr.mxu0 0.0
  %37 = vmatpush1.msra.mxu0 0.0
  %38 = vmatprep.subr.mxu0 0.0
  %39 = vmatpush1.msra.mxu0 0.0
  %40 = vmatprep.subr.mxu0 0.0
  %41 = vmatpush1.msra.mxu0 0.0
  %42 = vmatprep.subr.mxu0 0.0
  %43 = vmatpush1.msra.mxu0 0.0
  %44 = vmatprep.subr.mxu0 0.0
  %45 = vmatpush1.msra.mxu0 0.0
  %46 = vmatprep.subr.mxu0 0.0
  %47 = vmatpush1.msra.mxu0 0.0
  %48 = vmatprep.subr.mxu0 0.0
  %49 = vmatpush1.msra.mxu0 0.0
  %50 = vmatprep.subr.mxu0 0.0
  %51 = vmatpush1.msra.mxu0 0.0
  %52 = vmatprep.subr.mxu0 0.0
  %53 = vmatpush1.msra.mxu0 0.0
  %54 = vmatprep.subr.mxu0 0.0
  %55 = vmatpush1.msra.mxu0 0.0
  %56 = vmatprep.subr.mxu0 0.0
  %57 = vmatpush1.msra.mxu0 0.0
  %58 = vmatprep.subr.mxu0 0.0
  %59 = vmatpush1.msra.mxu0 0.0
  %60 = vmatprep.subr.mxu0 0.0
  %61 = vmatpush1.msra.mxu0 0.0
  %62 = vmatprep.subr.mxu0 0.0
  %63 = vmatpush1.msra.mxu0 0.0
  %64 = vmatprep.subr.mxu0 0.0
  %65 = vmatpush1.msra.mxu0 0.0
  %66 = vmatprep.subr.mxu0 0.0
  %67 = vmatpush1.msra.mxu0 0.0
  %68 = vmatprep.subr.mxu0 0.0
  %69 = vmatpush1.msra.mxu0 0.0
  %70 = vmatprep.subr.mxu0 0.0
  %71 = vmatpush1.msra.mxu0 0.0
  %72 = vmatprep.subr.mxu0 0.0
  %73 = vmatpush1.msra.mxu0 0.0
  %74 = vmatprep.subr.mxu0 0.0
  %75 = vmatpush1.msra.mxu0 0.0
  %76 = vmatprep.subr.mxu0 0.0
  %77 = vmatpush1.msra.mxu0 0.0
  %78 = vmatprep.subr.mxu0 0.0
  %79 = vmatpush1.msra.mxu0 0.0
  %80 = vmatprep.subr.mxu0 0.0
  %81 = vmatpush1.msra.mxu0 0.0
  %82 = vmatprep.subr.mxu0 0.0
  %83 = vmatpush1.msra.mxu0 0.0
  %84 = vmatprep.subr.mxu0 0.0
  %85 = vmatpush1.msra.mxu0 0.0
  %86 = vmatprep.subr.mxu0 0.0
  %87 = vmatpush1.msra.mxu0 0.0
  %88 = vmatprep.subr.mxu0 0.0
  %89 = vmatpush1.msra.mxu0 0.0
  %90 = vmatprep.subr.mxu0 0.0
  %91 = vmatpush1.msra.mxu0 0.0
  %92 = vmatprep.subr.mxu0 0.0
  %93 = vmatpush1.msra.mxu0 0.0
  %94 = vmatprep.mubr.f32.mxu0 0.0
  %95 = vmatmul.mubr.f32.gmra.mrb[0].mxu0 %v18
  %v96 = vpop.f32.mrb[0].mxu0
  %v97 = vadd.f32 0.0, %v96
  %v98 = vpop.f32.mrb[0].mxu0
  %99 = vmatprep.mubr.f32.mxu0 0.0
  %100 = vmatmul.mubr.f32.gmra.mrb[0].mxu0 %v21
  %v101 = vpop.f32.mrb[0].mxu0
  %v102 = vadd.f32 0.0, %v101
  %v103 = vpop.f32.mrb[0].mxu0
  %104 = vmatprep.mubr.f32.mxu0 0.0
  %105 = vmatmul.mubr.f32.gmra.mrb[0].mxu0 %v24
  %v106 = vpop.f32.mrb[0].mxu0
  %v107 = vadd.f32 0.0, %v106
  %v108 = vpop.f32.mrb[0].mxu0
  %109 = vdwg.mxu0
  %vm110 = vcmask 785408
  %111 = vst.msk [vmem:[%s2] sm:$0xff] %vm110, %v97
  %112 = vst.msk [vmem:[%s2 + $0x8] sm:$0xff] %vm110, %v102
  %vm113 = vcmask 778240
  %114 = vst.msk [vmem:[%s2 + $0x10] sm:$0x1] %vm113, %v107
  // Predicated region
  $region10: #{forward.14} parent=0 // pred_check
    _
  $region11: #{forward.14} parent=0 // pred_check_branch
    %116 = sbr.rel (0) target = $region13
  $region12: #{forward.14} parent=0 // pred_region
    _
  $region13: #{forward.14} parent=0 // pred_fallthru
    _
  // Predicated region
  $region14: #{forward.14} parent=0 // pred_check
    _
  $region15: #{forward.14} parent=0 // pred_check_branch
    %118 = sbr.rel (0) target = $region17
  $region16: #{forward.14} parent=0 // pred_region
    _
  $region17: #{forward.14} parent=0 // pred_fallthru
    _

// kernel: forward.15
$region0: #{forward.15}
  #allocation0 [shape = 'u32[]', space=smem, size = 0x4, offset = 0x4, fixed_abs, tag = 'smem constant byte address 0x4 - core index']
  #allocation1 [shape = 'u32[144,128]{1,0:T(1,128)}', space=vmem, size = 0x12000, scoped, tag = 'internal scratch']
  %s0 = inlined_call_operand.vmem [shape: f32[17,12], index: 0, kind: input, shape index: {}]
  %s1 = inlined_call_operand.vmem [shape: f32[12,136], index: 1, kind: input, shape index: {}]
  %s2 = inlined_call_operand.vmem [shape: f32[17,136], index: 2, kind: output, shape index: {}]
  %s3 = sld [smem:[#allocation0]]
  $region18: #{forward.15} parent=0
    _
  %s5 = ssub.s32 1, %s3
  %s6 = scalar_select 0, %s5, %s3
  // Predicated region
  $region2: #{forward.15} parent=0 // pred_check
    _
  $region3: #{forward.15} parent=0 // pred_check_branch
    %8 = sbr.rel (0) target = $region5
  $region4: #{forward.15} parent=0 // pred_region
    _
  $region5: #{forward.15} parent=0 // pred_fallthru
    _
  // Predicated region
  $region6: #{forward.15} parent=0 // pred_check
    _
  $region7: #{forward.15} parent=0 // pred_check_branch
    %10 = sbr.rel (0) target = $region9
  $region8: #{forward.15} parent=0 // pred_region
    _
  $region9: #{forward.15} parent=0 // pred_fallthru
    _
  %v11 = vld [vmem:[%s0] sm:$0xff]
  %v12 = vld [vmem:[%s0 + $0x8] sm:$0xff]
  %v13 = vld [vmem:[%s0 + $0x10] sm:$0x1]
  %v14 = vld [vmem:[%s1] sm:$0xff]
  %v15 = vld [vmem:[%s1 + $0x8] sm:$0xff]
  %v16 = vld [vmem:[%s1 + $0x10] sm:$0xf]
  %v17 = vld [vmem:[%s1 + $0x18] sm:$0xf]
  %vm18 = vcmask 97280
  %v20 = vsel %vm18, %v11, 0
  %v23 = vsel %vm18, %v12, 0
  %v26 = vsel %vm18, %v13, 0
  %vm28 = vcmask 1043456
  %v30 = vsel %vm28, %v16, 0
  %v33 = vsel %vm28, %v17, 0
  %35 = vmatprep.subr.mxu0 %v15
  %36 = vmatpush1.msra.mxu0 %v14
  %37 = vmatprep.subr.mxu0 %v33
  %38 = vmatpush1.msra.mxu0 %v30
  %39 = vmatprep.subr.mxu0 0.0
  %40 = vmatpush1.msra.mxu0 0.0
  %41 = vmatprep.subr.mxu0 0.0
  %42 = vmatpush1.msra.mxu0 0.0
  %43 = vmatprep.subr.mxu0 0.0
  %44 = vmatpush1.msra.mxu0 0.0
  %45 = vmatprep.subr.mxu0 0.0
  %46 = vmatpush1.msra.mxu0 0.0
  %47 = vmatprep.subr.mxu0 0.0
  %48 = vmatpush1.msra.mxu0 0.0
  %49 = vmatprep.subr.mxu0 0.0
  %50 = vmatpush1.msra.mxu0 0.0
  %51 = vmatprep.subr.mxu0 0.0
  %52 = vmatpush1.msra.mxu0 0.0
  %53 = vmatprep.subr.mxu0 0.0
  %54 = vmatpush1.msra.mxu0 0.0
  %55 = vmatprep.subr.mxu0 0.0
  %56 = vmatpush1.msra.mxu0 0.0
  %57 = vmatprep.subr.mxu0 0.0
  %58 = vmatpush1.msra.mxu0 0.0
  %59 = vmatprep.subr.mxu0 0.0
  %60 = vmatpush1.msra.mxu0 0.0
  %61 = vmatprep.subr.mxu0 0.0
  %62 = vmatpush1.msra.mxu0 0.0
  %63 = vmatprep.subr.mxu0 0.0
  %64 = vmatpush1.msra.mxu0 0.0
  %65 = vmatprep.subr.mxu0 0.0
  %66 = vmatpush1.msra.mxu0 0.0
  %67 = vmatprep.subr.mxu0 0.0
  %68 = vmatpush1.msra.mxu0 0.0
  %69 = vmatprep.subr.mxu0 0.0
  %70 = vmatpush1.msra.mxu0 0.0
  %71 = vmatprep.subr.mxu0 0.0
  %72 = vmatpush1.msra.mxu0 0.0
  %73 = vmatprep.subr.mxu0 0.0
  %74 = vmatpush1.msra.mxu0 0.0
  %75 = vmatprep.subr.mxu0 0.0
  %76 = vmatpush1.msra.mxu0 0.0
  %77 = vmatprep.subr.mxu0 0.0
  %78 = vmatpush1.msra.mxu0 0.0
  %79 = vmatprep.subr.mxu0 0.0
  %80 = vmatpush1.msra.mxu0 0.0
  %81 = vmatprep.subr.mxu0 0.0
  %82 = vmatpush1.msra.mxu0 0.0
  %83 = vmatprep.subr.mxu0 0.0
  %84 = vmatpush1.msra.mxu0 0.0
  %85 = vmatprep.subr.mxu0 0.0
  %86 = vmatpush1.msra.mxu0 0.0
  %87 = vmatprep.subr.mxu0 0.0
  %88 = vmatpush1.msra.mxu0 0.0
  %89 = vmatprep.subr.mxu0 0.0
  %90 = vmatpush1.msra.mxu0 0.0
  %91 = vmatprep.subr.mxu0 0.0
  %92 = vmatpush1.msra.mxu0 0.0
  %93 = vmatprep.subr.mxu0 0.0
  %94 = vmatpush1.msra.mxu0 0.0
  %95 = vmatprep.subr.mxu0 0.0
  %96 = vmatpush1.msra.mxu0 0.0
  %97 = vmatprep.subr.mxu0 0.0
  %98 = vmatpush1.msra.mxu0 0.0
  %99 = vmatprep.mubr.f32.mxu0 0.0
  %100 = vmatmul.mubr.f32.gmra.mrb[0].mxu0 %v20
  %v101 = vpop.f32.mrb[0].mxu0
  %v102 = vadd.f32 0.0, %v101
  %v103 = vpop.f32.mrb[0].mxu0
  %v104 = vadd.f32 0.0, %v103
  %105 = vmatprep.mubr.f32.mxu0 0.0
  %106 = vmatmul.mubr.f32.gmra.mrb[0].mxu0 %v23
  %v107 = vpop.f32.mrb[0].mxu0
  %v108 = vadd.f32 0.0, %v107
  %v109 = vpop.f32.mrb[0].mxu0
  %v110 = vadd.f32 0.0, %v109
  %111 = vmatprep.mubr.f32.mxu0 0.0
  %112 = vmatmul.mubr.f32.gmra.mrb[0].mxu0 %v26
  %v113 = vpop.f32.mrb[0].mxu0
  %v114 = vadd.f32 0.0, %v113
  %v115 = vpop.f32.mrb[0].mxu0
  %v116 = vadd.f32 0.0, %v115
  %117 = vdwg.mxu0
  %118 = vst [vmem:[%s2] sm:$0xff] %v102
  %vm119 = vcmask 64512
  %120 = vst.msk [vmem:[%s2 + $0x8] sm:$0xff] %vm119, %v104
  %121 = vst [vmem:[%s2 + $0x10] sm:$0xff] %v108
  %122 = vst.msk [vmem:[%s2 + $0x18] sm:$0xff] %vm119, %v110
  %123 = vst [vmem:[%s2 + $0x20] sm:$0x1] %v114
  %vm124 = vcmask 57344
  %125 = vst.msk [vmem:[%s2 + $0x28] sm:$0x1] %vm124, %v116
  // Predicated region
  $region10: #{forward.15} parent=0 // pred_check
    _
  $region11: #{forward.15} parent=0 // pred_check_branch
    %127 = sbr.rel (0) target = $region13
  $region12: #{forward.15} parent=0 // pred_region
    _
  $region13: #{forward.15} parent=0 // pred_fallthru
    _
  // Predicated region
  $region14: #{forward.15} parent=0 // pred_check
    _
  $region15: #{forward.15} parent=0 // pred_check_branch
    %129 = sbr.rel (0) target = $region17
  $region16: #{forward.15} parent=0 // pred_region
    _
  $region17: #{forward.15} parent=0 // pred_fallthru
    _

// kernel: forward.8
$region0: #{forward.8}
  #allocation0 [shape = 'u32[]', space=smem, size = 0x4, offset = 0x4, fixed_abs, tag = 'smem constant byte address 0x4 - core index']
  #allocation1 [shape = 'u32[144,128]{1,0:T(1,128)}', space=vmem, size = 0x12000, scoped, tag = 'internal scratch']
  %s0 = inlined_call_operand.vmem [shape: f32[72,16], index: 0, kind: input, shape index: {}]
  %s1 = inlined_call_operand.vmem [shape: f32[16,8], index: 1, kind: input, shape index: {}]
  %s2 = inlined_call_operand.vmem [shape: f32[72,8], index: 2, kind: output, shape index: {}]
  %s3 = sld [smem:[#allocation0]]
  $region18: #{forward.8} parent=0
    _
  %s5 = ssub.s32 1, %s3
  %s6 = scalar_select 0, %s5, %s3
  // Predicated region
  $region2: #{forward.8} parent=0 // pred_check
    _
  $region3: #{forward.8} parent=0 // pred_check_branch
    %8 = sbr.rel (0) target = $region5
  $region4: #{forward.8} parent=0 // pred_region
    _
  $region5: #{forward.8} parent=0 // pred_fallthru
    _
  // Predicated region
  $region6: #{forward.8} parent=0 // pred_check
    _
  $region7: #{forward.8} parent=0 // pred_check_branch
    %10 = sbr.rel (0) target = $region9
  $region8: #{forward.8} parent=0 // pred_region
    _
  $region9: #{forward.8} parent=0 // pred_fallthru
    _
  %v11 = vld [vmem:[%s0] sm:$0xff]
  %v12 = vld [vmem:[%s0 + $0x8] sm:$0xff]
  %v13 = vld [vmem:[%s0 + $0x10] sm:$0xff]
  %v14 = vld [vmem:[%s0 + $0x18] sm:$0xff]
  %v15 = vld [vmem:[%s0 + $0x20] sm:$0xff]
  %v16 = vld [vmem:[%s0 + $0x28] sm:$0xff]
  %v17 = vld [vmem:[%s0 + $0x30] sm:$0xff]
  %v18 = vld [vmem:[%s0 + $0x38] sm:$0xff]
  %v19 = vld [vmem:[%s0 + $0x40] sm:$0xff]
  %v20 = vld [vmem:[%s1] sm:$0xff]
  %v21 = vld [vmem:[%s1 + $0x8] sm:$0xff]
  %vm22 = vcmask 130048
  %v24 = vsel %vm22, %v11, 0
  %v27 = vsel %vm22, %v12, 0
  %v30 = vsel %vm22, %v13, 0
  %v33 = vsel %vm22, %v14, 0
  %v36 = vsel %vm22, %v15, 0
  %v39 = vsel %vm22, %v16, 0
  %v42 = vsel %vm22, %v17, 0
  %v45 = vsel %vm22, %v18, 0
  %v48 = vsel %vm22, %v19, 0
  %50 = vmatprep.subr.mxu0 0.0
  %51 = vmatpush1.msra.mxu0 %v20
  %52 = vmatprep.subr.mxu0 0.0
  %53 = vmatpush1.msra.mxu0 %v21
  %54 = vmatprep.subr.mxu0 0.0
  %55 = vmatpush1.msra.mxu0 0.0
  %56 = vmatprep.subr.mxu0 0.0
  %57 = vmatpush1.msra.mxu0 0.0
  %58 = vmatprep.subr.mxu0 0.0
  %59 = vmatpush1.msra.mxu0 0.0
  %60 = vmatprep.subr.mxu0 0.0
  %61 = vmatpush1.msra.mxu0 0.0
  %62 = vmatprep.subr.mxu0 0.0
  %63 = vmatpush1.msra.mxu0 0.0
  %64 = vmatprep.subr.mxu0 0.0
  %65 = vmatpush1.msra.mxu0 0.0
  %66 = vmatprep.subr.mxu0 0.0
  %67 = vmatpush1.msra.mxu0 0.0
  %68 = vmatprep.subr.mxu0 0.0
  %69 = vmatpush1.msra.mxu0 0.0
  %70 = vmatprep.subr.mxu0 0.0
  %71 = vmatpush1.msra.mxu0 0.0
  %72 = vmatprep.subr.mxu0 0.0
  %73 = vmatpush1.msra.mxu0 0.0
  %74 = vmatprep.subr.mxu0 0.0
  %75 = vmatpush1.msra.mxu0 0.0
  %76 = vmatprep.subr.mxu0 0.0
  %77 = vmatpush1.msra.mxu0 0.0
  %78 = vmatprep.subr.mxu0 0.0
  %79 = vmatpush1.msra.mxu0 0.0
  %80 = vmatprep.subr.mxu0 0.0
  %81 = vmatpush1.msra.mxu0 0.0
  %82 = vmatprep.subr.mxu0 0.0
  %83 = vmatpush1.msra.mxu0 0.0
  %84 = vmatprep.subr.mxu0 0.0
  %85 = vmatpush1.msra.mxu0 0.0
  %86 = vmatprep.subr.mxu0 0.0
  %87 = vmatpush1.msra.mxu0 0.0
  %88 = vmatprep.subr.mxu0 0.0
  %89 = vmatpush1.msra.mxu0 0.0
  %90 = vmatprep.subr.mxu0 0.0
  %91 = vmatpush1.msra.mxu0 0.0
  %92 = vmatprep.subr.mxu0 0.0
  %93 = vmatpush1.msra.mxu0 0.0
  %94 = vmatprep.subr.mxu0 0.0
  %95 = vmatpush1.msra.mxu0 0.0
  %96 = vmatprep.subr.mxu0 0.0
  %97 = vmatpush1.msra.mxu0 0.0
  %98 = vmatprep.subr.mxu0 0.0
  %99 = vmatpush1.msra.mxu0 0.0
  %100 = vmatprep.subr.mxu0 0.0
  %101 = vmatpush1.msra.mxu0 0.0
  %102 = vmatprep.subr.mxu0 0.0
  %103 = vmatpush1.msra.mxu0 0.0
  %104 = vmatprep.subr.mxu0 0.0
  %105 = vmatpush1.msra.mxu0 0.0
  %106 = vmatprep.subr.mxu0 0.0
  %107 = vmatpush1.msra.mxu0 0.0
  %108 = vmatprep.subr.mxu0 0.0
  %109 = vmatpush1.msra.mxu0 0.0
  %110 = vmatprep.subr.mxu0 0.0
  %111 = vmatpush1.msra.mxu0 0.0
  %112 = vmatprep.subr.mxu0 0.0
  %113 = vmatpush1.msra.mxu0 0.0
  %114 = vmatprep.mubr.f32.mxu0 0.0
  %115 = vmatmul.mubr.f32.gmra.mrb[0].mxu0 %v24
  %v116 = vpop.f32.mrb[0].mxu0
  %v117 = vadd.f32 0.0, %v116
  %v118 = vpop.f32.mrb[0].mxu0
  %119 = vmatprep.mubr.f32.mxu0 0.0
  %120 = vmatmul.mubr.f32.gmra.mrb[0].mxu0 %v27
  %v121 = vpop.f32.mrb[0].mxu0
  %v122 = vadd.f32 0.0, %v121
  %v123 = vpop.f32.mrb[0].mxu0
  %124 = vmatprep.mubr.f32.mxu0 0.0
  %125 = vmatmul.mubr.f32.gmra.mrb[0].mxu0 %v30
  %v126 = vpop.f32.mrb[0].mxu0
  %v127 = vadd.f32 0.0, %v126
  %v128 = vpop.f32.mrb[0].mxu0
  %129 = vmatprep.mubr.f32.mxu0 0.0
  %130 = vmatmul.mubr.f32.gmra.mrb[0].mxu0 %v33
  %v131 = vpop.f32.mrb[0].mxu0
  %v132 = vadd.f32 0.0, %v131
  %v133 = vpop.f32.mrb[0].mxu0
  %134 = vmatprep.mubr.f32.mxu0 0.0
  %135 = vmatmul.mubr.f32.gmra.mrb[0].mxu0 %v36
  %v136 = vpop.f32.mrb[0].mxu0
  %v137 = vadd.f32 0.0, %v136
  %v138 = vpop.f32.mrb[0].mxu0
  %139 = vmatprep.mubr.f32.mxu0 0.0
  %140 = vmatmul.mubr.f32.gmra.mrb[0].mxu0 %v39
  %v141 = vpop.f32.mrb[0].mxu0
  %v142 = vadd.f32 0.0, %v141
  %v143 = vpop.f32.mrb[0].mxu0
  %144 = vmatprep.mubr.f32.mxu0 0.0
  %145 = vmatmul.mubr.f32.gmra.mrb[0].mxu0 %v42
  %v146 = vpop.f32.mrb[0].mxu0
  %v147 = vadd.f32 0.0, %v146
  %v148 = vpop.f32.mrb[0].mxu0
  %149 = vmatprep.mubr.f32.mxu0 0.0
  %150 = vmatmul.mubr.f32.gmra.mrb[0].mxu0 %v45
  %v151 = vpop.f32.mrb[0].mxu0
  %v152 = vadd.f32 0.0, %v151
  %v153 = vpop.f32.mrb[0].mxu0
  %154 = vmatprep.mubr.f32.mxu0 0.0
  %155 = vmatmul.mubr.f32.gmra.mrb[0].mxu0 %v48
  %v156 = vpop.f32.mrb[0].mxu0
  %v157 = vadd.f32 0.0, %v156
  %v158 = vpop.f32.mrb[0].mxu0
  %159 = vdwg.mxu0
  %vm160 = vcmask 64512
  %161 = vst.msk [vmem:[%s2] sm:$0xff] %vm160, %v117
  %162 = vst.msk [vmem:[%s2 + $0x8] sm:$0xff] %vm160, %v122
  %163 = vst.msk [vmem:[%s2 + $0x10] sm:$0xff] %vm160, %v127
  %164 = vst.msk [vmem:[%s2 + $0x18] sm:$0xff] %vm160, %v132
  %165 = vst.msk [vmem:[%s2 + $0x20] sm:$0xff] %vm160, %v137
  %166 = vst.msk [vmem:[%s2 + $0x28] sm:$0xff] %vm160, %v142
  %167 = vst.msk [vmem:[%s2 + $0x30] sm:$0xff] %vm160, %v147
  %168 = vst.msk [vmem:[%s2 + $0x38] sm:$0xff] %vm160, %v152
  %169 = vst.msk [vmem:[%s2 + $0x40] sm:$0xff] %vm160, %v157
  // Predicated region
  $region10: #{forward.8} parent=0 // pred_check
    _
  $region11: #{forward.8} parent=0 // pred_check_branch
    %171 = sbr.rel (0) target = $region13
  $region12: #{forward.8} parent=0 // pred_region
    _
  $region13: #{forward.8} parent=0 // pred_fallthru
    _
  // Predicated region
  $region14: #{forward.8} parent=0 // pred_check
    _
  $region15: #{forward.8} parent=0 // pred_check_branch
    %173 = sbr.rel (0) target = $region17
  $region16: #{forward.8} parent=0 // pred_region
    _
  $region17: #{forward.8} parent=0 // pred_fallthru
    _

</llo_original>
